<compile_context>
chip_gen: v7x
topology: tpu7x:2x2x1
jax: 0.10.0
libtpu: 0.0.40
codegen_flags: <defaults>
</compile_context>

<pallas_src>
import jax
import jax.numpy as jnp
from jax import lax
from jax.experimental import pallas as pl
from jax.experimental.pallas import tpu as pltpu

_SUBLANE = 8
_LANE = 128

_SMEM_SPEC = pl.BlockSpec(memory_space=pltpu.MemorySpace.SMEM)


# ---------------------------------------------------------------------------
# Helpers (plain-JAX glue)
# ---------------------------------------------------------------------------

def _round_up(n, m):
    return ((n + m - 1) // m) * m


def _cdiv(a, b):
    return -(-a // b)


def _resize_bilinear(x, hw):
    # Matches F.interpolate(mode='bilinear', align_corners=False) semantics
    # (half-pixel centers, no antialiasing); output keeps the input dtype.
    # TODO(synk): verify exact edge-pixel parity with PyTorch F.interpolate
    # at the actual pyramid scale factors.
    b, c, _, _ = x.shape
    return jax.image.resize(x, (b, c, hw[0], hw[1]), method="bilinear",
                            antialias=False)


def _choose_block_rows(h, w):
    """Row-tile size: full height if small, else a multiple of 8 sized so one
    f32 block stays <= ~2 MiB (keeps double-buffered inputs + temporaries well
    inside v7x's 64 MiB VMEM; v5e/v6e have more headroom)."""
    lane_w = _round_up(w, _LANE)
    max_rows = max(_SUBLANE, ((2 << 20) // (lane_w * 4)) // _SUBLANE * _SUBLANE)
    target = min(256, max_rows)
    if h <= target:
        return h, 1                       # single full-height block per image
    return target, _cdiv(h, target)


def _compiler_params(block_rows, w, n_big):
    """Both grid axes are embarrassingly parallel (per-step partial outputs),
    so v7x can shard them across its 2 TensorCores.  vmem_limit_bytes is raised
    above v5e's 16 MiB default and kept below v7x's 64 MiB physical VMEM."""
    lane_w = _round_up(w, _LANE)
    blk_bytes = _round_up(max(block_rows, 1), _SUBLANE) * lane_w * 4
    est = (2 * n_big + 10) * blk_bytes + (2 << 20)
    vmem = int(min(max(est, 32 << 20), 48 << 20))
    return pltpu.CompilerParams(
        dimension_semantics=("parallel", "parallel"),
        vmem_limit_bytes=vmem,
    )


def _store_scalar(ref, val):
    """Full-block store of a scalar partial result into a (1,1,1,1) block."""
    ref[...] = jnp.full((1, 1, 1, 1), val, dtype=jnp.float32)


# ---------------------------------------------------------------------------
# Pallas kernels
# ---------------------------------------------------------------------------

def _make_absmax_kernel(h, block_rows):
    """Phase 1 of berHu: per-(batch, row-tile) max of |pred - tgt|."""
    need_row_valid = (h % block_rows) != 0        # only last row-tile can be partial

    def kernel(pred_ref, tgt_ref, out_ref):
        d = jnp.abs(pred_ref[0].astype(jnp.float32)
                    - tgt_ref[0].astype(jnp.float32))
        if need_row_valid:
            row = lax.broadcasted_iota(jnp.int32, d.shape, 0)
            d = jnp.where(row < (h - pl.program_id(1) * block_rows), d, 0.0)
        _store_scalar(out_ref, jnp.max(d))

    return kernel


def _make_scale_kernel(has_sup, has_next, has_smooth, h, w, block_rows):
    """Fused per-scale kernel: berHu, MSE-vs-next-scale and smoothness x/y
    partial sums for one (batch, row-tile) block.

    Ref order:  [c] pred [tgt] [nxt] [gray]  ->  [berhu] [mse] [sx sy]
    """
    need_row_valid = (h % block_rows) != 0
    dims_aligned = (w % _LANE == 0) and (block_rows % _SUBLANE == 0)
    roll_x = (w > 1) and dims_aligned             # XLU roll only on aligned blocks
    roll_y = (block_rows > 1) and dims_aligned

    def kernel(*refs):
        pos = 0
        c_ref = None
        if has_sup:
            c_ref = refs[pos]; pos += 1
        pred_ref = refs[pos]; pos += 1
        tgt_ref = nxt_ref = gray_ref = None
        if has_sup:
            tgt_ref = refs[pos]; pos += 1
        if has_next:
            nxt_ref = refs[pos]; pos += 1
        if has_smooth:
            gray_ref = refs[pos]; pos += 1
        berhu_ref = mse_ref = sx_ref = sy_ref = None
        if has_sup:
            berhu_ref = refs[pos]; pos += 1
        if has_next:
            mse_ref = refs[pos]; pos += 1
        if has_smooth:
            sx_ref = refs[pos]
            sy_ref = refs[pos + 1]

        t = pl.program_id(1)
        # Upcast once, right after the ref read (handles bf16 inputs too).
        pred = pred_ref[0].astype(jnp.float32)              # (block_rows, w)

        valid_lim = None
        row_ok = None
        if need_row_valid:
            valid_lim = h - t * block_rows                   # rows below this are real
            row_ok = (lax.broadcasted_iota(jnp.int32, (block_rows, w), 0)
                      < valid_lim)

        # ---- berHu partial sum -------------------------------------------
        if has_sup:
            c = c_ref[0, 0]
            c_safe = jnp.maximum(c, jnp.float32(1e-12))      # guard c == 0
            half_inv_c = jnp.float32(0.5) / c_safe           # hoisted scalar divide
            c2 = c * c
            diff = jnp.abs(pred - tgt_ref[0].astype(jnp.float32))
            berhu = jnp.where(diff <= c, diff, (diff * diff + c2) * half_inv_c)
            if need_row_valid:
                berhu = jnp.where(row_ok, berhu, 0.0)
            _store_scalar(berhu_ref, jnp.sum(berhu))

        # ---- MSE vs next scale partial sum -------------------------------
        if has_next:
            e = pred - nxt_ref[0].astype(jnp.float32)
            sq = e * e
            if need_row_valid:
                sq = jnp.where(row_ok, sq, 0.0)
            _store_scalar(mse_ref, jnp.sum(sq))

        # ---- edge-aware smoothness partial sums ---------------------------
        if has_smooth:
            gray = gray_ref[0].astype(jnp.float32)

            # x direction (lane axis)
            if w <= 1:
                _store_scalar(sx_ref, jnp.float32(0.0))
            elif roll_x:
                vx = (jnp.exp(-jnp.abs(gray - pltpu.roll(gray, w - 1, 1)))
                      * jnp.abs(pred - pltpu.roll(pred, w - 1, 1)))
                ok = lax.broadcasted_iota(jnp.int32, (block_rows, w), 1) < (w - 1)
                if need_row_valid:
                    ok = jnp.logical_and(ok, row_ok)
                _store_scalar(sx_ref, jnp.sum(jnp.where(ok, vx, 0.0)))
            else:
                vx = (jnp.exp(-jnp.abs(gray[:, 1:] - gray[:, :-1]))
                      * jnp.abs(pred[:, 1:] - pred[:, :-1]))
                if need_row_valid:
                    rr = lax.broadcasted_iota(jnp.int32, vx.shape, 0)
                    vx = jnp.where(rr < valid_lim, vx, 0.0)
                _store_scalar(sx_ref, jnp.sum(vx))

            # y direction (sublane axis) -- intra-tile pairs only; pairs that
            # straddle row-tile boundaries are added back by the wrapper fixup.
            if block_rows <= 1:
                _store_scalar(sy_ref, jnp.float32(0.0))
            elif roll_y:
                vy = (jnp.exp(-jnp.abs(gray - pltpu.roll(gray, block_rows - 1, 0)))
                      * jnp.abs(pred - pltpu.roll(pred, block_rows - 1, 0)))
                if need_row_valid:
                    dy_lim = jnp.minimum(block_rows - 1, valid_lim - 1)
                else:
                    dy_lim = block_rows - 1
                rr = lax.broadcasted_iota(jnp.int32, (block_rows, w), 0)
                _store_scalar(sy_ref, jnp.sum(jnp.where(rr < dy_lim, vy, 0.0)))
            else:
                vy = (jnp.exp(-jnp.abs(gray[1:, :] - gray[:-1, :]))
                      * jnp.abs(pred[1:, :] - pred[:-1, :]))
                if need_row_valid:
                    rr = lax.broadcasted_iota(jnp.int32, vy.shape, 0)
                    vy = jnp.where(rr < valid_lim - 1, vy, 0.0)
                _store_scalar(sy_ref, jnp.sum(vy))

    return kernel


# ---------------------------------------------------------------------------
# pallas_call wrappers
# ---------------------------------------------------------------------------

def _pallas_absmax(pred3, tgt3, block_rows, nt):
    """max |pred - tgt| over the whole tensor (per-block maxima, max'ed in JAX)."""
    b, h, w = pred3.shape
    spec = pl.BlockSpec((1, block_rows, w), lambda i, t: (i, t, 0))
    out = pl.pallas_call(
        _make_absmax_kernel(h, block_rows),
        grid=(b, nt),
        in_specs=[spec, spec],
        out_specs=pl.BlockSpec((1, 1, 1, 1), lambda i, t: (i, t, 0, 0)),
        out_shape=jax.ShapeDtypeStruct((b, nt, 1, 1), jnp.float32),
        compiler_params=_compiler_params(block_rows, w, n_big=2),
    )(pred3, tgt3)
    return jnp.max(out)


def _pallas_scale_losses(pred3, tgt3, nxt3, gray3, c, block_rows, nt):
    """One fused launch per scale -> dict of scalar partial sums."""
    b, h, w = pred3.shape
    has_sup = tgt3 is not None
    has_next = nxt3 is not None
    has_smooth = gray3 is not None

    big_spec = pl.BlockSpec((1, block_rows, w), lambda i, t: (i, t, 0))
    part_spec = pl.BlockSpec((1, 1, 1, 1), lambda i, t: (i, t, 0, 0))
    part_shape = jax.ShapeDtypeStruct((b, nt, 1, 1), jnp.float32)

    inputs, in_specs = [], []
    if has_sup:
        inputs.append(c); in_specs.append(_SMEM_SPEC)
    inputs.append(pred3); in_specs.append(big_spec)
    if has_sup:
        inputs.append(tgt3); in_specs.append(big_spec)
    if has_next:
        inputs.append(nxt3); in_specs.append(big_spec)
    if has_smooth:
        inputs.append(gray3); in_specs.append(big_spec)

    n_out = int(has_sup) + int(has_next) + 2 * int(has_smooth)
    n_big = 1 + int(has_sup) + int(has_next) + int(has_smooth)

    outs = pl.pallas_call(
        _make_scale_kernel(has_sup, has_next, has_smooth, h, w, block_rows),
        grid=(b, nt),
        in_specs=in_specs,
        out_specs=tuple(part_spec for _ in range(n_out)),
        out_shape=tuple(part_shape for _ in range(n_out)),
        compiler_params=_compiler_params(block_rows, w, n_big=n_big),
    )(*inputs)

    result = {}
    oi = 0
    if has_sup:
        result["berhu"] = jnp.sum(outs[oi]); oi += 1
    if has_next:
        result["mse"] = jnp.sum(outs[oi]); oi += 1
    if has_smooth:
        result["sx"] = jnp.sum(outs[oi])
        result["sy"] = jnp.sum(outs[oi + 1])
    return result


# ---------------------------------------------------------------------------
# DepthLoss module (forward only, no learned params)
# ---------------------------------------------------------------------------

class DepthLossPallas:
    """JAX/Pallas port of the PyTorch DepthLoss module."""

    def __init__(self, supervised_weight=1.0, unsupervised_weight=1.0,
                 smoothness_weight=0.001, edge_aware_weight=0.1):
        self.supervised_weight = supervised_weight
        self.unsupervised_weight = unsupervised_weight
        self.smoothness_weight = smoothness_weight
        self.edge_aware_weight = edge_aware_weight  # unused in forward (matches torch)

    def __call__(self, pred_depths, target_depth=None, input_image=None):
        do_sup = target_depth is not None and self.supervised_weight > 0
        do_unsup = input_image is not None and self.unsupervised_weight > 0
        do_smooth = input_image is not None and self.smoothness_weight > 0

        scales = list(pred_depths.keys())
        n_scales = len(scales)

        gray = None
        if do_smooth:
            if input_image.shape[1] == 3:
                gray = (0.299 * input_image[:, 0:1]
                        + 0.587 * input_image[:, 1:2]
                        + 0.114 * input_image[:, 2:3])
            else:
                # TODO(synk): C not in {1,3}: torch averages |grad| over channels;
                # only single-channel / RGB inputs are implemented here.
                gray = input_image

        sup_terms, unsup_terms, smooth_terms = [], [], []

        for idx, s in enumerate(scales):
            pred = pred_depths[s]                         # (B, 1, H, W)
            b, _, h, w = pred.shape

            has_sup = do_sup
            has_next = do_unsup and (idx < n_scales - 1)
            has_smooth = do_smooth
            if not (has_sup or has_next or has_smooth):
                continue

            pred3 = pred.reshape(b, h, w)
            block_rows, nt = _choose_block_rows(h, w)

            c_arr = tgt3 = nxt3 = gray3 = None
            if has_sup:
                tgt = (target_depth if target_depth.shape[2:] == (h, w)
                       else _resize_bilinear(target_depth, (h, w)))
                tgt3 = tgt.reshape(b, h, w)
                amax = _pallas_absmax(pred3, tgt3, block_rows, nt)   # phase 1 berHu
                c_arr = (0.2 * amax).astype(jnp.float32).reshape(1, 1)
            if has_next:
                nxt = _resize_bilinear(pred_depths[scales[idx + 1]], (h, w))
                nxt3 = nxt.reshape(b, h, w)
            if has_smooth:
                g = gray if gray.shape[2:] == (h, w) else _resize_bilinear(gray, (h, w))
                gray3 = g.reshape(b, h, w)

            sums = _pallas_scale_losses(pred3, tgt3, nxt3, gray3, c_arr,
                                        block_rows, nt)

            n_el = b * h * w
            if has_sup:
                sup_terms.append(sums["berhu"] / n_el)
            if has_next:
                unsup_terms.append(sums["mse"] / n_el)
            if has_smooth:
                sy = sums["sy"]
                if nt > 1 and h > 1:
                    # Exact fixup for the dy pairs straddling row-tile boundaries.
                    idx_rows = jnp.asarray(
                        [t * block_rows - 1 for t in range(1, nt)], dtype=jnp.int32)
                    p0 = jnp.take(pred3, idx_rows, axis=1).astype(jnp.float32)
                    p1 = jnp.take(pred3, idx_rows + 1, axis=1).astype(jnp.float32)
                    g0 = jnp.take(gray3, idx_rows, axis=1).astype(jnp.float32)
                    g1 = jnp.take(gray3, idx_rows + 1, axis=1).astype(jnp.float32)
                    sy = sy + jnp.sum(jnp.exp(-jnp.abs(g0 - g1)) * jnp.abs(p0 - p1))
                term = jnp.float32(0.0)
                if w > 1:                                  # guard degenerate scales
                    term = term + sums["sx"] / (b * h * (w - 1))
                if h > 1:
                    term = term + sy / (b * (h - 1) * w)
                smooth_terms.append(term)

        total = jnp.float32(0.0)
        losses = {}
        if do_sup:
            sup = (sum(sup_terms) / len(sup_terms)) if sup_terms else jnp.float32(0.0)
            losses["supervised"] = sup
            total = total + self.supervised_weight * sup
        if do_unsup:
            unsup = (sum(unsup_terms) / len(unsup_terms)) if unsup_terms else jnp.float32(0.0)
            losses["unsupervised"] = unsup
            total = total + self.unsupervised_weight * unsup
        if do_smooth:
            smooth = (sum(smooth_terms) / len(smooth_terms)) if smooth_terms else jnp.float32(0.0)
            losses["smoothness"] = smooth
            total = total + self.smoothness_weight * smooth
        losses["total"] = total
        return losses


# ---------------------------------------------------------------------------
# Demo
# ---------------------------------------------------------------------------

if __name__ == "__main__":
    key = jax.random.PRNGKey(0)
    k1, k2, k3, k4, k5 = jax.random.split(key, 5)

    B, H, W = 2, 16, 16
    pred_depths = {
        0: jax.random.uniform(k1, (B, 1, H, W), dtype=jnp.float32),
        1: jax.random.uniform(k2, (B, 1, H // 2, W // 2), dtype=jnp.float32),
        2: jax.random.uniform(k3, (B, 1, H // 4, W // 4), dtype=jnp.float32),
    }
    target_depth = jax.random.uniform(k4, (B, 1, H, W), dtype=jnp.float32)
    input_image = jax.random.uniform(k5, (B, 3, H, W), dtype=jnp.float32)

    loss_fn = DepthLossPallas()

    @jax.jit
    def run(pd, td, img):
        return loss_fn(pd, target_depth=td, input_image=img)

    losses = run(pred_depths, target_depth, input_image)
    jax.block_until_ready(losses["total"])

    assert all(bool(jnp.isfinite(v)) for v in losses.values())
    print("KERNEL_OK")
</pallas_src>

<mosaic_0001>
module attributes {stable_mosaic.version = 11 : i64} {
  func.func @kernel(%arg0: i32, %arg1: i32, %arg2: memref<1x8x8xf32, #tpu.memory_space<vmem>>, %arg3: memref<1x8x8xf32, #tpu.memory_space<vmem>>, %arg4: memref<1x1x1x1xf32, #tpu.memory_space<vmem>>) attributes {dimension_semantics = [#tpu.dimension_semantics<parallel>, #tpu.dimension_semantics<parallel>], iteration_bounds = array<i64: 2, 1>, scalar_prefetch = 0 : i64, scratch_operands = 0 : i64, tpu.core_type = #tpu.core_type<tc>, window_params = [{transform_indices = @transform_0, window_bounds = array<i64: 1, 8, 8>}, {transform_indices = @transform_1, window_bounds = array<i64: 1, 8, 8>}, {transform_indices = @transform_2, window_bounds = array<i64: 1, 1, 1, 1>}]} {
    %c0 = arith.constant 0 : index
    %c0_0 = arith.constant 0 : index
    %c0_1 = arith.constant 0 : index
    %0 = vector.load %arg2[%c0, %c0_0, %c0_1] : memref<1x8x8xf32, #tpu.memory_space<vmem>>, vector<1x8x8xf32>
    %1 = vector.shape_cast %0 : vector<1x8x8xf32> to vector<8x8xf32>
    %c0_2 = arith.constant 0 : index
    %c0_3 = arith.constant 0 : index
    %c0_4 = arith.constant 0 : index
    %2 = vector.load %arg3[%c0_2, %c0_3, %c0_4] : memref<1x8x8xf32, #tpu.memory_space<vmem>>, vector<1x8x8xf32>
    %3 = vector.shape_cast %2 : vector<1x8x8xf32> to vector<8x8xf32>
    %4 = arith.subf %1, %3 : vector<8x8xf32>
    %5 = math.absf %4 : vector<8x8xf32>
    %6 = vector.shape_cast %5 : vector<8x8xf32> to vector<1x8x8xf32>
    %cst = arith.constant dense<0xFF800000> : vector<1xf32>
    %7 = vector.multi_reduction <maximumf>, %6, %cst [1, 2] : vector<1x8x8xf32> to vector<1xf32>
    %8 = vector.shape_cast %7 : vector<1xf32> to vector<1x1x1xf32>
    %9 = vector.extract %8[0, 0, 0] : f32 from vector<1x1x1xf32>
    %10 = vector.broadcast %9 : f32 to vector<1x1x1x1xf32>
    %c0_5 = arith.constant 0 : index
    %c0_6 = arith.constant 0 : index
    %c0_7 = arith.constant 0 : index
    %c0_8 = arith.constant 0 : index
    %11 = vector.load %arg4[%c0_5, %c0_6, %c0_7, %c0_8] : memref<1x1x1x1xf32, #tpu.memory_space<vmem>>, vector<1x1x1x1xf32>
    tpu.vector_store %arg4[%c0_5, %c0_6, %c0_7, %c0_8], %10 {strides = array<i32>} : memref<1x1x1x1xf32, #tpu.memory_space<vmem>>, vector<1x1x1x1xf32>,
    return
  }
  func.func @transform_0(%arg0: i32, %arg1: i32) -> (i32, i32, i32) {
    %c0_i32 = arith.constant 0 : i32
    %c0_i32_0 = arith.constant 0 : i32
    return %arg0, %arg1, %c0_i32 : i32, i32, i32
  }
  func.func @transform_1(%arg0: i32, %arg1: i32) -> (i32, i32, i32) {
    %c0_i32 = arith.constant 0 : i32
    %c0_i32_0 = arith.constant 0 : i32
    return %arg0, %arg1, %c0_i32 : i32, i32, i32
  }
  func.func @transform_2(%arg0: i32, %arg1: i32) -> (i32, i32, i32, i32) {
    %c0_i32 = arith.constant 0 : i32
    %c0_i32_0 = arith.constant 0 : i32
    %c0_i32_1 = arith.constant 0 : i32
    return %arg0, %arg1, %c0_i32, %c0_i32_0 : i32, i32, i32, i32
  }
}

module attributes {stable_mosaic.version = 11 : i64} {
  func.func @kernel(%arg0: i32, %arg1: i32, %arg2: memref<1x1xf32, #tpu.memory_space<smem>>, %arg3: memref<1x8x8xf32, #tpu.memory_space<vmem>>, %arg4: memref<1x8x8xf32, #tpu.memory_space<vmem>>, %arg5: memref<1x8x8xf32, #tpu.memory_space<vmem>>, %arg6: memref<1x8x8xf32, #tpu.memory_space<vmem>>, %arg7: memref<1x1x1x1xf32, #tpu.memory_space<vmem>>, %arg8: memref<1x1x1x1xf32, #tpu.memory_space<vmem>>, %arg9: memref<1x1x1x1xf32, #tpu.memory_space<vmem>>, %arg10: memref<1x1x1x1xf32, #tpu.memory_space<vmem>>) attributes {dimension_semantics = [#tpu.dimension_semantics<parallel>, #tpu.dimension_semantics<parallel>], iteration_bounds = array<i64: 2, 1>, scalar_prefetch = 0 : i64, scratch_operands = 0 : i64, tpu.core_type = #tpu.core_type<tc>, window_params = [{transform_indices = @transform_0, window_bounds = array<i64: 1, 1>}, {transform_indices = @transform_1, window_bounds = array<i64: 1, 8, 8>}, {transform_indices = @transform_2, window_bounds = array<i64: 1, 8, 8>}, {transform_indices = @transform_3, window_bounds = array<i64: 1, 8, 8>}, {transform_indices = @transform_4, window_bounds = array<i64: 1, 8, 8>}, {transform_indices = @transform_5, window_bounds = array<i64: 1, 1, 1, 1>}, {transform_indices = @transform_6, window_bounds = array<i64: 1, 1, 1, 1>}, {transform_indices = @transform_7, window_bounds = array<i64: 1, 1, 1, 1>}, {transform_indices = @transform_8, window_bounds = array<i64: 1, 1, 1, 1>}]} {
    %c0 = arith.constant 0 : index
    %c0_0 = arith.constant 0 : index
    %c0_1 = arith.constant 0 : index
    %0 = vector.load %arg3[%c0, %c0_0, %c0_1] : memref<1x8x8xf32, #tpu.memory_space<vmem>>, vector<1x8x8xf32>
    %1 = vector.shape_cast %0 : vector<1x8x8xf32> to vector<8x8xf32>
    %c0_2 = arith.constant 0 : index
    %c0_3 = arith.constant 0 : index
    %2 = memref.load %arg2[%c0_2, %c0_3] : memref<1x1xf32, #tpu.memory_space<smem>>
    %cst = arith.constant 9.99999996E-13 : f32
    %3 = arith.maximumf %2, %cst : f32
    %cst_4 = arith.constant 5.000000e-01 : f32
    %4 = arith.divf %cst_4, %3 : f32
    %5 = arith.mulf %2, %2 : f32
    %c0_5 = arith.constant 0 : index
    %c0_6 = arith.constant 0 : index
    %c0_7 = arith.constant 0 : index
    %6 = vector.load %arg4[%c0_5, %c0_6, %c0_7] : memref<1x8x8xf32, #tpu.memory_space<vmem>>, vector<1x8x8xf32>
    %7 = vector.shape_cast %6 : vector<1x8x8xf32> to vector<8x8xf32>
    %8 = arith.subf %1, %7 : vector<8x8xf32>
    %9 = math.absf %8 : vector<8x8xf32>
    %10 = vector.broadcast %2 : f32 to vector<8x8xf32>
    %11 = arith.cmpf ole, %9, %10 : vector<8x8xf32>
    %12 = arith.mulf %9, %9 : vector<8x8xf32>
    %13 = vector.broadcast %5 : f32 to vector<8x8xf32>
    %14 = arith.addf %12, %13 : vector<8x8xf32>
    %15 = vector.broadcast %4 : f32 to vector<8x8xf32>
    %16 = arith.mulf %14, %15 : vector<8x8xf32>
    %17 = arith.select %11, %9, %16 : vector<8x8xi1>, vector<8x8xf32>
    %18 = vector.shape_cast %17 : vector<8x8xf32> to vector<1x8x8xf32>
    %cst_8 = arith.constant dense<0.000000e+00> : vector<1xf32>
    %19 = vector.multi_reduction <add>, %18, %cst_8 [1, 2] : vector<1x8x8xf32> to vector<1xf32>
    %20 = vector.shape_cast %19 : vector<1xf32> to vector<1x1x1xf32>
    %21 = vector.extract %20[0, 0, 0] : f32 from vector<1x1x1xf32>
    %22 = vector.broadcast %21 : f32 to vector<1x1x1x1xf32>
    %c0_9 = arith.constant 0 : index
    %c0_10 = arith.constant 0 : index
    %c0_11 = arith.constant 0 : index
    %c0_12 = arith.constant 0 : index
    %23 = vector.load %arg7[%c0_9, %c0_10, %c0_11, %c0_12] : memref<1x1x1x1xf32, #tpu.memory_space<vmem>>, vector<1x1x1x1xf32>
    tpu.vector_store %arg7[%c0_9, %c0_10, %c0_11, %c0_12], %22 {strides = array<i32>} : memref<1x1x1x1xf32, #tpu.memory_space<vmem>>, vector<1x1x1x1xf32>,
    %c0_13 = arith.constant 0 : index
    %c0_14 = arith.constant 0 : index
    %c0_15 = arith.constant 0 : index
    %24 = vector.load %arg5[%c0_13, %c0_14, %c0_15] : memref<1x8x8xf32, #tpu.memory_space<vmem>>, vector<1x8x8xf32>
    %25 = vector.shape_cast %24 : vector<1x8x8xf32> to vector<8x8xf32>
    %26 = arith.subf %1, %25 : vector<8x8xf32>
    %27 = arith.mulf %26, %26 : vector<8x8xf32>
    %28 = vector.shape_cast %27 : vector<8x8xf32> to vector<1x8x8xf32>
    %cst_16 = arith.constant dense<0.000000e+00> : vector<1xf32>
    %29 = vector.multi_reduction <add>, %28, %cst_16 [1, 2] : vector<1x8x8xf32> to vector<1xf32>
    %30 = vector.shape_cast %29 : vector<1xf32> to vector<1x1x1xf32>
    %31 = vector.extract %30[0, 0, 0] : f32 from vector<1x1x1xf32>
    %32 = vector.broadcast %31 : f32 to vector<1x1x1x1xf32>
    %c0_17 = arith.constant 0 : index
    %c0_18 = arith.constant 0 : index
    %c0_19 = arith.constant 0 : index
    %c0_20 = arith.constant 0 : index
    %33 = vector.load %arg8[%c0_17, %c0_18, %c0_19, %c0_20] : memref<1x1x1x1xf32, #tpu.memory_space<vmem>>, vector<1x1x1x1xf32>
    tpu.vector_store %arg8[%c0_17, %c0_18, %c0_19, %c0_20], %32 {strides = array<i32>} : memref<1x1x1x1xf32, #tpu.memory_space<vmem>>, vector<1x1x1x1xf32>,
    %c0_21 = arith.constant 0 : index
    %c0_22 = arith.constant 0 : index
    %c0_23 = arith.constant 0 : index
    %34 = vector.load %arg6[%c0_21, %c0_22, %c0_23] : memref<1x8x8xf32, #tpu.memory_space<vmem>>, vector<1x8x8xf32>
    %35 = vector.shape_cast %34 : vector<1x8x8xf32> to vector<8x8xf32>
    %36 = vector.extract_strided_slice %35 {offsets = [0, 1], sizes = [8, 7], strides = [1, 1]} : vector<8x8xf32> to vector<8x7xf32>
    %37 = vector.extract_strided_slice %35 {offsets = [0, 0], sizes = [8, 7], strides = [1, 1]} : vector<8x8xf32> to vector<8x7xf32>
    %38 = arith.subf %36, %37 : vector<8x7xf32>
    %39 = math.absf %38 : vector<8x7xf32>
    %cst_24 = arith.constant 0.000000e+00 : f32
    %40 = vector.broadcast %cst_24 : f32 to vector<8x7xf32>
    %41 = arith.subf %40, %39 : vector<8x7xf32>
    %42 = math.exp %41 : vector<8x7xf32>
    %43 = vector.extract_strided_slice %1 {offsets = [0, 1], sizes = [8, 7], strides = [1, 1]} : vector<8x8xf32> to vector<8x7xf32>
    %44 = vector.extract_strided_slice %1 {offsets = [0, 0], sizes = [8, 7], strides = [1, 1]} : vector<8x8xf32> to vector<8x7xf32>
    %45 = arith.subf %43, %44 : vector<8x7xf32>
    %46 = math.absf %45 : vector<8x7xf32>
    %47 = arith.mulf %42, %46 : vector<8x7xf32>
    %48 = vector.shape_cast %47 : vector<8x7xf32> to vector<1x8x7xf32>
    %cst_25 = arith.constant dense<0.000000e+00> : vector<1xf32>
    %49 = vector.multi_reduction <add>, %48, %cst_25 [1, 2] : vector<1x8x7xf32> to vector<1xf32>
    %50 = vector.shape_cast %49 : vector<1xf32> to vector<1x1x1xf32>
    %51 = vector.extract %50[0, 0, 0] : f32 from vector<1x1x1xf32>
    %52 = vector.broadcast %51 : f32 to vector<1x1x1x1xf32>
    %c0_26 = arith.constant 0 : index
    %c0_27 = arith.constant 0 : index
    %c0_28 = arith.constant 0 : index
    %c0_29 = arith.constant 0 : index
    %53 = vector.load %arg9[%c0_26, %c0_27, %c0_28, %c0_29] : memref<1x1x1x1xf32, #tpu.memory_space<vmem>>, vector<1x1x1x1xf32>
    tpu.vector_store %arg9[%c0_26, %c0_27, %c0_28, %c0_29], %52 {strides = array<i32>} : memref<1x1x1x1xf32, #tpu.memory_space<vmem>>, vector<1x1x1x1xf32>,
    %54 = vector.extract_strided_slice %35 {offsets = [1, 0], sizes = [7, 8], strides = [1, 1]} : vector<8x8xf32> to vector<7x8xf32>
    %55 = vector.extract_strided_slice %35 {offsets = [0, 0], sizes = [7, 8], strides = [1, 1]} : vector<8x8xf32> to vector<7x8xf32>
    %56 = arith.subf %54, %55 : vector<7x8xf32>
    %57 = math.absf %56 : vector<7x8xf32>
    %cst_30 = arith.constant 0.000000e+00 : f32
    %58 = vector.broadcast %cst_30 : f32 to vector<7x8xf32>
    %59 = arith.subf %58, %57 : vector<7x8xf32>
    %60 = math.exp %59 : vector<7x8xf32>
    %61 = vector.extract_strided_slice %1 {offsets = [1, 0], sizes = [7, 8], strides = [1, 1]} : vector<8x8xf32> to vector<7x8xf32>
    %62 = vector.extract_strided_slice %1 {offsets = [0, 0], sizes = [7, 8], strides = [1, 1]} : vector<8x8xf32> to vector<7x8xf32>
    %63 = arith.subf %61, %62 : vector<7x8xf32>
    %64 = math.absf %63 : vector<7x8xf32>
    %65 = arith.mulf %60, %64 : vector<7x8xf32>
    %66 = vector.shape_cast %65 : vector<7x8xf32> to vector<1x7x8xf32>
    %cst_31 = arith.constant dense<0.000000e+00> : vector<1xf32>
    %67 = vector.multi_reduction <add>, %66, %cst_31 [1, 2] : vector<1x7x8xf32> to vector<1xf32>
    %68 = vector.shape_cast %67 : vector<1xf32> to vector<1x1x1xf32>
    %69 = vector.extract %68[0, 0, 0] : f32 from vector<1x1x1xf32>
    %70 = vector.broadcast %69 : f32 to vector<1x1x1x1xf32>
    %c0_32 = arith.constant 0 : index
    %c0_33 = arith.constant 0 : index
    %c0_34 = arith.constant 0 : index
    %c0_35 = arith.constant 0 : index
    %71 = vector.load %arg10[%c0_32, %c0_33, %c0_34, %c0_35] : memref<1x1x1x1xf32, #tpu.memory_space<vmem>>, vector<1x1x1x1xf32>
    tpu.vector_store %arg10[%c0_32, %c0_33, %c0_34, %c0_35], %70 {strides = array<i32>} : memref<1x1x1x1xf32, #tpu.memory_space<vmem>>, vector<1x1x1x1xf32>,
    return
  }
  func.func @transform_0(%arg0: i32, %arg1: i32) -> (i32, i32) {
    %c0_i32 = arith.constant 0 : i32
    %c0_i32_0 = arith.constant 0 : i32
    %c0_i32_1 = arith.constant 0 : i32
    return %c0_i32, %c0_i32_0 : i32, i32
  }
  func.func @transform_1(%arg0: i32, %arg1: i32) -> (i32, i32, i32) {
    %c0_i32 = arith.constant 0 : i32
    %c0_i32_0 = arith.constant 0 : i32
    return %arg0, %arg1, %c0_i32 : i32, i32, i32
  }
  func.func @transform_2(%arg0: i32, %arg1: i32) -> (i32, i32, i32) {
    %c0_i32 = arith.constant 0 : i32
    %c0_i32_0 = arith.constant 0 : i32
    return %arg0, %arg1, %c0_i32 : i32, i32, i32
  }
  func.func @transform_3(%arg0: i32, %arg1: i32) -> (i32, i32, i32) {
    %c0_i32 = arith.constant 0 : i32
    %c0_i32_0 = arith.constant 0 : i32
    return %arg0, %arg1, %c0_i32 : i32, i32, i32
  }
  func.func @transform_4(%arg0: i32, %arg1: i32) -> (i32, i32, i32) {
    %c0_i32 = arith.constant 0 : i32
    %c0_i32_0 = arith.constant 0 : i32
    return %arg0, %arg1, %c0_i32 : i32, i32, i32
  }
  func.func @transform_5(%arg0: i32, %arg1: i32) -> (i32, i32, i32, i32) {
    %c0_i32 = arith.constant 0 : i32
    %c0_i32_0 = arith.constant 0 : i32
    %c0_i32_1 = arith.constant 0 : i32
    return %arg0, %arg1, %c0_i32, %c0_i32_0 : i32, i32, i32, i32
  }
  func.func @transform_6(%arg0: i32, %arg1: i32) -> (i32, i32, i32, i32) {
    %c0_i32 = arith.constant 0 : i32
    %c0_i32_0 = arith.constant 0 : i32
    %c0_i32_1 = arith.constant 0 : i32
    return %arg0, %arg1, %c0_i32, %c0_i32_0 : i32, i32, i32, i32
  }
  func.func @transform_7(%arg0: i32, %arg1: i32) -> (i32, i32, i32, i32) {
    %c0_i32 = arith.constant 0 : i32
    %c0_i32_0 = arith.constant 0 : i32
    %c0_i32_1 = arith.constant 0 : i32
    return %arg0, %arg1, %c0_i32, %c0_i32_0 : i32, i32, i32, i32
  }
  func.func @transform_8(%arg0: i32, %arg1: i32) -> (i32, i32, i32, i32) {
    %c0_i32 = arith.constant 0 : i32
    %c0_i32_0 = arith.constant 0 : i32
    %c0_i32_1 = arith.constant 0 : i32
    return %arg0, %arg1, %c0_i32, %c0_i32_0 : i32, i32, i32, i32
  }
}

module attributes {stable_mosaic.version = 11 : i64} {
  func.func @kernel(%arg0: i32, %arg1: i32, %arg2: memref<1x16x16xf32, #tpu.memory_space<vmem>>, %arg3: memref<1x16x16xf32, #tpu.memory_space<vmem>>, %arg4: memref<1x1x1x1xf32, #tpu.memory_space<vmem>>) attributes {dimension_semantics = [#tpu.dimension_semantics<parallel>, #tpu.dimension_semantics<parallel>], iteration_bounds = array<i64: 2, 1>, scalar_prefetch = 0 : i64, scratch_operands = 0 : i64, tpu.core_type = #tpu.core_type<tc>, window_params = [{transform_indices = @transform_0, window_bounds = array<i64: 1, 16, 16>}, {transform_indices = @transform_1, window_bounds = array<i64: 1, 16, 16>}, {transform_indices = @transform_2, window_bounds = array<i64: 1, 1, 1, 1>}]} {
    %c0 = arith.constant 0 : index
    %c0_0 = arith.constant 0 : index
    %c0_1 = arith.constant 0 : index
    %0 = vector.load %arg2[%c0, %c0_0, %c0_1] : memref<1x16x16xf32, #tpu.memory_space<vmem>>, vector<1x16x16xf32>
    %1 = vector.shape_cast %0 : vector<1x16x16xf32> to vector<16x16xf32>
    %c0_2 = arith.constant 0 : index
    %c0_3 = arith.constant 0 : index
    %c0_4 = arith.constant 0 : index
    %2 = vector.load %arg3[%c0_2, %c0_3, %c0_4] : memref<1x16x16xf32, #tpu.memory_space<vmem>>, vector<1x16x16xf32>
    %3 = vector.shape_cast %2 : vector<1x16x16xf32> to vector<16x16xf32>
    %4 = arith.subf %1, %3 : vector<16x16xf32>
    %5 = math.absf %4 : vector<16x16xf32>
    %6 = vector.shape_cast %5 : vector<16x16xf32> to vector<1x16x16xf32>
    %cst = arith.constant dense<0xFF800000> : vector<1xf32>
    %7 = vector.multi_reduction <maximumf>, %6, %cst [1, 2] : vector<1x16x16xf32> to vector<1xf32>
    %8 = vector.shape_cast %7 : vector<1xf32> to vector<1x1x1xf32>
    %9 = vector.extract %8[0, 0, 0] : f32 from vector<1x1x1xf32>
    %10 = vector.broadcast %9 : f32 to vector<1x1x1x1xf32>
    %c0_5 = arith.constant 0 : index
    %c0_6 = arith.constant 0 : index
    %c0_7 = arith.constant 0 : index
    %c0_8 = arith.constant 0 : index
    %11 = vector.load %arg4[%c0_5, %c0_6, %c0_7, %c0_8] : memref<1x1x1x1xf32, #tpu.memory_space<vmem>>, vector<1x1x1x1xf32>
    tpu.vector_store %arg4[%c0_5, %c0_6, %c0_7, %c0_8], %10 {strides = array<i32>} : memref<1x1x1x1xf32, #tpu.memory_space<vmem>>, vector<1x1x1x1xf32>,
    return
  }
  func.func @transform_0(%arg0: i32, %arg1: i32) -> (i32, i32, i32) {
    %c0_i32 = arith.constant 0 : i32
    %c0_i32_0 = arith.constant 0 : i32
    return %arg0, %arg1, %c0_i32 : i32, i32, i32
  }
  func.func @transform_1(%arg0: i32, %arg1: i32) -> (i32, i32, i32) {
    %c0_i32 = arith.constant 0 : i32
    %c0_i32_0 = arith.constant 0 : i32
    return %arg0, %arg1, %c0_i32 : i32, i32, i32
  }
  func.func @transform_2(%arg0: i32, %arg1: i32) -> (i32, i32, i32, i32) {
    %c0_i32 = arith.constant 0 : i32
    %c0_i32_0 = arith.constant 0 : i32
    %c0_i32_1 = arith.constant 0 : i32
    return %arg0, %arg1, %c0_i32, %c0_i32_0 : i32, i32, i32, i32
  }
}

module attributes {stable_mosaic.version = 11 : i64} {
  func.func @kernel(%arg0: i32, %arg1: i32, %arg2: memref<1x1xf32, #tpu.memory_space<smem>>, %arg3: memref<1x16x16xf32, #tpu.memory_space<vmem>>, %arg4: memref<1x16x16xf32, #tpu.memory_space<vmem>>, %arg5: memref<1x16x16xf32, #tpu.memory_space<vmem>>, %arg6: memref<1x16x16xf32, #tpu.memory_space<vmem>>, %arg7: memref<1x1x1x1xf32, #tpu.memory_space<vmem>>, %arg8: memref<1x1x1x1xf32, #tpu.memory_space<vmem>>, %arg9: memref<1x1x1x1xf32, #tpu.memory_space<vmem>>, %arg10: memref<1x1x1x1xf32, #tpu.memory_space<vmem>>) attributes {dimension_semantics = [#tpu.dimension_semantics<parallel>, #tpu.dimension_semantics<parallel>], iteration_bounds = array<i64: 2, 1>, scalar_prefetch = 0 : i64, scratch_operands = 0 : i64, tpu.core_type = #tpu.core_type<tc>, window_params = [{transform_indices = @transform_0, window_bounds = array<i64: 1, 1>}, {transform_indices = @transform_1, window_bounds = array<i64: 1, 16, 16>}, {transform_indices = @transform_2, window_bounds = array<i64: 1, 16, 16>}, {transform_indices = @transform_3, window_bounds = array<i64: 1, 16, 16>}, {transform_indices = @transform_4, window_bounds = array<i64: 1, 16, 16>}, {transform_indices = @transform_5, window_bounds = array<i64: 1, 1, 1, 1>}, {transform_indices = @transform_6, window_bounds = array<i64: 1, 1, 1, 1>}, {transform_indices = @transform_7, window_bounds = array<i64: 1, 1, 1, 1>}, {transform_indices = @transform_8, window_bounds = array<i64: 1, 1, 1, 1>}]} {
    %c0 = arith.constant 0 : index
    %c0_0 = arith.constant 0 : index
    %c0_1 = arith.constant 0 : index
    %0 = vector.load %arg3[%c0, %c0_0, %c0_1] : memref<1x16x16xf32, #tpu.memory_space<vmem>>, vector<1x16x16xf32>
    %1 = vector.shape_cast %0 : vector<1x16x16xf32> to vector<16x16xf32>
    %c0_2 = arith.constant 0 : index
    %c0_3 = arith.constant 0 : index
    %2 = memref.load %arg2[%c0_2, %c0_3] : memref<1x1xf32, #tpu.memory_space<smem>>
    %cst = arith.constant 9.99999996E-13 : f32
    %3 = arith.maximumf %2, %cst : f32
    %cst_4 = arith.constant 5.000000e-01 : f32
    %4 = arith.divf %cst_4, %3 : f32
    %5 = arith.mulf %2, %2 : f32
    %c0_5 = arith.constant 0 : index
    %c0_6 = arith.constant 0 : index
    %c0_7 = arith.constant 0 : index
    %6 = vector.load %arg4[%c0_5, %c0_6, %c0_7] : memref<1x16x16xf32, #tpu.memory_space<vmem>>, vector<1x16x16xf32>
    %7 = vector.shape_cast %6 : vector<1x16x16xf32> to vector<16x16xf32>
    %8 = arith.subf %1, %7 : vector<16x16xf32>
    %9 = math.absf %8 : vector<16x16xf32>
    %10 = vector.broadcast %2 : f32 to vector<16x16xf32>
    %11 = arith.cmpf ole, %9, %10 : vector<16x16xf32>
    %12 = arith.mulf %9, %9 : vector<16x16xf32>
    %13 = vector.broadcast %5 : f32 to vector<16x16xf32>
    %14 = arith.addf %12, %13 : vector<16x16xf32>
    %15 = vector.broadcast %4 : f32 to vector<16x16xf32>
    %16 = arith.mulf %14, %15 : vector<16x16xf32>
    %17 = arith.select %11, %9, %16 : vector<16x16xi1>, vector<16x16xf32>
    %18 = vector.shape_cast %17 : vector<16x16xf32> to vector<1x16x16xf32>
    %cst_8 = arith.constant dense<0.000000e+00> : vector<1xf32>
    %19 = vector.multi_reduction <add>, %18, %cst_8 [1, 2] : vector<1x16x16xf32> to vector<1xf32>
    %20 = vector.shape_cast %19 : vector<1xf32> to vector<1x1x1xf32>
    %21 = vector.extract %20[0, 0, 0] : f32 from vector<1x1x1xf32>
    %22 = vector.broadcast %21 : f32 to vector<1x1x1x1xf32>
    %c0_9 = arith.constant 0 : index
    %c0_10 = arith.constant 0 : index
    %c0_11 = arith.constant 0 : index
    %c0_12 = arith.constant 0 : index
    %23 = vector.load %arg7[%c0_9, %c0_10, %c0_11, %c0_12] : memref<1x1x1x1xf32, #tpu.memory_space<vmem>>, vector<1x1x1x1xf32>
    tpu.vector_store %arg7[%c0_9, %c0_10, %c0_11, %c0_12], %22 {strides = array<i32>} : memref<1x1x1x1xf32, #tpu.memory_space<vmem>>, vector<1x1x1x1xf32>,
    %c0_13 = arith.constant 0 : index
    %c0_14 = arith.constant 0 : index
    %c0_15 = arith.constant 0 : index
    %24 = vector.load %arg5[%c0_13, %c0_14, %c0_15] : memref<1x16x16xf32, #tpu.memory_space<vmem>>, vector<1x16x16xf32>
    %25 = vector.shape_cast %24 : vector<1x16x16xf32> to vector<16x16xf32>
    %26 = arith.subf %1, %25 : vector<16x16xf32>
    %27 = arith.mulf %26, %26 : vector<16x16xf32>
    %28 = vector.shape_cast %27 : vector<16x16xf32> to vector<1x16x16xf32>
    %cst_16 = arith.constant dense<0.000000e+00> : vector<1xf32>
    %29 = vector.multi_reduction <add>, %28, %cst_16 [1, 2] : vector<1x16x16xf32> to vector<1xf32>
    %30 = vector.shape_cast %29 : vector<1xf32> to vector<1x1x1xf32>
    %31 = vector.extract %30[0, 0, 0] : f32 from vector<1x1x1xf32>
    %32 = vector.broadcast %31 : f32 to vector<1x1x1x1xf32>
    %c0_17 = arith.constant 0 : index
    %c0_18 = arith.constant 0 : index
    %c0_19 = arith.constant 0 : index
    %c0_20 = arith.constant 0 : index
    %33 = vector.load %arg8[%c0_17, %c0_18, %c0_19, %c0_20] : memref<1x1x1x1xf32, #tpu.memory_space<vmem>>, vector<1x1x1x1xf32>
    tpu.vector_store %arg8[%c0_17, %c0_18, %c0_19, %c0_20], %32 {strides = array<i32>} : memref<1x1x1x1xf32, #tpu.memory_space<vmem>>, vector<1x1x1x1xf32>,
    %c0_21 = arith.constant 0 : index
    %c0_22 = arith.constant 0 : index
    %c0_23 = arith.constant 0 : index
    %34 = vector.load %arg6[%c0_21, %c0_22, %c0_23] : memref<1x16x16xf32, #tpu.memory_space<vmem>>, vector<1x16x16xf32>
    %35 = vector.shape_cast %34 : vector<1x16x16xf32> to vector<16x16xf32>
    %36 = vector.extract_strided_slice %35 {offsets = [0, 1], sizes = [16, 15], strides = [1, 1]} : vector<16x16xf32> to vector<16x15xf32>
    %37 = vector.extract_strided_slice %35 {offsets = [0, 0], sizes = [16, 15], strides = [1, 1]} : vector<16x16xf32> to vector<16x15xf32>
    %38 = arith.subf %36, %37 : vector<16x15xf32>
    %39 = math.absf %38 : vector<16x15xf32>
    %cst_24 = arith.constant 0.000000e+00 : f32
    %40 = vector.broadcast %cst_24 : f32 to vector<16x15xf32>
    %41 = arith.subf %40, %39 : vector<16x15xf32>
    %42 = math.exp %41 : vector<16x15xf32>
    %43 = vector.extract_strided_slice %1 {offsets = [0, 1], sizes = [16, 15], strides = [1, 1]} : vector<16x16xf32> to vector<16x15xf32>
    %44 = vector.extract_strided_slice %1 {offsets = [0, 0], sizes = [16, 15], strides = [1, 1]} : vector<16x16xf32> to vector<16x15xf32>
    %45 = arith.subf %43, %44 : vector<16x15xf32>
    %46 = math.absf %45 : vector<16x15xf32>
    %47 = arith.mulf %42, %46 : vector<16x15xf32>
    %48 = vector.shape_cast %47 : vector<16x15xf32> to vector<1x16x15xf32>
    %cst_25 = arith.constant dense<0.000000e+00> : vector<1xf32>
    %49 = vector.multi_reduction <add>, %48, %cst_25 [1, 2] : vector<1x16x15xf32> to vector<1xf32>
    %50 = vector.shape_cast %49 : vector<1xf32> to vector<1x1x1xf32>
    %51 = vector.extract %50[0, 0, 0] : f32 from vector<1x1x1xf32>
    %52 = vector.broadcast %51 : f32 to vector<1x1x1x1xf32>
    %c0_26 = arith.constant 0 : index
    %c0_27 = arith.constant 0 : index
    %c0_28 = arith.constant 0 : index
    %c0_29 = arith.constant 0 : index
    %53 = vector.load %arg9[%c0_26, %c0_27, %c0_28, %c0_29] : memref<1x1x1x1xf32, #tpu.memory_space<vmem>>, vector<1x1x1x1xf32>
    tpu.vector_store %arg9[%c0_26, %c0_27, %c0_28, %c0_29], %52 {strides = array<i32>} : memref<1x1x1x1xf32, #tpu.memory_space<vmem>>, vector<1x1x1x1xf32>,
    %54 = vector.extract_strided_slice %35 {offsets = [1, 0], sizes = [15, 16], strides = [1, 1]} : vector<16x16xf32> to vector<15x16xf32>
    %55 = vector.extract_strided_slice %35 {offsets = [0, 0], sizes = [15, 16], strides = [1, 1]} : vector<16x16xf32> to vector<15x16xf32>
    %56 = arith.subf %54, %55 : vector<15x16xf32>
    %57 = math.absf %56 : vector<15x16xf32>
    %cst_30 = arith.constant 0.000000e+00 : f32
    %58 = vector.broadcast %cst_30 : f32 to vector<15x16xf32>
    %59 = arith.subf %58, %57 : vector<15x16xf32>
    %60 = math.exp %59 : vector<15x16xf32>
    %61 = vector.extract_strided_slice %1 {offsets = [1, 0], sizes = [15, 16], strides = [1, 1]} : vector<16x16xf32> to vector<15x16xf32>
    %62 = vector.extract_strided_slice %1 {offsets = [0, 0], sizes = [15, 16], strides = [1, 1]} : vector<16x16xf32> to vector<15x16xf32>
    %63 = arith.subf %61, %62 : vector<15x16xf32>
    %64 = math.absf %63 : vector<15x16xf32>
    %65 = arith.mulf %60, %64 : vector<15x16xf32>
    %66 = vector.shape_cast %65 : vector<15x16xf32> to vector<1x15x16xf32>
    %cst_31 = arith.constant dense<0.000000e+00> : vector<1xf32>
    %67 = vector.multi_reduction <add>, %66, %cst_31 [1, 2] : vector<1x15x16xf32> to vector<1xf32>
    %68 = vector.shape_cast %67 : vector<1xf32> to vector<1x1x1xf32>
    %69 = vector.extract %68[0, 0, 0] : f32 from vector<1x1x1xf32>
    %70 = vector.broadcast %69 : f32 to vector<1x1x1x1xf32>
    %c0_32 = arith.constant 0 : index
    %c0_33 = arith.constant 0 : index
    %c0_34 = arith.constant 0 : index
    %c0_35 = arith.constant 0 : index
    %71 = vector.load %arg10[%c0_32, %c0_33, %c0_34, %c0_35] : memref<1x1x1x1xf32, #tpu.memory_space<vmem>>, vector<1x1x1x1xf32>
    tpu.vector_store %arg10[%c0_32, %c0_33, %c0_34, %c0_35], %70 {strides = array<i32>} : memref<1x1x1x1xf32, #tpu.memory_space<vmem>>, vector<1x1x1x1xf32>,
    return
  }
  func.func @transform_0(%arg0: i32, %arg1: i32) -> (i32, i32) {
    %c0_i32 = arith.constant 0 : i32
    %c0_i32_0 = arith.constant 0 : i32
    %c0_i32_1 = arith.constant 0 : i32
    return %c0_i32, %c0_i32_0 : i32, i32
  }
  func.func @transform_1(%arg0: i32, %arg1: i32) -> (i32, i32, i32) {
    %c0_i32 = arith.constant 0 : i32
    %c0_i32_0 = arith.constant 0 : i32
    return %arg0, %arg1, %c0_i32 : i32, i32, i32
  }
  func.func @transform_2(%arg0: i32, %arg1: i32) -> (i32, i32, i32) {
    %c0_i32 = arith.constant 0 : i32
    %c0_i32_0 = arith.constant 0 : i32
    return %arg0, %arg1, %c0_i32 : i32, i32, i32
  }
  func.func @transform_3(%arg0: i32, %arg1: i32) -> (i32, i32, i32) {
    %c0_i32 = arith.constant 0 : i32
    %c0_i32_0 = arith.constant 0 : i32
    return %arg0, %arg1, %c0_i32 : i32, i32, i32
  }
  func.func @transform_4(%arg0: i32, %arg1: i32) -> (i32, i32, i32) {
    %c0_i32 = arith.constant 0 : i32
    %c0_i32_0 = arith.constant 0 : i32
    return %arg0, %arg1, %c0_i32 : i32, i32, i32
  }
  func.func @transform_5(%arg0: i32, %arg1: i32) -> (i32, i32, i32, i32) {
    %c0_i32 = arith.constant 0 : i32
    %c0_i32_0 = arith.constant 0 : i32
    %c0_i32_1 = arith.constant 0 : i32
    return %arg0, %arg1, %c0_i32, %c0_i32_0 : i32, i32, i32, i32
  }
  func.func @transform_6(%arg0: i32, %arg1: i32) -> (i32, i32, i32, i32) {
    %c0_i32 = arith.constant 0 : i32
    %c0_i32_0 = arith.constant 0 : i32
    %c0_i32_1 = arith.constant 0 : i32
    return %arg0, %arg1, %c0_i32, %c0_i32_0 : i32, i32, i32, i32
  }
  func.func @transform_7(%arg0: i32, %arg1: i32) -> (i32, i32, i32, i32) {
    %c0_i32 = arith.constant 0 : i32
    %c0_i32_0 = arith.constant 0 : i32
    %c0_i32_1 = arith.constant 0 : i32
    return %arg0, %arg1, %c0_i32, %c0_i32_0 : i32, i32, i32, i32
  }
  func.func @transform_8(%arg0: i32, %arg1: i32) -> (i32, i32, i32, i32) {
    %c0_i32 = arith.constant 0 : i32
    %c0_i32_0 = arith.constant 0 : i32
    %c0_i32_1 = arith.constant 0 : i32
    return %arg0, %arg1, %c0_i32, %c0_i32_0 : i32, i32, i32, i32
  }
}

module attributes {stable_mosaic.version = 11 : i64} {
  func.func @kernel(%arg0: i32, %arg1: i32, %arg2: memref<1x4x4xf32, #tpu.memory_space<vmem>>, %arg3: memref<1x4x4xf32, #tpu.memory_space<vmem>>, %arg4: memref<1x1x1x1xf32, #tpu.memory_space<vmem>>) attributes {dimension_semantics = [#tpu.dimension_semantics<parallel>, #tpu.dimension_semantics<parallel>], iteration_bounds = array<i64: 2, 1>, scalar_prefetch = 0 : i64, scratch_operands = 0 : i64, tpu.core_type = #tpu.core_type<tc>, window_params = [{transform_indices = @transform_0, window_bounds = array<i64: 1, 4, 4>}, {transform_indices = @transform_1, window_bounds = array<i64: 1, 4, 4>}, {transform_indices = @transform_2, window_bounds = array<i64: 1, 1, 1, 1>}]} {
    %c0 = arith.constant 0 : index
    %c0_0 = arith.constant 0 : index
    %c0_1 = arith.constant 0 : index
    %0 = vector.load %arg2[%c0, %c0_0, %c0_1] : memref<1x4x4xf32, #tpu.memory_space<vmem>>, vector<1x4x4xf32>
    %1 = vector.shape_cast %0 : vector<1x4x4xf32> to vector<4x4xf32>
    %c0_2 = arith.constant 0 : index
    %c0_3 = arith.constant 0 : index
    %c0_4 = arith.constant 0 : index
    %2 = vector.load %arg3[%c0_2, %c0_3, %c0_4] : memref<1x4x4xf32, #tpu.memory_space<vmem>>, vector<1x4x4xf32>
    %3 = vector.shape_cast %2 : vector<1x4x4xf32> to vector<4x4xf32>
    %4 = arith.subf %1, %3 : vector<4x4xf32>
    %5 = math.absf %4 : vector<4x4xf32>
    %6 = vector.shape_cast %5 : vector<4x4xf32> to vector<1x4x4xf32>
    %cst = arith.constant dense<0xFF800000> : vector<1xf32>
    %7 = vector.multi_reduction <maximumf>, %6, %cst [1, 2] : vector<1x4x4xf32> to vector<1xf32>
    %8 = vector.shape_cast %7 : vector<1xf32> to vector<1x1x1xf32>
    %9 = vector.extract %8[0, 0, 0] : f32 from vector<1x1x1xf32>
    %10 = vector.broadcast %9 : f32 to vector<1x1x1x1xf32>
    %c0_5 = arith.constant 0 : index
    %c0_6 = arith.constant 0 : index
    %c0_7 = arith.constant 0 : index
    %c0_8 = arith.constant 0 : index
    %11 = vector.load %arg4[%c0_5, %c0_6, %c0_7, %c0_8] : memref<1x1x1x1xf32, #tpu.memory_space<vmem>>, vector<1x1x1x1xf32>
    tpu.vector_store %arg4[%c0_5, %c0_6, %c0_7, %c0_8], %10 {strides = array<i32>} : memref<1x1x1x1xf32, #tpu.memory_space<vmem>>, vector<1x1x1x1xf32>,
    return
  }
  func.func @transform_0(%arg0: i32, %arg1: i32) -> (i32, i32, i32) {
    %c0_i32 = arith.constant 0 : i32
    %c0_i32_0 = arith.constant 0 : i32
    return %arg0, %arg1, %c0_i32 : i32, i32, i32
  }
  func.func @transform_1(%arg0: i32, %arg1: i32) -> (i32, i32, i32) {
    %c0_i32 = arith.constant 0 : i32
    %c0_i32_0 = arith.constant 0 : i32
    return %arg0, %arg1, %c0_i32 : i32, i32, i32
  }
  func.func @transform_2(%arg0: i32, %arg1: i32) -> (i32, i32, i32, i32) {
    %c0_i32 = arith.constant 0 : i32
    %c0_i32_0 = arith.constant 0 : i32
    %c0_i32_1 = arith.constant 0 : i32
    return %arg0, %arg1, %c0_i32, %c0_i32_0 : i32, i32, i32, i32
  }
}

module attributes {stable_mosaic.version = 11 : i64} {
  func.func @kernel(%arg0: i32, %arg1: i32, %arg2: memref<1x1xf32, #tpu.memory_space<smem>>, %arg3: memref<1x4x4xf32, #tpu.memory_space<vmem>>, %arg4: memref<1x4x4xf32, #tpu.memory_space<vmem>>, %arg5: memref<1x4x4xf32, #tpu.memory_space<vmem>>, %arg6: memref<1x1x1x1xf32, #tpu.memory_space<vmem>>, %arg7: memref<1x1x1x1xf32, #tpu.memory_space<vmem>>, %arg8: memref<1x1x1x1xf32, #tpu.memory_space<vmem>>) attributes {dimension_semantics = [#tpu.dimension_semantics<parallel>, #tpu.dimension_semantics<parallel>], iteration_bounds = array<i64: 2, 1>, scalar_prefetch = 0 : i64, scratch_operands = 0 : i64, tpu.core_type = #tpu.core_type<tc>, window_params = [{transform_indices = @transform_0, window_bounds = array<i64: 1, 1>}, {transform_indices = @transform_1, window_bounds = array<i64: 1, 4, 4>}, {transform_indices = @transform_2, window_bounds = array<i64: 1, 4, 4>}, {transform_indices = @transform_3, window_bounds = array<i64: 1, 4, 4>}, {transform_indices = @transform_4, window_bounds = array<i64: 1, 1, 1, 1>}, {transform_indices = @transform_5, window_bounds = array<i64: 1, 1, 1, 1>}, {transform_indices = @transform_6, window_bounds = array<i64: 1, 1, 1, 1>}]} {
    %c0 = arith.constant 0 : index
    %c0_0 = arith.constant 0 : index
    %c0_1 = arith.constant 0 : index
    %0 = vector.load %arg3[%c0, %c0_0, %c0_1] : memref<1x4x4xf32, #tpu.memory_space<vmem>>, vector<1x4x4xf32>
    %1 = vector.shape_cast %0 : vector<1x4x4xf32> to vector<4x4xf32>
    %c0_2 = arith.constant 0 : index
    %c0_3 = arith.constant 0 : index
    %2 = memref.load %arg2[%c0_2, %c0_3] : memref<1x1xf32, #tpu.memory_space<smem>>
    %cst = arith.constant 9.99999996E-13 : f32
    %3 = arith.maximumf %2, %cst : f32
    %cst_4 = arith.constant 5.000000e-01 : f32
    %4 = arith.divf %cst_4, %3 : f32
    %5 = arith.mulf %2, %2 : f32
    %c0_5 = arith.constant 0 : index
    %c0_6 = arith.constant 0 : index
    %c0_7 = arith.constant 0 : index
    %6 = vector.load %arg4[%c0_5, %c0_6, %c0_7] : memref<1x4x4xf32, #tpu.memory_space<vmem>>, vector<1x4x4xf32>
    %7 = vector.shape_cast %6 : vector<1x4x4xf32> to vector<4x4xf32>
    %8 = arith.subf %1, %7 : vector<4x4xf32>
    %9 = math.absf %8 : vector<4x4xf32>
    %10 = vector.broadcast %2 : f32 to vector<4x4xf32>
    %11 = arith.cmpf ole, %9, %10 : vector<4x4xf32>
    %12 = arith.mulf %9, %9 : vector<4x4xf32>
    %13 = vector.broadcast %5 : f32 to vector<4x4xf32>
    %14 = arith.addf %12, %13 : vector<4x4xf32>
    %15 = vector.broadcast %4 : f32 to vector<4x4xf32>
    %16 = arith.mulf %14, %15 : vector<4x4xf32>
    %17 = arith.select %11, %9, %16 : vector<4x4xi1>, vector<4x4xf32>
    %18 = vector.shape_cast %17 : vector<4x4xf32> to vector<1x4x4xf32>
    %cst_8 = arith.constant dense<0.000000e+00> : vector<1xf32>
    %19 = vector.multi_reduction <add>, %18, %cst_8 [1, 2] : vector<1x4x4xf32> to vector<1xf32>
    %20 = vector.shape_cast %19 : vector<1xf32> to vector<1x1x1xf32>
    %21 = vector.extract %20[0, 0, 0] : f32 from vector<1x1x1xf32>
    %22 = vector.broadcast %21 : f32 to vector<1x1x1x1xf32>
    %c0_9 = arith.constant 0 : index
    %c0_10 = arith.constant 0 : index
    %c0_11 = arith.constant 0 : index
    %c0_12 = arith.constant 0 : index
    %23 = vector.load %arg6[%c0_9, %c0_10, %c0_11, %c0_12] : memref<1x1x1x1xf32, #tpu.memory_space<vmem>>, vector<1x1x1x1xf32>
    tpu.vector_store %arg6[%c0_9, %c0_10, %c0_11, %c0_12], %22 {strides = array<i32>} : memref<1x1x1x1xf32, #tpu.memory_space<vmem>>, vector<1x1x1x1xf32>,
    %c0_13 = arith.constant 0 : index
    %c0_14 = arith.constant 0 : index
    %c0_15 = arith.constant 0 : index
    %24 = vector.load %arg5[%c0_13, %c0_14, %c0_15] : memref<1x4x4xf32, #tpu.memory_space<vmem>>, vector<1x4x4xf32>
    %25 = vector.shape_cast %24 : vector<1x4x4xf32> to vector<4x4xf32>
    %26 = vector.extract_strided_slice %25 {offsets = [0, 1], sizes = [4, 3], strides = [1, 1]} : vector<4x4xf32> to vector<4x3xf32>
    %27 = vector.extract_strided_slice %25 {offsets = [0, 0], sizes = [4, 3], strides = [1, 1]} : vector<4x4xf32> to vector<4x3xf32>
    %28 = arith.subf %26, %27 : vector<4x3xf32>
    %29 = math.absf %28 : vector<4x3xf32>
    %cst_16 = arith.constant 0.000000e+00 : f32
    %30 = vector.broadcast %cst_16 : f32 to vector<4x3xf32>
    %31 = arith.subf %30, %29 : vector<4x3xf32>
    %32 = math.exp %31 : vector<4x3xf32>
    %33 = vector.extract_strided_slice %1 {offsets = [0, 1], sizes = [4, 3], strides = [1, 1]} : vector<4x4xf32> to vector<4x3xf32>
    %34 = vector.extract_strided_slice %1 {offsets = [0, 0], sizes = [4, 3], strides = [1, 1]} : vector<4x4xf32> to vector<4x3xf32>
    %35 = arith.subf %33, %34 : vector<4x3xf32>
    %36 = math.absf %35 : vector<4x3xf32>
    %37 = arith.mulf %32, %36 : vector<4x3xf32>
    %38 = vector.shape_cast %37 : vector<4x3xf32> to vector<1x4x3xf32>
    %cst_17 = arith.constant dense<0.000000e+00> : vector<1xf32>
    %39 = vector.multi_reduction <add>, %38, %cst_17 [1, 2] : vector<1x4x3xf32> to vector<1xf32>
    %40 = vector.shape_cast %39 : vector<1xf32> to vector<1x1x1xf32>
    %41 = vector.extract %40[0, 0, 0] : f32 from vector<1x1x1xf32>
    %42 = vector.broadcast %41 : f32 to vector<1x1x1x1xf32>
    %c0_18 = arith.constant 0 : index
    %c0_19 = arith.constant 0 : index
    %c0_20 = arith.constant 0 : index
    %c0_21 = arith.constant 0 : index
    %43 = vector.load %arg7[%c0_18, %c0_19, %c0_20, %c0_21] : memref<1x1x1x1xf32, #tpu.memory_space<vmem>>, vector<1x1x1x1xf32>
    tpu.vector_store %arg7[%c0_18, %c0_19, %c0_20, %c0_21], %42 {strides = array<i32>} : memref<1x1x1x1xf32, #tpu.memory_space<vmem>>, vector<1x1x1x1xf32>,
    %44 = vector.extract_strided_slice %25 {offsets = [1, 0], sizes = [3, 4], strides = [1, 1]} : vector<4x4xf32> to vector<3x4xf32>
    %45 = vector.extract_strided_slice %25 {offsets = [0, 0], sizes = [3, 4], strides = [1, 1]} : vector<4x4xf32> to vector<3x4xf32>
    %46 = arith.subf %44, %45 : vector<3x4xf32>
    %47 = math.absf %46 : vector<3x4xf32>
    %cst_22 = arith.constant 0.000000e+00 : f32
    %48 = vector.broadcast %cst_22 : f32 to vector<3x4xf32>
    %49 = arith.subf %48, %47 : vector<3x4xf32>
    %50 = math.exp %49 : vector<3x4xf32>
    %51 = vector.extract_strided_slice %1 {offsets = [1, 0], sizes = [3, 4], strides = [1, 1]} : vector<4x4xf32> to vector<3x4xf32>
    %52 = vector.extract_strided_slice %1 {offsets = [0, 0], sizes = [3, 4], strides = [1, 1]} : vector<4x4xf32> to vector<3x4xf32>
    %53 = arith.subf %51, %52 : vector<3x4xf32>
    %54 = math.absf %53 : vector<3x4xf32>
    %55 = arith.mulf %50, %54 : vector<3x4xf32>
    %56 = vector.shape_cast %55 : vector<3x4xf32> to vector<1x3x4xf32>
    %cst_23 = arith.constant dense<0.000000e+00> : vector<1xf32>
    %57 = vector.multi_reduction <add>, %56, %cst_23 [1, 2] : vector<1x3x4xf32> to vector<1xf32>
    %58 = vector.shape_cast %57 : vector<1xf32> to vector<1x1x1xf32>
    %59 = vector.extract %58[0, 0, 0] : f32 from vector<1x1x1xf32>
    %60 = vector.broadcast %59 : f32 to vector<1x1x1x1xf32>
    %c0_24 = arith.constant 0 : index
    %c0_25 = arith.constant 0 : index
    %c0_26 = arith.constant 0 : index
    %c0_27 = arith.constant 0 : index
    %61 = vector.load %arg8[%c0_24, %c0_25, %c0_26, %c0_27] : memref<1x1x1x1xf32, #tpu.memory_space<vmem>>, vector<1x1x1x1xf32>
    tpu.vector_store %arg8[%c0_24, %c0_25, %c0_26, %c0_27], %60 {strides = array<i32>} : memref<1x1x1x1xf32, #tpu.memory_space<vmem>>, vector<1x1x1x1xf32>,
    return
  }
  func.func @transform_0(%arg0: i32, %arg1: i32) -> (i32, i32) {
    %c0_i32 = arith.constant 0 : i32
    %c0_i32_0 = arith.constant 0 : i32
    %c0_i32_1 = arith.constant 0 : i32
    return %c0_i32, %c0_i32_0 : i32, i32
  }
  func.func @transform_1(%arg0: i32, %arg1: i32) -> (i32, i32, i32) {
    %c0_i32 = arith.constant 0 : i32
    %c0_i32_0 = arith.constant 0 : i32
    return %arg0, %arg1, %c0_i32 : i32, i32, i32
  }
  func.func @transform_2(%arg0: i32, %arg1: i32) -> (i32, i32, i32) {
    %c0_i32 = arith.constant 0 : i32
    %c0_i32_0 = arith.constant 0 : i32
    return %arg0, %arg1, %c0_i32 : i32, i32, i32
  }
  func.func @transform_3(%arg0: i32, %arg1: i32) -> (i32, i32, i32) {
    %c0_i32 = arith.constant 0 : i32
    %c0_i32_0 = arith.constant 0 : i32
    return %arg0, %arg1, %c0_i32 : i32, i32, i32
  }
  func.func @transform_4(%arg0: i32, %arg1: i32) -> (i32, i32, i32, i32) {
    %c0_i32 = arith.constant 0 : i32
    %c0_i32_0 = arith.constant 0 : i32
    %c0_i32_1 = arith.constant 0 : i32
    return %arg0, %arg1, %c0_i32, %c0_i32_0 : i32, i32, i32, i32
  }
  func.func @transform_5(%arg0: i32, %arg1: i32) -> (i32, i32, i32, i32) {
    %c0_i32 = arith.constant 0 : i32
    %c0_i32_0 = arith.constant 0 : i32
    %c0_i32_1 = arith.constant 0 : i32
    return %arg0, %arg1, %c0_i32, %c0_i32_0 : i32, i32, i32, i32
  }
  func.func @transform_6(%arg0: i32, %arg1: i32) -> (i32, i32, i32, i32) {
    %c0_i32 = arith.constant 0 : i32
    %c0_i32_0 = arith.constant 0 : i32
    %c0_i32_1 = arith.constant 0 : i32
    return %arg0, %arg1, %c0_i32, %c0_i32_0 : i32, i32, i32, i32
  }
}

</mosaic_0001>

<llo_original>
// kernel: run.8
$region0: #{run.8}
  #allocation0 [shape = 'u32[]', space=smem, size = 0x4, offset = 0x4, fixed_abs, tag = 'smem constant byte address 0x4 - core index']
  #allocation1 [shape = 'u32[144,128]{1,0:T(1,128)}', space=vmem, size = 0x12000, scoped, tag = 'internal scratch']
  %s0 = inlined_call_operand.vmem [shape: f32[2,8,8], index: 0, kind: input, shape index: {}]
  %s1 = inlined_call_operand.vmem [shape: f32[2,8,8], index: 1, kind: input, shape index: {}]
  %s2 = inlined_call_operand.vmem [shape: f32[2,1,1,1], index: 2, kind: output, shape index: {}]
  %s3 = sld [smem:[#allocation0]]
  $region41: #{run.8} parent=0
    _
  %s5 = ssub.s32 1, %s3
  %s6 = scalar_select 0, %s5, %s3
  loop: start=0, step=1, limit=4
  $region2: #{run.8} parent=0 // loop_pre_header
    _
  $region3: #{run.8} parent=0 // loop_header
    %s8 = sphi 0, %s12
    %p9 = scmp.ge.s32.totalorder %s8, 4
    %s15 = sphi 0, %s27
    %s16 = sphi 0, %s23
    %s17 = sphi 0, %s15
    %s18 = sphi 0, %s16
    %s19 = sphi 0, %s17
    %s20 = sphi 0, %s18
    %s32 = sphi 0, %s34
    %s35 = sphi 0, %s32
    %s36 = sphi 0, %s35
    %s52 = sphi 0, %s36
    %s60 = sphi 0, %s62
    %s63 = sphi 0, %s60
    %s64 = sphi 0, %s63
    %s80 = sphi 0, %s64
    %s88 = sphi 0, %s90
    %s91 = sphi 0, %s88
    %s92 = sphi 0, %s91
    %s108 = sphi 0, %s92
  $region4: #{run.8} parent=0 // loop_header_branch
    %11 = sbr.rel (%p9) target = $region8
  $region5: #{run.8} parent=0 // loop_body
    %s13 = ssub.s32 %s8, 1
    %s14 = ssub.s32 %s8, 2
    %s21 = sadd.s32 1, %s16
    %p22 = scmp.ge.s32.totalorder %s21, 1
    %s23 = scalar_select %p22, 0, %s21
    %s24 = sadd.s32 1, %s15
    %s25 = scalar_select %p22, %s24, %s15
    %p26 = scmp.ge.s32.totalorder %s25, 2
    %s27 = scalar_select %p26, 0, %s25
    %s28 = ssub.s32 %s15, %s27
    %s29 = ssub.s32 %s16, %s23
    %s30 = sor.u32 %s28, %s29
    %p31 = scmp.eq.s32.totalorder %s30, 0
    %s33 = sadd.s32 %s32, 1
    %s34 = scalar_select %p31, %s32, %s33
    %p37 = pneg %p31
    %p38 = scmp.eq.s32.totalorder %s8, 1
    %p39 = por %p37, %p38
    %p40 = scmp.ne.s32.totalorder %s32, %s35
    %p41 = scmp.eq.s32.totalorder %s8, 0
    %p42 = por %p40, %p41
    %p43 = scmp.ne.s32.totalorder %s32, %s35
    %p44 = scmp.eq.s32.totalorder %s13, 1
    %p45 = por %p43, %p44
    %p46 = scmp.ne.s32.totalorder %s35, %s36
    %p47 = scmp.eq.s32.totalorder %s13, 0
    %p48 = por %p46, %p47
    %p49 = scmp.ne.s32.totalorder %s35, %s36
    %p50 = scmp.eq.s32.totalorder %s14, 1
    %p51 = por %p49, %p50
    %p53 = scmp.ne.s32.totalorder %s36, %s52
    %p54 = scmp.eq.s32.totalorder %s14, 0
    %p55 = por %p53, %p54
    %s56 = ssub.s32 %s15, %s27
    %s57 = ssub.s32 %s16, %s23
    %s58 = sor.u32 %s56, %s57
    %p59 = scmp.eq.s32.totalorder %s58, 0
    %s61 = sadd.s32 %s60, 1
    %s62 = scalar_select %p59, %s60, %s61
    %p65 = pneg %p59
    %p66 = scmp.eq.s32.totalorder %s8, 1
    %p67 = por %p65, %p66
    %p68 = scmp.ne.s32.totalorder %s60, %s63
    %p69 = scmp.eq.s32.totalorder %s8, 0
    %p70 = por %p68, %p69
    %p71 = scmp.ne.s32.totalorder %s60, %s63
    %p72 = scmp.eq.s32.totalorder %s13, 1
    %p73 = por %p71, %p72
    %p74 = scmp.ne.s32.totalorder %s63, %s64
    %p75 = scmp.eq.s32.totalorder %s13, 0
    %p76 = por %p74, %p75
    %p77 = scmp.ne.s32.totalorder %s63, %s64
    %p78 = scmp.eq.s32.totalorder %s14, 1
    %p79 = por %p77, %p78
    %p81 = scmp.ne.s32.totalorder %s64, %s80
    %p82 = scmp.eq.s32.totalorder %s14, 0
    %p83 = por %p81, %p82
    %s84 = ssub.s32 %s15, %s27
    %s85 = ssub.s32 %s16, %s23
    %s86 = sor.u32 %s84, %s85
    %p87 = scmp.eq.s32.totalorder %s86, 0
    %s89 = sadd.s32 %s88, 1
    %s90 = scalar_select %p87, %s88, %s89
    %p93 = pneg %p87
    %p94 = scmp.eq.s32.totalorder %s8, 1
    %p95 = por %p93, %p94
    %p96 = scmp.ne.s32.totalorder %s88, %s91
    %p97 = scmp.eq.s32.totalorder %s8, 0
    %p98 = por %p96, %p97
    %p99 = scmp.ne.s32.totalorder %s88, %s91
    %p100 = scmp.eq.s32.totalorder %s13, 1
    %p101 = por %p99, %p100
    %p102 = scmp.ne.s32.totalorder %s91, %s92
    %p103 = scmp.eq.s32.totalorder %s13, 0
    %p104 = por %p102, %p103
    %p105 = scmp.ne.s32.totalorder %s91, %s92
    %p106 = scmp.eq.s32.totalorder %s14, 1
    %p107 = por %p105, %p106
    %p109 = scmp.ne.s32.totalorder %s92, %s108
    %p110 = scmp.eq.s32.totalorder %s14, 0
    %p111 = por %p109, %p110
    %p112 = scmp.le.s32.totalorder 1, %s8
    %p113 = scmp.lt.s32.totalorder %s8, 3
    %p114 = pnand %p112, %p113
    %p115 = pneg %p114
    // Predicated region
    $region9: #{run.8} parent=5 // pred_check
      _
    $region10: #{run.8} parent=5 // pred_check_branch
      %117 = sbr.rel (%p114) target = $region12
    $region11: #{run.8} parent=5 // pred_region
      %s118 = ssub.s32 %s8, 1
    $region12: #{run.8} parent=5 // pred_fallthru
      _
    %p119 = scmp.lt.s32.totalorder %s8, 2
    // Predicated region
    $region13: #{run.8} parent=5 // pred_check
      %p120 = pneg %p119
    $region14: #{run.8} parent=5 // pred_check_branch
      %122 = sbr.rel (%p120) target = $region16
    $region15: #{run.8} parent=5 // pred_region
      // Predicated region
      $region17: #{run.8} parent=15 // pred_check
        %p123 = pneg %p42
      $region18: #{run.8} parent=15 // pred_check_branch
        %125 = sbr.rel (%p123) target = $region20
      $region19: #{run.8} parent=15 // pred_region
        %p126 = scmp.lt.s32.totalorder %s15, 1
        %s127 = scalar_select %p126, %s15, 1
        %p128 = scmp.lt.s32.totalorder %s16, 0
        %s129 = scalar_select %p128, %s16, 0
        %s130 = sadd.s32 %s129, %s127
        %s131 = smul.addr %s130, 8
        %s132 = scalar_lea.vmem %s0, %s131
      $region20: #{run.8} parent=15 // pred_fallthru
        _
      // Predicated region
      $region21: #{run.8} parent=15 // pred_check
        %p133 = pneg %p70
      $region22: #{run.8} parent=15 // pred_check_branch
        %135 = sbr.rel (%p133) target = $region24
      $region23: #{run.8} parent=15 // pred_region
        %p136 = scmp.lt.s32.totalorder %s15, 1
        %s137 = scalar_select %p136, %s15, 1
        %p138 = scmp.lt.s32.totalorder %s16, 0
        %s139 = scalar_select %p138, %s16, 0
        %s140 = sadd.s32 %s139, %s137
        %s141 = smul.addr %s140, 8
        %s142 = scalar_lea.vmem %s1, %s141
      $region24: #{run.8} parent=15 // pred_fallthru
        _
    $region16: #{run.8} parent=5 // pred_fallthru
      _
    %p143 = scmp.le.s32.totalorder 1, %s8
    %p144 = scmp.lt.s32.totalorder %s8, 3
    %p145 = pnand %p143, %p144
    %p146 = pneg %p145
    // Predicated region
    $region25: #{run.8} parent=5 // pred_check
      _
    $region26: #{run.8} parent=5 // pred_check_branch
      %148 = sbr.rel (%p145) target = $region28
    $region27: #{run.8} parent=5 // pred_region
      %s149 = ssub.s32 %s8, 1
      %p150 = scmp.lt.s32.totalorder %s17, 1
      %s151 = scalar_select %p150, %s17, 1
      %p152 = scmp.lt.s32.totalorder %s18, 0
      %s153 = scalar_select %p152, %s18, 0
      %s154 = sadd.s32 %s153, %s151
      %s155 = smul.addr %s154, 8
      %s156 = scalar_lea.vmem %s0, %s155
      %p157 = pneg %p48
      %p158 = pneg %p45
      %p159 = scmp.lt.s32.totalorder %s17, 1
      %s160 = scalar_select %p159, %s17, 1
      %p161 = scmp.lt.s32.totalorder %s18, 0
      %s162 = scalar_select %p161, %s18, 0
      %s163 = sadd.s32 %s162, %s160
      %s164 = smul.addr %s163, 8
      %s165 = scalar_lea.vmem %s1, %s164
      %p166 = pneg %p76
      %p167 = pneg %p73
      %p168 = pneg %p104
      %p169 = pneg %p101
      %p170 = scmp.lt.s32.totalorder %s17, 1
      %s171 = scalar_select %p170, %s17, 1
      %p172 = scmp.lt.s32.totalorder %s18, 0
      %s173 = scalar_select %p172, %s18, 0
      %s174 = sadd.s32 %s173, %s171
      %s175 = scalar_lea.vmem %s2, %s174
      %p176 = scmp.lt.s32.totalorder %s17, 1
      %s177 = scalar_select %p176, %s17, 1
      %p178 = scmp.lt.s32.totalorder %s18, 0
      %s179 = scalar_select %p178, %s18, 0
      %s180 = sadd.s32 %s179, %s177
      %s181 = smul.addr %s180, 8
      %s182 = scalar_lea.vmem %s0, %s181
      %p183 = scmp.lt.s32.totalorder %s17, 1
      %s184 = scalar_select %p183, %s17, 1
      %p185 = scmp.lt.s32.totalorder %s18, 0
      %s186 = scalar_select %p185, %s18, 0
      %s187 = sadd.s32 %s186, %s184
      %s188 = smul.addr %s187, 8
      %s189 = scalar_lea.vmem %s1, %s188
      %p190 = scmp.lt.s32.totalorder %s17, 1
      %s191 = scalar_select %p190, %s17, 1
      %p192 = scmp.lt.s32.totalorder %s18, 0
      %s193 = scalar_select %p192, %s18, 0
      %s194 = sadd.s32 %s193, %s191
      %s195 = scalar_lea.vmem %s2, %s194
      %v196 = vld [vmem:[%s182] sm:$0xff]
      %v197 = vld [vmem:[%s189] sm:$0xff]
      %v198 = vsub.f32 %v196, %v197
      %v199 = vand.u32 2147483647, %v198
      %vm200 = vcmask 64512
      %v201 = vsel %vm200, %v199, -inf
      %202 = vmax.xlane.f32.xlu0 %v201
      %v203 = vpop.xlane.xlu0 %202
      %v204 = vrot.slane %v203, 4
      %v205 = vmax.f32 %v203, %v204
      %v206 = vrot.slane %v205, 2
      %v207 = vmax.f32 %v205, %v206
      %v208 = vrot.slane %v207, 1
      %v209 = vmax.f32 %v207, %v208
      %s210 = vtos %v209
      %v211 = vstv %s210
      %vm212 = vcmask 0
      %213 = vst.msk [vmem:[%s195] sm:$0x1] %vm212, %v211
      %p214 = scmp.lt.s32.totalorder %s17, 1
      %s215 = scalar_select %p214, %s17, 1
      %p216 = scmp.lt.s32.totalorder %s18, 0
      %s217 = scalar_select %p216, %s18, 0
      %s218 = sadd.s32 %s217, %s215
      %s219 = scalar_lea.vmem %s2, %s218
      // Predicated region
      $region29: #{run.8} parent=27 // pred_check
        %p220 = pneg %p101
      $region30: #{run.8} parent=27 // pred_check_branch
        %222 = sbr.rel (%p220) target = $region32
      $region31: #{run.8} parent=27 // pred_region
        _
      $region32: #{run.8} parent=27 // pred_fallthru
        _
    $region28: #{run.8} parent=5 // pred_fallthru
      _
    %p223 = scmp.le.s32.totalorder 2, %s8
    // Predicated region
    $region33: #{run.8} parent=5 // pred_check
      %p224 = pneg %p223
    $region34: #{run.8} parent=5 // pred_check_branch
      %226 = sbr.rel (%p224) target = $region36
    $region35: #{run.8} parent=5 // pred_region
      %s227 = ssub.s32 %s8, 2
      // Predicated region
      $region37: #{run.8} parent=35 // pred_check
        %p228 = pneg %p107
      $region38: #{run.8} parent=35 // pred_check_branch
        %230 = sbr.rel (%p228) target = $region40
      $region39: #{run.8} parent=35 // pred_region
        %p231 = scmp.lt.s32.totalorder %s19, 1
        %s232 = scalar_select %p231, %s19, 1
        %p233 = scmp.lt.s32.totalorder %s20, 0
        %s234 = scalar_select %p233, %s20, 0
        %s235 = sadd.s32 %s234, %s232
        %s236 = scalar_lea.vmem %s2, %s235
      $region40: #{run.8} parent=35 // pred_fallthru
        _
    $region36: #{run.8} parent=5 // pred_fallthru
      _
  $region6: #{run.8} parent=0 // loop_footer
    %s12 = sadd.s32 1, %s8
  $region7: #{run.8} parent=0 // loop_footer_branch
    %7 = sbr.rel target = $region3
  $region8: #{run.8} parent=0 // loop_exit
    _

// kernel: run.6
$region0: #{run.6}
  #allocation0 [shape = 'u32[]', space=smem, size = 0x4, offset = 0x4, fixed_abs, tag = 'smem constant byte address 0x4 - core index']
  #allocation1 [shape = 'u32[144,128]{1,0:T(1,128)}', space=vmem, size = 0x12000, scoped, tag = 'internal scratch']
  %s0 = inlined_call_operand.vmem [shape: f32[2,16,16], index: 0, kind: input, shape index: {}]
  %s1 = inlined_call_operand.vmem [shape: f32[2,16,16], index: 1, kind: input, shape index: {}]
  %s2 = inlined_call_operand.vmem [shape: f32[2,1,1,1], index: 2, kind: output, shape index: {}]
  %s3 = sld [smem:[#allocation0]]
  $region41: #{run.6} parent=0
    _
  %s5 = ssub.s32 1, %s3
  %s6 = scalar_select 0, %s5, %s3
  loop: start=0, step=1, limit=4
  $region2: #{run.6} parent=0 // loop_pre_header
    _
  $region3: #{run.6} parent=0 // loop_header
    %s8 = sphi 0, %s12
    %p9 = scmp.ge.s32.totalorder %s8, 4
    %s15 = sphi 0, %s27
    %s16 = sphi 0, %s23
    %s17 = sphi 0, %s15
    %s18 = sphi 0, %s16
    %s19 = sphi 0, %s17
    %s20 = sphi 0, %s18
    %s32 = sphi 0, %s34
    %s35 = sphi 0, %s32
    %s36 = sphi 0, %s35
    %s52 = sphi 0, %s36
    %s60 = sphi 0, %s62
    %s63 = sphi 0, %s60
    %s64 = sphi 0, %s63
    %s80 = sphi 0, %s64
    %s88 = sphi 0, %s90
    %s91 = sphi 0, %s88
    %s92 = sphi 0, %s91
    %s108 = sphi 0, %s92
  $region4: #{run.6} parent=0 // loop_header_branch
    %11 = sbr.rel (%p9) target = $region8
  $region5: #{run.6} parent=0 // loop_body
    %s13 = ssub.s32 %s8, 1
    %s14 = ssub.s32 %s8, 2
    %s21 = sadd.s32 1, %s16
    %p22 = scmp.ge.s32.totalorder %s21, 1
    %s23 = scalar_select %p22, 0, %s21
    %s24 = sadd.s32 1, %s15
    %s25 = scalar_select %p22, %s24, %s15
    %p26 = scmp.ge.s32.totalorder %s25, 2
    %s27 = scalar_select %p26, 0, %s25
    %s28 = ssub.s32 %s15, %s27
    %s29 = ssub.s32 %s16, %s23
    %s30 = sor.u32 %s28, %s29
    %p31 = scmp.eq.s32.totalorder %s30, 0
    %s33 = sadd.s32 %s32, 1
    %s34 = scalar_select %p31, %s32, %s33
    %p37 = pneg %p31
    %p38 = scmp.eq.s32.totalorder %s8, 1
    %p39 = por %p37, %p38
    %p40 = scmp.ne.s32.totalorder %s32, %s35
    %p41 = scmp.eq.s32.totalorder %s8, 0
    %p42 = por %p40, %p41
    %p43 = scmp.ne.s32.totalorder %s32, %s35
    %p44 = scmp.eq.s32.totalorder %s13, 1
    %p45 = por %p43, %p44
    %p46 = scmp.ne.s32.totalorder %s35, %s36
    %p47 = scmp.eq.s32.totalorder %s13, 0
    %p48 = por %p46, %p47
    %p49 = scmp.ne.s32.totalorder %s35, %s36
    %p50 = scmp.eq.s32.totalorder %s14, 1
    %p51 = por %p49, %p50
    %p53 = scmp.ne.s32.totalorder %s36, %s52
    %p54 = scmp.eq.s32.totalorder %s14, 0
    %p55 = por %p53, %p54
    %s56 = ssub.s32 %s15, %s27
    %s57 = ssub.s32 %s16, %s23
    %s58 = sor.u32 %s56, %s57
    %p59 = scmp.eq.s32.totalorder %s58, 0
    %s61 = sadd.s32 %s60, 1
    %s62 = scalar_select %p59, %s60, %s61
    %p65 = pneg %p59
    %p66 = scmp.eq.s32.totalorder %s8, 1
    %p67 = por %p65, %p66
    %p68 = scmp.ne.s32.totalorder %s60, %s63
    %p69 = scmp.eq.s32.totalorder %s8, 0
    %p70 = por %p68, %p69
    %p71 = scmp.ne.s32.totalorder %s60, %s63
    %p72 = scmp.eq.s32.totalorder %s13, 1
    %p73 = por %p71, %p72
    %p74 = scmp.ne.s32.totalorder %s63, %s64
    %p75 = scmp.eq.s32.totalorder %s13, 0
    %p76 = por %p74, %p75
    %p77 = scmp.ne.s32.totalorder %s63, %s64
    %p78 = scmp.eq.s32.totalorder %s14, 1
    %p79 = por %p77, %p78
    %p81 = scmp.ne.s32.totalorder %s64, %s80
    %p82 = scmp.eq.s32.totalorder %s14, 0
    %p83 = por %p81, %p82
    %s84 = ssub.s32 %s15, %s27
    %s85 = ssub.s32 %s16, %s23
    %s86 = sor.u32 %s84, %s85
    %p87 = scmp.eq.s32.totalorder %s86, 0
    %s89 = sadd.s32 %s88, 1
    %s90 = scalar_select %p87, %s88, %s89
    %p93 = pneg %p87
    %p94 = scmp.eq.s32.totalorder %s8, 1
    %p95 = por %p93, %p94
    %p96 = scmp.ne.s32.totalorder %s88, %s91
    %p97 = scmp.eq.s32.totalorder %s8, 0
    %p98 = por %p96, %p97
    %p99 = scmp.ne.s32.totalorder %s88, %s91
    %p100 = scmp.eq.s32.totalorder %s13, 1
    %p101 = por %p99, %p100
    %p102 = scmp.ne.s32.totalorder %s91, %s92
    %p103 = scmp.eq.s32.totalorder %s13, 0
    %p104 = por %p102, %p103
    %p105 = scmp.ne.s32.totalorder %s91, %s92
    %p106 = scmp.eq.s32.totalorder %s14, 1
    %p107 = por %p105, %p106
    %p109 = scmp.ne.s32.totalorder %s92, %s108
    %p110 = scmp.eq.s32.totalorder %s14, 0
    %p111 = por %p109, %p110
    %p112 = scmp.le.s32.totalorder 1, %s8
    %p113 = scmp.lt.s32.totalorder %s8, 3
    %p114 = pnand %p112, %p113
    %p115 = pneg %p114
    // Predicated region
    $region9: #{run.6} parent=5 // pred_check
      _
    $region10: #{run.6} parent=5 // pred_check_branch
      %117 = sbr.rel (%p114) target = $region12
    $region11: #{run.6} parent=5 // pred_region
      %s118 = ssub.s32 %s8, 1
    $region12: #{run.6} parent=5 // pred_fallthru
      _
    %p119 = scmp.lt.s32.totalorder %s8, 2
    // Predicated region
    $region13: #{run.6} parent=5 // pred_check
      %p120 = pneg %p119
    $region14: #{run.6} parent=5 // pred_check_branch
      %122 = sbr.rel (%p120) target = $region16
    $region15: #{run.6} parent=5 // pred_region
      // Predicated region
      $region17: #{run.6} parent=15 // pred_check
        %p123 = pneg %p42
      $region18: #{run.6} parent=15 // pred_check_branch
        %125 = sbr.rel (%p123) target = $region20
      $region19: #{run.6} parent=15 // pred_region
        %s126 = smul.u32 2, %s16
        %p127 = scmp.lt.s32.totalorder %s15, 1
        %s128 = scalar_select %p127, %s15, 1
        %p129 = scmp.lt.s32.totalorder %s126, 1
        %s130 = scalar_select %p129, %s126, 1
        %s131 = smul.addr %s128, 2
        %s132 = sadd.s32 %s130, %s131
        %s133 = smul.addr %s132, 8
        %s134 = scalar_lea.vmem %s0, %s133
        %s135 = smul.u32 2, %s16
      $region20: #{run.6} parent=15 // pred_fallthru
        _
      // Predicated region
      $region21: #{run.6} parent=15 // pred_check
        %p136 = pneg %p70
      $region22: #{run.6} parent=15 // pred_check_branch
        %138 = sbr.rel (%p136) target = $region24
      $region23: #{run.6} parent=15 // pred_region
        %s139 = smul.u32 2, %s16
        %p140 = scmp.lt.s32.totalorder %s15, 1
        %s141 = scalar_select %p140, %s15, 1
        %p142 = scmp.lt.s32.totalorder %s139, 1
        %s143 = scalar_select %p142, %s139, 1
        %s144 = smul.addr %s141, 2
        %s145 = sadd.s32 %s143, %s144
        %s146 = smul.addr %s145, 8
        %s147 = scalar_lea.vmem %s1, %s146
        %s148 = smul.u32 2, %s16
      $region24: #{run.6} parent=15 // pred_fallthru
        _
    $region16: #{run.6} parent=5 // pred_fallthru
      _
    %p149 = scmp.le.s32.totalorder 1, %s8
    %p150 = scmp.lt.s32.totalorder %s8, 3
    %p151 = pnand %p149, %p150
    %p152 = pneg %p151
    // Predicated region
    $region25: #{run.6} parent=5 // pred_check
      _
    $region26: #{run.6} parent=5 // pred_check_branch
      %154 = sbr.rel (%p151) target = $region28
    $region27: #{run.6} parent=5 // pred_region
      %s155 = ssub.s32 %s8, 1
      %s156 = smul.u32 2, %s18
      %p157 = scmp.lt.s32.totalorder %s17, 1
      %s158 = scalar_select %p157, %s17, 1
      %p159 = scmp.lt.s32.totalorder %s156, 1
      %s160 = scalar_select %p159, %s156, 1
      %s161 = smul.addr %s158, 2
      %s162 = sadd.s32 %s160, %s161
      %s163 = smul.addr %s162, 8
      %s164 = scalar_lea.vmem %s0, %s163
      %p165 = pneg %p48
      %p166 = pneg %p45
      %s167 = smul.u32 2, %s18
      %p168 = scmp.lt.s32.totalorder %s17, 1
      %s169 = scalar_select %p168, %s17, 1
      %p170 = scmp.lt.s32.totalorder %s167, 1
      %s171 = scalar_select %p170, %s167, 1
      %s172 = smul.addr %s169, 2
      %s173 = sadd.s32 %s171, %s172
      %s174 = smul.addr %s173, 8
      %s175 = scalar_lea.vmem %s1, %s174
      %p176 = pneg %p76
      %p177 = pneg %p73
      %p178 = pneg %p104
      %p179 = pneg %p101
      %p180 = scmp.lt.s32.totalorder %s17, 1
      %s181 = scalar_select %p180, %s17, 1
      %p182 = scmp.lt.s32.totalorder %s18, 0
      %s183 = scalar_select %p182, %s18, 0
      %s184 = sadd.s32 %s183, %s181
      %s185 = scalar_lea.vmem %s2, %s184
      %s186 = smul.u32 2, %s18
      %p187 = scmp.lt.s32.totalorder %s17, 1
      %s188 = scalar_select %p187, %s17, 1
      %p189 = scmp.lt.s32.totalorder %s186, 1
      %s190 = scalar_select %p189, %s186, 1
      %s191 = smul.addr %s188, 2
      %s192 = sadd.s32 %s190, %s191
      %s193 = smul.addr %s192, 8
      %s194 = scalar_lea.vmem %s0, %s193
      %s195 = smul.u32 2, %s18
      %s196 = smul.u32 2, %s18
      %p197 = scmp.lt.s32.totalorder %s17, 1
      %s198 = scalar_select %p197, %s17, 1
      %p199 = scmp.lt.s32.totalorder %s196, 1
      %s200 = scalar_select %p199, %s196, 1
      %s201 = smul.addr %s198, 2
      %s202 = sadd.s32 %s200, %s201
      %s203 = smul.addr %s202, 8
      %s204 = scalar_lea.vmem %s1, %s203
      %s205 = smul.u32 2, %s18
      %p206 = scmp.lt.s32.totalorder %s17, 1
      %s207 = scalar_select %p206, %s17, 1
      %p208 = scmp.lt.s32.totalorder %s18, 0
      %s209 = scalar_select %p208, %s18, 0
      %s210 = sadd.s32 %s209, %s207
      %s211 = scalar_lea.vmem %s2, %s210
      %v212 = vld [vmem:[%s194] sm:$0xff]
      %v213 = vld [vmem:[%s194 + $0x8] sm:$0xff]
      %v214 = vld [vmem:[%s204] sm:$0xff]
      %v215 = vld [vmem:[%s204 + $0x8] sm:$0xff]
      %v216 = vsub.f32 %v212, %v214
      %v217 = vsub.f32 %v213, %v215
      %v218 = vand.u32 2147483647, %v216
      %v219 = vand.u32 2147483647, %v217
      %vm220 = vcmask 130048
      %v221 = vsel %vm220, %v218, -inf
      %v222 = vsel %vm220, %v219, -inf
      %v223 = vmax.f32 %v221, %v222
      %224 = vmax.xlane.f32.xlu0 %v223
      %v225 = vpop.xlane.xlu0 %224
      %v226 = vrot.slane %v225, 4
      %v227 = vmax.f32 %v225, %v226
      %v228 = vrot.slane %v227, 2
      %v229 = vmax.f32 %v227, %v228
      %v230 = vrot.slane %v229, 1
      %v231 = vmax.f32 %v229, %v230
      %s232 = vtos %v231
      %v233 = vstv %s232
      %vm234 = vcmask 0
      %235 = vst.msk [vmem:[%s211] sm:$0x1] %vm234, %v233
      %p236 = scmp.lt.s32.totalorder %s17, 1
      %s237 = scalar_select %p236, %s17, 1
      %p238 = scmp.lt.s32.totalorder %s18, 0
      %s239 = scalar_select %p238, %s18, 0
      %s240 = sadd.s32 %s239, %s237
      %s241 = scalar_lea.vmem %s2, %s240
      // Predicated region
      $region29: #{run.6} parent=27 // pred_check
        %p242 = pneg %p101
      $region30: #{run.6} parent=27 // pred_check_branch
        %244 = sbr.rel (%p242) target = $region32
      $region31: #{run.6} parent=27 // pred_region
        _
      $region32: #{run.6} parent=27 // pred_fallthru
        _
    $region28: #{run.6} parent=5 // pred_fallthru
      _
    %p245 = scmp.le.s32.totalorder 2, %s8
    // Predicated region
    $region33: #{run.6} parent=5 // pred_check
      %p246 = pneg %p245
    $region34: #{run.6} parent=5 // pred_check_branch
      %248 = sbr.rel (%p246) target = $region36
    $region35: #{run.6} parent=5 // pred_region
      %s249 = ssub.s32 %s8, 2
      // Predicated region
      $region37: #{run.6} parent=35 // pred_check
        %p250 = pneg %p107
      $region38: #{run.6} parent=35 // pred_check_branch
        %252 = sbr.rel (%p250) target = $region40
      $region39: #{run.6} parent=35 // pred_region
        %p253 = scmp.lt.s32.totalorder %s19, 1
        %s254 = scalar_select %p253, %s19, 1
        %p255 = scmp.lt.s32.totalorder %s20, 0
        %s256 = scalar_select %p255, %s20, 0
        %s257 = sadd.s32 %s256, %s254
        %s258 = scalar_lea.vmem %s2, %s257
      $region40: #{run.6} parent=35 // pred_fallthru
        _
    $region36: #{run.6} parent=5 // pred_fallthru
      _
  $region6: #{run.6} parent=0 // loop_footer
    %s12 = sadd.s32 1, %s8
  $region7: #{run.6} parent=0 // loop_footer_branch
    %7 = sbr.rel target = $region3
  $region8: #{run.6} parent=0 // loop_exit
    _

// kernel: run.9
$region0: #{run.9}
  #allocation0 [shape = 'u32[]', space=smem, size = 0x4, offset = 0x4, fixed_abs, tag = 'smem constant byte address 0x4 - core index']
  #allocation1 [shape = 'u32[144,128]{1,0:T(1,128)}', space=vmem, size = 0x12000, scoped, tag = 'internal scratch']
  #allocation2 [shape = 'f32[1,1]{1,0:T(1,128)S(6)}', space=smem, size = 0x200, scoped, tag = 'scoped memory for run.9']
  %s0 = inlined_call_operand.<no memory space> [shape: f32[1,1], index: 0, kind: input, shape index: {}]
  %s1 = inlined_call_operand.vmem [shape: f32[2,8,8], index: 1, kind: input, shape index: {}]
  %s2 = inlined_call_operand.vmem [shape: f32[2,8,8], index: 2, kind: input, shape index: {}]
  %s3 = inlined_call_operand.vmem [shape: f32[2,8,8], index: 3, kind: input, shape index: {}]
  %s4 = inlined_call_operand.vmem [shape: f32[2,8,8], index: 4, kind: input, shape index: {}]
  %s5 = inlined_call_operand.vmem [shape: f32[2,1,1,1], index: 5, kind: output, shape index: {0}]
  %s6 = inlined_call_operand.vmem [shape: f32[2,1,1,1], index: 6, kind: output, shape index: {1}]
  %s7 = inlined_call_operand.vmem [shape: f32[2,1,1,1], index: 7, kind: output, shape index: {2}]
  %s8 = inlined_call_operand.vmem [shape: f32[2,1,1,1], index: 8, kind: output, shape index: {3}]
  %9 = xla_tuple %s5, %s6, %s7, %s8
  %s10 = sld [smem:[#allocation0]]
  $region77: #{run.9} parent=0
    _
  %s12 = ssub.s32 1, %s10
  %s13 = scalar_select 0, %s12, %s10
  %14 = sst [smem:[#allocation2]] %s0
  loop: start=0, step=1, limit=4
  $region2: #{run.9} parent=0 // loop_pre_header
    _
  $region3: #{run.9} parent=0 // loop_header
    %s16 = sphi 0, %s20
    %p17 = scmp.ge.s32.totalorder %s16, 4
    %s23 = sphi 0, %s35
    %s24 = sphi 0, %s31
    %s25 = sphi 0, %s23
    %s26 = sphi 0, %s24
    %s27 = sphi 0, %s25
    %s28 = sphi 0, %s26
    %s36 = sphi 0, %s36
    %s38 = sphi 0, %s36
    %s39 = sphi 0, %s38
    %s53 = sphi 0, %s39
    %s61 = sphi 0, %s63
    %s64 = sphi 0, %s61
    %s65 = sphi 0, %s64
    %s81 = sphi 0, %s65
    %s89 = sphi 0, %s91
    %s92 = sphi 0, %s89
    %s93 = sphi 0, %s92
    %s109 = sphi 0, %s93
    %s117 = sphi 0, %s119
    %s120 = sphi 0, %s117
    %s121 = sphi 0, %s120
    %s137 = sphi 0, %s121
    %s145 = sphi 0, %s147
    %s148 = sphi 0, %s145
    %s149 = sphi 0, %s148
    %s165 = sphi 0, %s149
    %s173 = sphi 0, %s175
    %s176 = sphi 0, %s173
    %s177 = sphi 0, %s176
    %s193 = sphi 0, %s177
    %s201 = sphi 0, %s203
    %s204 = sphi 0, %s201
    %s205 = sphi 0, %s204
    %s221 = sphi 0, %s205
    %s229 = sphi 0, %s231
    %s232 = sphi 0, %s229
    %s233 = sphi 0, %s232
    %s249 = sphi 0, %s233
    %s257 = sphi 0, %s259
    %s260 = sphi 0, %s257
    %s261 = sphi 0, %s260
    %s277 = sphi 0, %s261
  $region4: #{run.9} parent=0 // loop_header_branch
    %19 = sbr.rel (%p17) target = $region8
  $region5: #{run.9} parent=0 // loop_body
    %s21 = ssub.s32 %s16, 1
    %s22 = ssub.s32 %s16, 2
    %s29 = sadd.s32 1, %s24
    %p30 = scmp.ge.s32.totalorder %s29, 1
    %s31 = scalar_select %p30, 0, %s29
    %s32 = sadd.s32 1, %s23
    %s33 = scalar_select %p30, %s32, %s23
    %p34 = scmp.ge.s32.totalorder %s33, 2
    %s35 = scalar_select %p34, 0, %s33
    %s37 = sadd.s32 %s36, 1
    %p40 = scmp.eq.s32.totalorder %s16, 1
    %p41 = scmp.ne.s32.totalorder %s36, %s38
    %p42 = scmp.eq.s32.totalorder %s16, 0
    %p43 = por %p41, %p42
    %p44 = scmp.ne.s32.totalorder %s36, %s38
    %p45 = scmp.eq.s32.totalorder %s21, 1
    %p46 = por %p44, %p45
    %p47 = scmp.ne.s32.totalorder %s38, %s39
    %p48 = scmp.eq.s32.totalorder %s21, 0
    %p49 = por %p47, %p48
    %p50 = scmp.ne.s32.totalorder %s38, %s39
    %p51 = scmp.eq.s32.totalorder %s22, 1
    %p52 = por %p50, %p51
    %p54 = scmp.ne.s32.totalorder %s39, %s53
    %p55 = scmp.eq.s32.totalorder %s22, 0
    %p56 = por %p54, %p55
    %s57 = ssub.s32 %s23, %s35
    %s58 = ssub.s32 %s24, %s31
    %s59 = sor.u32 %s57, %s58
    %p60 = scmp.eq.s32.totalorder %s59, 0
    %s62 = sadd.s32 %s61, 1
    %s63 = scalar_select %p60, %s61, %s62
    %p66 = pneg %p60
    %p67 = scmp.eq.s32.totalorder %s16, 1
    %p68 = por %p66, %p67
    %p69 = scmp.ne.s32.totalorder %s61, %s64
    %p70 = scmp.eq.s32.totalorder %s16, 0
    %p71 = por %p69, %p70
    %p72 = scmp.ne.s32.totalorder %s61, %s64
    %p73 = scmp.eq.s32.totalorder %s21, 1
    %p74 = por %p72, %p73
    %p75 = scmp.ne.s32.totalorder %s64, %s65
    %p76 = scmp.eq.s32.totalorder %s21, 0
    %p77 = por %p75, %p76
    %p78 = scmp.ne.s32.totalorder %s64, %s65
    %p79 = scmp.eq.s32.totalorder %s22, 1
    %p80 = por %p78, %p79
    %p82 = scmp.ne.s32.totalorder %s65, %s81
    %p83 = scmp.eq.s32.totalorder %s22, 0
    %p84 = por %p82, %p83
    %s85 = ssub.s32 %s23, %s35
    %s86 = ssub.s32 %s24, %s31
    %s87 = sor.u32 %s85, %s86
    %p88 = scmp.eq.s32.totalorder %s87, 0
    %s90 = sadd.s32 %s89, 1
    %s91 = scalar_select %p88, %s89, %s90
    %p94 = pneg %p88
    %p95 = scmp.eq.s32.totalorder %s16, 1
    %p96 = por %p94, %p95
    %p97 = scmp.ne.s32.totalorder %s89, %s92
    %p98 = scmp.eq.s32.totalorder %s16, 0
    %p99 = por %p97, %p98
    %p100 = scmp.ne.s32.totalorder %s89, %s92
    %p101 = scmp.eq.s32.totalorder %s21, 1
    %p102 = por %p100, %p101
    %p103 = scmp.ne.s32.totalorder %s92, %s93
    %p104 = scmp.eq.s32.totalorder %s21, 0
    %p105 = por %p103, %p104
    %p106 = scmp.ne.s32.totalorder %s92, %s93
    %p107 = scmp.eq.s32.totalorder %s22, 1
    %p108 = por %p106, %p107
    %p110 = scmp.ne.s32.totalorder %s93, %s109
    %p111 = scmp.eq.s32.totalorder %s22, 0
    %p112 = por %p110, %p111
    %s113 = ssub.s32 %s23, %s35
    %s114 = ssub.s32 %s24, %s31
    %s115 = sor.u32 %s113, %s114
    %p116 = scmp.eq.s32.totalorder %s115, 0
    %s118 = sadd.s32 %s117, 1
    %s119 = scalar_select %p116, %s117, %s118
    %p122 = pneg %p116
    %p123 = scmp.eq.s32.totalorder %s16, 1
    %p124 = por %p122, %p123
    %p125 = scmp.ne.s32.totalorder %s117, %s120
    %p126 = scmp.eq.s32.totalorder %s16, 0
    %p127 = por %p125, %p126
    %p128 = scmp.ne.s32.totalorder %s117, %s120
    %p129 = scmp.eq.s32.totalorder %s21, 1
    %p130 = por %p128, %p129
    %p131 = scmp.ne.s32.totalorder %s120, %s121
    %p132 = scmp.eq.s32.totalorder %s21, 0
    %p133 = por %p131, %p132
    %p134 = scmp.ne.s32.totalorder %s120, %s121
    %p135 = scmp.eq.s32.totalorder %s22, 1
    %p136 = por %p134, %p135
    %p138 = scmp.ne.s32.totalorder %s121, %s137
    %p139 = scmp.eq.s32.totalorder %s22, 0
    %p140 = por %p138, %p139
    %s141 = ssub.s32 %s23, %s35
    %s142 = ssub.s32 %s24, %s31
    %s143 = sor.u32 %s141, %s142
    %p144 = scmp.eq.s32.totalorder %s143, 0
    %s146 = sadd.s32 %s145, 1
    %s147 = scalar_select %p144, %s145, %s146
    %p150 = pneg %p144
    %p151 = scmp.eq.s32.totalorder %s16, 1
    %p152 = por %p150, %p151
    %p153 = scmp.ne.s32.totalorder %s145, %s148
    %p154 = scmp.eq.s32.totalorder %s16, 0
    %p155 = por %p153, %p154
    %p156 = scmp.ne.s32.totalorder %s145, %s148
    %p157 = scmp.eq.s32.totalorder %s21, 1
    %p158 = por %p156, %p157
    %p159 = scmp.ne.s32.totalorder %s148, %s149
    %p160 = scmp.eq.s32.totalorder %s21, 0
    %p161 = por %p159, %p160
    %p162 = scmp.ne.s32.totalorder %s148, %s149
    %p163 = scmp.eq.s32.totalorder %s22, 1
    %p164 = por %p162, %p163
    %p166 = scmp.ne.s32.totalorder %s149, %s165
    %p167 = scmp.eq.s32.totalorder %s22, 0
    %p168 = por %p166, %p167
    %s169 = ssub.s32 %s23, %s35
    %s170 = ssub.s32 %s24, %s31
    %s171 = sor.u32 %s169, %s170
    %p172 = scmp.eq.s32.totalorder %s171, 0
    %s174 = sadd.s32 %s173, 1
    %s175 = scalar_select %p172, %s173, %s174
    %p178 = pneg %p172
    %p179 = scmp.eq.s32.totalorder %s16, 1
    %p180 = por %p178, %p179
    %p181 = scmp.ne.s32.totalorder %s173, %s176
    %p182 = scmp.eq.s32.totalorder %s16, 0
    %p183 = por %p181, %p182
    %p184 = scmp.ne.s32.totalorder %s173, %s176
    %p185 = scmp.eq.s32.totalorder %s21, 1
    %p186 = por %p184, %p185
    %p187 = scmp.ne.s32.totalorder %s176, %s177
    %p188 = scmp.eq.s32.totalorder %s21, 0
    %p189 = por %p187, %p188
    %p190 = scmp.ne.s32.totalorder %s176, %s177
    %p191 = scmp.eq.s32.totalorder %s22, 1
    %p192 = por %p190, %p191
    %p194 = scmp.ne.s32.totalorder %s177, %s193
    %p195 = scmp.eq.s32.totalorder %s22, 0
    %p196 = por %p194, %p195
    %s197 = ssub.s32 %s23, %s35
    %s198 = ssub.s32 %s24, %s31
    %s199 = sor.u32 %s197, %s198
    %p200 = scmp.eq.s32.totalorder %s199, 0
    %s202 = sadd.s32 %s201, 1
    %s203 = scalar_select %p200, %s201, %s202
    %p206 = pneg %p200
    %p207 = scmp.eq.s32.totalorder %s16, 1
    %p208 = por %p206, %p207
    %p209 = scmp.ne.s32.totalorder %s201, %s204
    %p210 = scmp.eq.s32.totalorder %s16, 0
    %p211 = por %p209, %p210
    %p212 = scmp.ne.s32.totalorder %s201, %s204
    %p213 = scmp.eq.s32.totalorder %s21, 1
    %p214 = por %p212, %p213
    %p215 = scmp.ne.s32.totalorder %s204, %s205
    %p216 = scmp.eq.s32.totalorder %s21, 0
    %p217 = por %p215, %p216
    %p218 = scmp.ne.s32.totalorder %s204, %s205
    %p219 = scmp.eq.s32.totalorder %s22, 1
    %p220 = por %p218, %p219
    %p222 = scmp.ne.s32.totalorder %s205, %s221
    %p223 = scmp.eq.s32.totalorder %s22, 0
    %p224 = por %p222, %p223
    %s225 = ssub.s32 %s23, %s35
    %s226 = ssub.s32 %s24, %s31
    %s227 = sor.u32 %s225, %s226
    %p228 = scmp.eq.s32.totalorder %s227, 0
    %s230 = sadd.s32 %s229, 1
    %s231 = scalar_select %p228, %s229, %s230
    %p234 = pneg %p228
    %p235 = scmp.eq.s32.totalorder %s16, 1
    %p236 = por %p234, %p235
    %p237 = scmp.ne.s32.totalorder %s229, %s232
    %p238 = scmp.eq.s32.totalorder %s16, 0
    %p239 = por %p237, %p238
    %p240 = scmp.ne.s32.totalorder %s229, %s232
    %p241 = scmp.eq.s32.totalorder %s21, 1
    %p242 = por %p240, %p241
    %p243 = scmp.ne.s32.totalorder %s232, %s233
    %p244 = scmp.eq.s32.totalorder %s21, 0
    %p245 = por %p243, %p244
    %p246 = scmp.ne.s32.totalorder %s232, %s233
    %p247 = scmp.eq.s32.totalorder %s22, 1
    %p248 = por %p246, %p247
    %p250 = scmp.ne.s32.totalorder %s233, %s249
    %p251 = scmp.eq.s32.totalorder %s22, 0
    %p252 = por %p250, %p251
    %s253 = ssub.s32 %s23, %s35
    %s254 = ssub.s32 %s24, %s31
    %s255 = sor.u32 %s253, %s254
    %p256 = scmp.eq.s32.totalorder %s255, 0
    %s258 = sadd.s32 %s257, 1
    %s259 = scalar_select %p256, %s257, %s258
    %p262 = pneg %p256
    %p263 = scmp.eq.s32.totalorder %s16, 1
    %p264 = por %p262, %p263
    %p265 = scmp.ne.s32.totalorder %s257, %s260
    %p266 = scmp.eq.s32.totalorder %s16, 0
    %p267 = por %p265, %p266
    %p268 = scmp.ne.s32.totalorder %s257, %s260
    %p269 = scmp.eq.s32.totalorder %s21, 1
    %p270 = por %p268, %p269
    %p271 = scmp.ne.s32.totalorder %s260, %s261
    %p272 = scmp.eq.s32.totalorder %s21, 0
    %p273 = por %p271, %p272
    %p274 = scmp.ne.s32.totalorder %s260, %s261
    %p275 = scmp.eq.s32.totalorder %s22, 1
    %p276 = por %p274, %p275
    %p278 = scmp.ne.s32.totalorder %s261, %s277
    %p279 = scmp.eq.s32.totalorder %s22, 0
    %p280 = por %p278, %p279
    %p281 = scmp.le.s32.totalorder 1, %s16
    %p282 = scmp.lt.s32.totalorder %s16, 3
    %p283 = pnand %p281, %p282
    %p284 = pneg %p283
    // Predicated region
    $region9: #{run.9} parent=5 // pred_check
      _
    $region10: #{run.9} parent=5 // pred_check_branch
      %286 = sbr.rel (%p283) target = $region12
    $region11: #{run.9} parent=5 // pred_region
      %s287 = ssub.s32 %s16, 1
      // Predicated region
      $region13: #{run.9} parent=11 // pred_check
        %p288 = pneg %p49
      $region14: #{run.9} parent=11 // pred_check_branch
        %290 = sbr.rel (%p288) target = $region16
      $region15: #{run.9} parent=11 // pred_region
        _
      $region16: #{run.9} parent=11 // pred_fallthru
        _
    $region12: #{run.9} parent=5 // pred_fallthru
      _
    %p291 = scmp.lt.s32.totalorder %s16, 2
    // Predicated region
    $region17: #{run.9} parent=5 // pred_check
      %p292 = pneg %p291
    $region18: #{run.9} parent=5 // pred_check_branch
      %294 = sbr.rel (%p292) target = $region20
    $region19: #{run.9} parent=5 // pred_region
      // Predicated region
      $region21: #{run.9} parent=19 // pred_check
        %p295 = pneg %p71
      $region22: #{run.9} parent=19 // pred_check_branch
        %297 = sbr.rel (%p295) target = $region24
      $region23: #{run.9} parent=19 // pred_region
        %p298 = scmp.lt.s32.totalorder %s23, 1
        %s299 = scalar_select %p298, %s23, 1
        %p300 = scmp.lt.s32.totalorder %s24, 0
        %s301 = scalar_select %p300, %s24, 0
        %s302 = sadd.s32 %s301, %s299
        %s303 = smul.addr %s302, 8
        %s304 = scalar_lea.vmem %s1, %s303
      $region24: #{run.9} parent=19 // pred_fallthru
        _
      // Predicated region
      $region25: #{run.9} parent=19 // pred_check
        %p305 = pneg %p99
      $region26: #{run.9} parent=19 // pred_check_branch
        %307 = sbr.rel (%p305) target = $region28
      $region27: #{run.9} parent=19 // pred_region
        %p308 = scmp.lt.s32.totalorder %s23, 1
        %s309 = scalar_select %p308, %s23, 1
        %p310 = scmp.lt.s32.totalorder %s24, 0
        %s311 = scalar_select %p310, %s24, 0
        %s312 = sadd.s32 %s311, %s309
        %s313 = smul.addr %s312, 8
        %s314 = scalar_lea.vmem %s2, %s313
      $region28: #{run.9} parent=19 // pred_fallthru
        _
      // Predicated region
      $region29: #{run.9} parent=19 // pred_check
        %p315 = pneg %p127
      $region30: #{run.9} parent=19 // pred_check_branch
        %317 = sbr.rel (%p315) target = $region32
      $region31: #{run.9} parent=19 // pred_region
        %p318 = scmp.lt.s32.totalorder %s23, 1
        %s319 = scalar_select %p318, %s23, 1
        %p320 = scmp.lt.s32.totalorder %s24, 0
        %s321 = scalar_select %p320, %s24, 0
        %s322 = sadd.s32 %s321, %s319
        %s323 = smul.addr %s322, 8
        %s324 = scalar_lea.vmem %s3, %s323
      $region32: #{run.9} parent=19 // pred_fallthru
        _
      // Predicated region
      $region33: #{run.9} parent=19 // pred_check
        %p325 = pneg %p155
      $region34: #{run.9} parent=19 // pred_check_branch
        %327 = sbr.rel (%p325) target = $region36
      $region35: #{run.9} parent=19 // pred_region
        %p328 = scmp.lt.s32.totalorder %s23, 1
        %s329 = scalar_select %p328, %s23, 1
        %p330 = scmp.lt.s32.totalorder %s24, 0
        %s331 = scalar_select %p330, %s24, 0
        %s332 = sadd.s32 %s331, %s329
        %s333 = smul.addr %s332, 8
        %s334 = scalar_lea.vmem %s4, %s333
      $region36: #{run.9} parent=19 // pred_fallthru
        _
    $region20: #{run.9} parent=5 // pred_fallthru
      _
    %p335 = scmp.le.s32.totalorder 1, %s16
    %p336 = scmp.lt.s32.totalorder %s16, 3
    %p337 = pnand %p335, %p336
    %p338 = pneg %p337
    // Predicated region
    $region37: #{run.9} parent=5 // pred_check
      _
    $region38: #{run.9} parent=5 // pred_check_branch
      %340 = sbr.rel (%p337) target = $region40
    $region39: #{run.9} parent=5 // pred_region
      %s341 = ssub.s32 %s16, 1
      %p342 = pneg %p49
      %p343 = pneg %p46
      %p344 = scmp.lt.s32.totalorder %s25, 1
      %s345 = scalar_select %p344, %s25, 1
      %p346 = scmp.lt.s32.totalorder %s26, 0
      %s347 = scalar_select %p346, %s26, 0
      %s348 = sadd.s32 %s347, %s345
      %s349 = smul.addr %s348, 8
      %s350 = scalar_lea.vmem %s1, %s349
      %p351 = pneg %p77
      %p352 = pneg %p74
      %p353 = scmp.lt.s32.totalorder %s25, 1
      %s354 = scalar_select %p353, %s25, 1
      %p355 = scmp.lt.s32.totalorder %s26, 0
      %s356 = scalar_select %p355, %s26, 0
      %s357 = sadd.s32 %s356, %s354
      %s358 = smul.addr %s357, 8
      %s359 = scalar_lea.vmem %s2, %s358
      %p360 = pneg %p105
      %p361 = pneg %p102
      %p362 = scmp.lt.s32.totalorder %s25, 1
      %s363 = scalar_select %p362, %s25, 1
      %p364 = scmp.lt.s32.totalorder %s26, 0
      %s365 = scalar_select %p364, %s26, 0
      %s366 = sadd.s32 %s365, %s363
      %s367 = smul.addr %s366, 8
      %s368 = scalar_lea.vmem %s3, %s367
      %p369 = pneg %p133
      %p370 = pneg %p130
      %p371 = scmp.lt.s32.totalorder %s25, 1
      %s372 = scalar_select %p371, %s25, 1
      %p373 = scmp.lt.s32.totalorder %s26, 0
      %s374 = scalar_select %p373, %s26, 0
      %s375 = sadd.s32 %s374, %s372
      %s376 = smul.addr %s375, 8
      %s377 = scalar_lea.vmem %s4, %s376
      %p378 = pneg %p161
      %p379 = pneg %p158
      %p380 = pneg %p189
      %p381 = pneg %p186
      %p382 = scmp.lt.s32.totalorder %s25, 1
      %s383 = scalar_select %p382, %s25, 1
      %p384 = scmp.lt.s32.totalorder %s26, 0
      %s385 = scalar_select %p384, %s26, 0
      %s386 = sadd.s32 %s385, %s383
      %s387 = scalar_lea.vmem %s5, %s386
      %p388 = pneg %p217
      %p389 = pneg %p214
      %p390 = scmp.lt.s32.totalorder %s25, 1
      %s391 = scalar_select %p390, %s25, 1
      %p392 = scmp.lt.s32.totalorder %s26, 0
      %s393 = scalar_select %p392, %s26, 0
      %s394 = sadd.s32 %s393, %s391
      %s395 = scalar_lea.vmem %s6, %s394
      %p396 = pneg %p245
      %p397 = pneg %p242
      %p398 = scmp.lt.s32.totalorder %s25, 1
      %s399 = scalar_select %p398, %s25, 1
      %p400 = scmp.lt.s32.totalorder %s26, 0
      %s401 = scalar_select %p400, %s26, 0
      %s402 = sadd.s32 %s401, %s399
      %s403 = scalar_lea.vmem %s7, %s402
      %p404 = pneg %p273
      %p405 = pneg %p270
      %p406 = scmp.lt.s32.totalorder %s25, 1
      %s407 = scalar_select %p406, %s25, 1
      %p408 = scmp.lt.s32.totalorder %s26, 0
      %s409 = scalar_select %p408, %s26, 0
      %s410 = sadd.s32 %s409, %s407
      %s411 = scalar_lea.vmem %s8, %s410
      %p412 = scmp.lt.s32.totalorder %s25, 1
      %s413 = scalar_select %p412, %s25, 1
      %p414 = scmp.lt.s32.totalorder %s26, 0
      %s415 = scalar_select %p414, %s26, 0
      %s416 = sadd.s32 %s415, %s413
      %s417 = smul.addr %s416, 8
      %s418 = scalar_lea.vmem %s1, %s417
      %p419 = scmp.lt.s32.totalorder %s25, 1
      %s420 = scalar_select %p419, %s25, 1
      %p421 = scmp.lt.s32.totalorder %s26, 0
      %s422 = scalar_select %p421, %s26, 0
      %s423 = sadd.s32 %s422, %s420
      %s424 = smul.addr %s423, 8
      %s425 = scalar_lea.vmem %s2, %s424
      %p426 = scmp.lt.s32.totalorder %s25, 1
      %s427 = scalar_select %p426, %s25, 1
      %p428 = scmp.lt.s32.totalorder %s26, 0
      %s429 = scalar_select %p428, %s26, 0
      %s430 = sadd.s32 %s429, %s427
      %s431 = smul.addr %s430, 8
      %s432 = scalar_lea.vmem %s3, %s431
      %p433 = scmp.lt.s32.totalorder %s25, 1
      %s434 = scalar_select %p433, %s25, 1
      %p435 = scmp.lt.s32.totalorder %s26, 0
      %s436 = scalar_select %p435, %s26, 0
      %s437 = sadd.s32 %s436, %s434
      %s438 = smul.addr %s437, 8
      %s439 = scalar_lea.vmem %s4, %s438
      %p440 = scmp.lt.s32.totalorder %s25, 1
      %s441 = scalar_select %p440, %s25, 1
      %p442 = scmp.lt.s32.totalorder %s26, 0
      %s443 = scalar_select %p442, %s26, 0
      %s444 = sadd.s32 %s443, %s441
      %s445 = scalar_lea.vmem %s5, %s444
      %p446 = scmp.lt.s32.totalorder %s25, 1
      %s447 = scalar_select %p446, %s25, 1
      %p448 = scmp.lt.s32.totalorder %s26, 0
      %s449 = scalar_select %p448, %s26, 0
      %s450 = sadd.s32 %s449, %s447
      %s451 = scalar_lea.vmem %s6, %s450
      %p452 = scmp.lt.s32.totalorder %s25, 1
      %s453 = scalar_select %p452, %s25, 1
      %p454 = scmp.lt.s32.totalorder %s26, 0
      %s455 = scalar_select %p454, %s26, 0
      %s456 = sadd.s32 %s455, %s453
      %s457 = scalar_lea.vmem %s7, %s456
      %p458 = scmp.lt.s32.totalorder %s25, 1
      %s459 = scalar_select %p458, %s25, 1
      %p460 = scmp.lt.s32.totalorder %s26, 0
      %s461 = scalar_select %p460, %s26, 0
      %s462 = sadd.s32 %s461, %s459
      %s463 = scalar_lea.vmem %s8, %s462
      %v464 = vld [vmem:[%s418] sm:$0xff]
      %s465 = sld [smem:[#allocation2]]
      %s466 = smax.f32 %s465, 1e-12
      %v467 = vstv %s466
      %v468 = vrcp.pop %v467
      %s469 = vtos %v468
      %s470 = smul.f32 0.5, %s469
      %s471 = smul.f32 %s465, %s465
      %v472 = vld [vmem:[%s425] sm:$0xff]
      %v473 = vsub.f32 %v464, %v472
      %v474 = vand.u32 2147483647, %v473
      %v475 = vstv %s465
      %vm476 = vcmp.le.f32.partialorder %v474, %v475
      %v477 = vmul.f32 %v474, %v474
      %v478 = vstv %s471
      %v479 = vadd.f32 %v477, %v478
      %v480 = vstv %s470
      %v481 = vmul.f32 %v479, %v480
      %v482 = vsel %vm476, %v474, %v481
      %vm483 = vcmask 64512
      %v484 = vsel %vm483, %v482, 0.0
      %485 = vadd.xlane.f32.xlu0 %v484
      %v486 = vpop.xlane.xlu0 %485
      %v487 = vrot.slane %v486, 4
      %v488 = vadd.f32 %v486, %v487
      %v489 = vrot.slane %v488, 2
      %v490 = vadd.f32 %v488, %v489
      %v491 = vrot.slane %v490, 1
      %v492 = vadd.f32 %v490, %v491
      %s493 = vtos %v492
      %v494 = vstv %s493
      %vm495 = vcmask 0
      %496 = vst.msk [vmem:[%s445] sm:$0x1] %vm495, %v494
      %v497 = vld [vmem:[%s432] sm:$0xff]
      %v498 = vsub.f32 %v464, %v497
      %v499 = vmul.f32 %v498, %v498
      %v500 = vsel %vm483, %v499, 0.0
      %501 = vadd.xlane.f32.xlu0 %v500
      %v502 = vpop.xlane.xlu0 %501
      %v503 = vrot.slane %v502, 4
      %v504 = vadd.f32 %v502, %v503
      %v505 = vrot.slane %v504, 2
      %v506 = vadd.f32 %v504, %v505
      %v507 = vrot.slane %v506, 1
      %v508 = vadd.f32 %v506, %v507
      %s509 = vtos %v508
      %v510 = vstv %s509
      %511 = vst.msk [vmem:[%s451] sm:$0x1] %vm495, %v510
      %v512 = vld [vmem:[%s439] sm:$0xff]
      %514 = vrot.lane.b32.xlu0 %v512, 1
      %v515 = vpop.permute.xlu0 %514
      %v517 = vsub.f32 %v512, %v515
      %v518 = vand.u32 2147483647, %v517
      %v519 = vsub.f32 0.0, %v518
      %v520 = vmul.f32 %v519, 1.442695
      %v521 = vpow.pop %v520
      %523 = vrot.lane.b32.xlu0 %v464, 1
      %v524 = vpop.permute.xlu0 %523
      %v526 = vsub.f32 %v464, %v524
      %v527 = vand.u32 2147483647, %v526
      %v528 = vmul.f32 %v521, %v527
      %530 = vrot.lane.b32.xlu0 %v528, 127
      %v531 = vpop.permute.xlu0 %530
      %vm533 = vcmask 56320
      %v534 = vsel %vm533, %v531, 0.0
      %535 = vadd.xlane.f32.xlu0 %v534
      %v536 = vpop.xlane.xlu0 %535
      %v537 = vrot.slane %v536, 4
      %v538 = vadd.f32 %v536, %v537
      %v539 = vrot.slane %v538, 2
      %v540 = vadd.f32 %v538, %v539
      %v541 = vrot.slane %v540, 1
      %v542 = vadd.f32 %v540, %v541
      %s543 = vtos %v542
      %v544 = vstv %s543
      %545 = vst.msk [vmem:[%s457] sm:$0x1] %vm495, %v544
      %v546 = vrot.slane %v512, 7
      %v548 = vsub.f32 %v512, %v546
      %v549 = vand.u32 2147483647, %v548
      %v550 = vsub.f32 0.0, %v549
      %v551 = vmul.f32 %v550, 1.442695
      %v552 = vpow.pop %v551
      %v553 = vrot.slane %v464, 7
      %v555 = vsub.f32 %v464, %v553
      %v556 = vand.u32 2147483647, %v555
      %v557 = vmul.f32 %v552, %v556
      %v559 = vrot.slane %v557, 1
      %vm561 = vcmask 63488
      %v562 = vsel %vm561, %v559, 0.0
      %563 = vadd.xlane.f32.xlu0 %v562
      %v564 = vpop.xlane.xlu0 %563
      %v565 = vrot.slane %v564, 4
      %v566 = vadd.f32 %v564, %v565
      %v567 = vrot.slane %v566, 2
      %v568 = vadd.f32 %v566, %v567
      %v569 = vrot.slane %v568, 1
      %v570 = vadd.f32 %v568, %v569
      %s571 = vtos %v570
      %v572 = vstv %s571
      %573 = vst.msk [vmem:[%s463] sm:$0x1] %vm495, %v572
      %p574 = scmp.lt.s32.totalorder %s25, 1
      %s575 = scalar_select %p574, %s25, 1
      %p576 = scmp.lt.s32.totalorder %s26, 0
      %s577 = scalar_select %p576, %s26, 0
      %s578 = sadd.s32 %s577, %s575
      %s579 = scalar_lea.vmem %s5, %s578
      %p580 = scmp.lt.s32.totalorder %s25, 1
      %s581 = scalar_select %p580, %s25, 1
      %p582 = scmp.lt.s32.totalorder %s26, 0
      %s583 = scalar_select %p582, %s26, 0
      %s584 = sadd.s32 %s583, %s581
      %s585 = scalar_lea.vmem %s6, %s584
      %p586 = scmp.lt.s32.totalorder %s25, 1
      %s587 = scalar_select %p586, %s25, 1
      %p588 = scmp.lt.s32.totalorder %s26, 0
      %s589 = scalar_select %p588, %s26, 0
      %s590 = sadd.s32 %s589, %s587
      %s591 = scalar_lea.vmem %s7, %s590
      %p592 = scmp.lt.s32.totalorder %s25, 1
      %s593 = scalar_select %p592, %s25, 1
      %p594 = scmp.lt.s32.totalorder %s26, 0
      %s595 = scalar_select %p594, %s26, 0
      %s596 = sadd.s32 %s595, %s593
      %s597 = scalar_lea.vmem %s8, %s596
      // Predicated region
      $region41: #{run.9} parent=39 // pred_check
        %p598 = pneg %p186
      $region42: #{run.9} parent=39 // pred_check_branch
        %600 = sbr.rel (%p598) target = $region44
      $region43: #{run.9} parent=39 // pred_region
        _
      $region44: #{run.9} parent=39 // pred_fallthru
        _
      // Predicated region
      $region45: #{run.9} parent=39 // pred_check
        %p601 = pneg %p214
      $region46: #{run.9} parent=39 // pred_check_branch
        %603 = sbr.rel (%p601) target = $region48
      $region47: #{run.9} parent=39 // pred_region
        _
      $region48: #{run.9} parent=39 // pred_fallthru
        _
      // Predicated region
      $region49: #{run.9} parent=39 // pred_check
        %p604 = pneg %p242
      $region50: #{run.9} parent=39 // pred_check_branch
        %606 = sbr.rel (%p604) target = $region52
      $region51: #{run.9} parent=39 // pred_region
        _
      $region52: #{run.9} parent=39 // pred_fallthru
        _
      // Predicated region
      $region53: #{run.9} parent=39 // pred_check
        %p607 = pneg %p270
      $region54: #{run.9} parent=39 // pred_check_branch
        %609 = sbr.rel (%p607) target = $region56
      $region55: #{run.9} parent=39 // pred_region
        _
      $region56: #{run.9} parent=39 // pred_fallthru
        _
    $region40: #{run.9} parent=5 // pred_fallthru
      _
    %p610 = scmp.le.s32.totalorder 2, %s16
    // Predicated region
    $region57: #{run.9} parent=5 // pred_check
      %p611 = pneg %p610
    $region58: #{run.9} parent=5 // pred_check_branch
      %613 = sbr.rel (%p611) target = $region60
    $region59: #{run.9} parent=5 // pred_region
      %s614 = ssub.s32 %s16, 2
      // Predicated region
      $region61: #{run.9} parent=59 // pred_check
        %p615 = pneg %p192
      $region62: #{run.9} parent=59 // pred_check_branch
        %617 = sbr.rel (%p615) target = $region64
      $region63: #{run.9} parent=59 // pred_region
        %p618 = scmp.lt.s32.totalorder %s27, 1
        %s619 = scalar_select %p618, %s27, 1
        %p620 = scmp.lt.s32.totalorder %s28, 0
        %s621 = scalar_select %p620, %s28, 0
        %s622 = sadd.s32 %s621, %s619
        %s623 = scalar_lea.vmem %s5, %s622
      $region64: #{run.9} parent=59 // pred_fallthru
        _
      // Predicated region
      $region65: #{run.9} parent=59 // pred_check
        %p624 = pneg %p220
      $region66: #{run.9} parent=59 // pred_check_branch
        %626 = sbr.rel (%p624) target = $region68
      $region67: #{run.9} parent=59 // pred_region
        %p627 = scmp.lt.s32.totalorder %s27, 1
        %s628 = scalar_select %p627, %s27, 1
        %p629 = scmp.lt.s32.totalorder %s28, 0
        %s630 = scalar_select %p629, %s28, 0
        %s631 = sadd.s32 %s630, %s628
        %s632 = scalar_lea.vmem %s6, %s631
      $region68: #{run.9} parent=59 // pred_fallthru
        _
      // Predicated region
      $region69: #{run.9} parent=59 // pred_check
        %p633 = pneg %p248
      $region70: #{run.9} parent=59 // pred_check_branch
        %635 = sbr.rel (%p633) target = $region72
      $region71: #{run.9} parent=59 // pred_region
        %p636 = scmp.lt.s32.totalorder %s27, 1
        %s637 = scalar_select %p636, %s27, 1
        %p638 = scmp.lt.s32.totalorder %s28, 0
        %s639 = scalar_select %p638, %s28, 0
        %s640 = sadd.s32 %s639, %s637
        %s641 = scalar_lea.vmem %s7, %s640
      $region72: #{run.9} parent=59 // pred_fallthru
        _
      // Predicated region
      $region73: #{run.9} parent=59 // pred_check
        %p642 = pneg %p276
      $region74: #{run.9} parent=59 // pred_check_branch
        %644 = sbr.rel (%p642) target = $region76
      $region75: #{run.9} parent=59 // pred_region
        %p645 = scmp.lt.s32.totalorder %s27, 1
        %s646 = scalar_select %p645, %s27, 1
        %p647 = scmp.lt.s32.totalorder %s28, 0
        %s648 = scalar_select %p647, %s28, 0
        %s649 = sadd.s32 %s648, %s646
        %s650 = scalar_lea.vmem %s8, %s649
      $region76: #{run.9} parent=59 // pred_fallthru
        _
    $region60: #{run.9} parent=5 // pred_fallthru
      _
  $region6: #{run.9} parent=0 // loop_footer
    %s20 = sadd.s32 1, %s16
  $region7: #{run.9} parent=0 // loop_footer_branch
    %15 = sbr.rel target = $region3
  $region8: #{run.9} parent=0 // loop_exit
    _

// kernel: run.7
$region0: #{run.7}
  #allocation0 [shape = 'u32[]', space=smem, size = 0x4, offset = 0x4, fixed_abs, tag = 'smem constant byte address 0x4 - core index']
  #allocation1 [shape = 'u32[144,128]{1,0:T(1,128)}', space=vmem, size = 0x12000, scoped, tag = 'internal scratch']
  #allocation2 [shape = 'f32[1,1]{1,0:T(1,128)S(6)}', space=smem, size = 0x200, scoped, tag = 'scoped memory for run.7']
  %s0 = inlined_call_operand.<no memory space> [shape: f32[1,1], index: 0, kind: input, shape index: {}]
  %s1 = inlined_call_operand.vmem [shape: f32[2,16,16], index: 1, kind: input, shape index: {}]
  %s2 = inlined_call_operand.vmem [shape: f32[2,16,16], index: 2, kind: input, shape index: {}]
  %s3 = inlined_call_operand.vmem [shape: f32[2,16,16], index: 3, kind: input, shape index: {}]
  %s4 = inlined_call_operand.vmem [shape: f32[2,16,16], index: 4, kind: input, shape index: {}]
  %s5 = inlined_call_operand.vmem [shape: f32[2,1,1,1], index: 5, kind: output, shape index: {0}]
  %s6 = inlined_call_operand.vmem [shape: f32[2,1,1,1], index: 6, kind: output, shape index: {1}]
  %s7 = inlined_call_operand.vmem [shape: f32[2,1,1,1], index: 7, kind: output, shape index: {2}]
  %s8 = inlined_call_operand.vmem [shape: f32[2,1,1,1], index: 8, kind: output, shape index: {3}]
  %9 = xla_tuple %s5, %s6, %s7, %s8
  %s10 = sld [smem:[#allocation0]]
  $region77: #{run.7} parent=0
    _
  %s12 = ssub.s32 1, %s10
  %s13 = scalar_select 0, %s12, %s10
  %14 = sst [smem:[#allocation2]] %s0
  loop: start=0, step=1, limit=4
  $region2: #{run.7} parent=0 // loop_pre_header
    _
  $region3: #{run.7} parent=0 // loop_header
    %s16 = sphi 0, %s20
    %p17 = scmp.ge.s32.totalorder %s16, 4
    %s23 = sphi 0, %s35
    %s24 = sphi 0, %s31
    %s25 = sphi 0, %s23
    %s26 = sphi 0, %s24
    %s27 = sphi 0, %s25
    %s28 = sphi 0, %s26
    %s36 = sphi 0, %s36
    %s38 = sphi 0, %s36
    %s39 = sphi 0, %s38
    %s53 = sphi 0, %s39
    %s61 = sphi 0, %s63
    %s64 = sphi 0, %s61
    %s65 = sphi 0, %s64
    %s81 = sphi 0, %s65
    %s89 = sphi 0, %s91
    %s92 = sphi 0, %s89
    %s93 = sphi 0, %s92
    %s109 = sphi 0, %s93
    %s117 = sphi 0, %s119
    %s120 = sphi 0, %s117
    %s121 = sphi 0, %s120
    %s137 = sphi 0, %s121
    %s145 = sphi 0, %s147
    %s148 = sphi 0, %s145
    %s149 = sphi 0, %s148
    %s165 = sphi 0, %s149
    %s173 = sphi 0, %s175
    %s176 = sphi 0, %s173
    %s177 = sphi 0, %s176
    %s193 = sphi 0, %s177
    %s201 = sphi 0, %s203
    %s204 = sphi 0, %s201
    %s205 = sphi 0, %s204
    %s221 = sphi 0, %s205
    %s229 = sphi 0, %s231
    %s232 = sphi 0, %s229
    %s233 = sphi 0, %s232
    %s249 = sphi 0, %s233
    %s257 = sphi 0, %s259
    %s260 = sphi 0, %s257
    %s261 = sphi 0, %s260
    %s277 = sphi 0, %s261
  $region4: #{run.7} parent=0 // loop_header_branch
    %19 = sbr.rel (%p17) target = $region8
  $region5: #{run.7} parent=0 // loop_body
    %s21 = ssub.s32 %s16, 1
    %s22 = ssub.s32 %s16, 2
    %s29 = sadd.s32 1, %s24
    %p30 = scmp.ge.s32.totalorder %s29, 1
    %s31 = scalar_select %p30, 0, %s29
    %s32 = sadd.s32 1, %s23
    %s33 = scalar_select %p30, %s32, %s23
    %p34 = scmp.ge.s32.totalorder %s33, 2
    %s35 = scalar_select %p34, 0, %s33
    %s37 = sadd.s32 %s36, 1
    %p40 = scmp.eq.s32.totalorder %s16, 1
    %p41 = scmp.ne.s32.totalorder %s36, %s38
    %p42 = scmp.eq.s32.totalorder %s16, 0
    %p43 = por %p41, %p42
    %p44 = scmp.ne.s32.totalorder %s36, %s38
    %p45 = scmp.eq.s32.totalorder %s21, 1
    %p46 = por %p44, %p45
    %p47 = scmp.ne.s32.totalorder %s38, %s39
    %p48 = scmp.eq.s32.totalorder %s21, 0
    %p49 = por %p47, %p48
    %p50 = scmp.ne.s32.totalorder %s38, %s39
    %p51 = scmp.eq.s32.totalorder %s22, 1
    %p52 = por %p50, %p51
    %p54 = scmp.ne.s32.totalorder %s39, %s53
    %p55 = scmp.eq.s32.totalorder %s22, 0
    %p56 = por %p54, %p55
    %s57 = ssub.s32 %s23, %s35
    %s58 = ssub.s32 %s24, %s31
    %s59 = sor.u32 %s57, %s58
    %p60 = scmp.eq.s32.totalorder %s59, 0
    %s62 = sadd.s32 %s61, 1
    %s63 = scalar_select %p60, %s61, %s62
    %p66 = pneg %p60
    %p67 = scmp.eq.s32.totalorder %s16, 1
    %p68 = por %p66, %p67
    %p69 = scmp.ne.s32.totalorder %s61, %s64
    %p70 = scmp.eq.s32.totalorder %s16, 0
    %p71 = por %p69, %p70
    %p72 = scmp.ne.s32.totalorder %s61, %s64
    %p73 = scmp.eq.s32.totalorder %s21, 1
    %p74 = por %p72, %p73
    %p75 = scmp.ne.s32.totalorder %s64, %s65
    %p76 = scmp.eq.s32.totalorder %s21, 0
    %p77 = por %p75, %p76
    %p78 = scmp.ne.s32.totalorder %s64, %s65
    %p79 = scmp.eq.s32.totalorder %s22, 1
    %p80 = por %p78, %p79
    %p82 = scmp.ne.s32.totalorder %s65, %s81
    %p83 = scmp.eq.s32.totalorder %s22, 0
    %p84 = por %p82, %p83
    %s85 = ssub.s32 %s23, %s35
    %s86 = ssub.s32 %s24, %s31
    %s87 = sor.u32 %s85, %s86
    %p88 = scmp.eq.s32.totalorder %s87, 0
    %s90 = sadd.s32 %s89, 1
    %s91 = scalar_select %p88, %s89, %s90
    %p94 = pneg %p88
    %p95 = scmp.eq.s32.totalorder %s16, 1
    %p96 = por %p94, %p95
    %p97 = scmp.ne.s32.totalorder %s89, %s92
    %p98 = scmp.eq.s32.totalorder %s16, 0
    %p99 = por %p97, %p98
    %p100 = scmp.ne.s32.totalorder %s89, %s92
    %p101 = scmp.eq.s32.totalorder %s21, 1
    %p102 = por %p100, %p101
    %p103 = scmp.ne.s32.totalorder %s92, %s93
    %p104 = scmp.eq.s32.totalorder %s21, 0
    %p105 = por %p103, %p104
    %p106 = scmp.ne.s32.totalorder %s92, %s93
    %p107 = scmp.eq.s32.totalorder %s22, 1
    %p108 = por %p106, %p107
    %p110 = scmp.ne.s32.totalorder %s93, %s109
    %p111 = scmp.eq.s32.totalorder %s22, 0
    %p112 = por %p110, %p111
    %s113 = ssub.s32 %s23, %s35
    %s114 = ssub.s32 %s24, %s31
    %s115 = sor.u32 %s113, %s114
    %p116 = scmp.eq.s32.totalorder %s115, 0
    %s118 = sadd.s32 %s117, 1
    %s119 = scalar_select %p116, %s117, %s118
    %p122 = pneg %p116
    %p123 = scmp.eq.s32.totalorder %s16, 1
    %p124 = por %p122, %p123
    %p125 = scmp.ne.s32.totalorder %s117, %s120
    %p126 = scmp.eq.s32.totalorder %s16, 0
    %p127 = por %p125, %p126
    %p128 = scmp.ne.s32.totalorder %s117, %s120
    %p129 = scmp.eq.s32.totalorder %s21, 1
    %p130 = por %p128, %p129
    %p131 = scmp.ne.s32.totalorder %s120, %s121
    %p132 = scmp.eq.s32.totalorder %s21, 0
    %p133 = por %p131, %p132
    %p134 = scmp.ne.s32.totalorder %s120, %s121
    %p135 = scmp.eq.s32.totalorder %s22, 1
    %p136 = por %p134, %p135
    %p138 = scmp.ne.s32.totalorder %s121, %s137
    %p139 = scmp.eq.s32.totalorder %s22, 0
    %p140 = por %p138, %p139
    %s141 = ssub.s32 %s23, %s35
    %s142 = ssub.s32 %s24, %s31
    %s143 = sor.u32 %s141, %s142
    %p144 = scmp.eq.s32.totalorder %s143, 0
    %s146 = sadd.s32 %s145, 1
    %s147 = scalar_select %p144, %s145, %s146
    %p150 = pneg %p144
    %p151 = scmp.eq.s32.totalorder %s16, 1
    %p152 = por %p150, %p151
    %p153 = scmp.ne.s32.totalorder %s145, %s148
    %p154 = scmp.eq.s32.totalorder %s16, 0
    %p155 = por %p153, %p154
    %p156 = scmp.ne.s32.totalorder %s145, %s148
    %p157 = scmp.eq.s32.totalorder %s21, 1
    %p158 = por %p156, %p157
    %p159 = scmp.ne.s32.totalorder %s148, %s149
    %p160 = scmp.eq.s32.totalorder %s21, 0
    %p161 = por %p159, %p160
    %p162 = scmp.ne.s32.totalorder %s148, %s149
    %p163 = scmp.eq.s32.totalorder %s22, 1
    %p164 = por %p162, %p163
    %p166 = scmp.ne.s32.totalorder %s149, %s165
    %p167 = scmp.eq.s32.totalorder %s22, 0
    %p168 = por %p166, %p167
    %s169 = ssub.s32 %s23, %s35
    %s170 = ssub.s32 %s24, %s31
    %s171 = sor.u32 %s169, %s170
    %p172 = scmp.eq.s32.totalorder %s171, 0
    %s174 = sadd.s32 %s173, 1
    %s175 = scalar_select %p172, %s173, %s174
    %p178 = pneg %p172
    %p179 = scmp.eq.s32.totalorder %s16, 1
    %p180 = por %p178, %p179
    %p181 = scmp.ne.s32.totalorder %s173, %s176
    %p182 = scmp.eq.s32.totalorder %s16, 0
    %p183 = por %p181, %p182
    %p184 = scmp.ne.s32.totalorder %s173, %s176
    %p185 = scmp.eq.s32.totalorder %s21, 1
    %p186 = por %p184, %p185
    %p187 = scmp.ne.s32.totalorder %s176, %s177
    %p188 = scmp.eq.s32.totalorder %s21, 0
    %p189 = por %p187, %p188
    %p190 = scmp.ne.s32.totalorder %s176, %s177
    %p191 = scmp.eq.s32.totalorder %s22, 1
    %p192 = por %p190, %p191
    %p194 = scmp.ne.s32.totalorder %s177, %s193
    %p195 = scmp.eq.s32.totalorder %s22, 0
    %p196 = por %p194, %p195
    %s197 = ssub.s32 %s23, %s35
    %s198 = ssub.s32 %s24, %s31
    %s199 = sor.u32 %s197, %s198
    %p200 = scmp.eq.s32.totalorder %s199, 0
    %s202 = sadd.s32 %s201, 1
    %s203 = scalar_select %p200, %s201, %s202
    %p206 = pneg %p200
    %p207 = scmp.eq.s32.totalorder %s16, 1
    %p208 = por %p206, %p207
    %p209 = scmp.ne.s32.totalorder %s201, %s204
    %p210 = scmp.eq.s32.totalorder %s16, 0
    %p211 = por %p209, %p210
    %p212 = scmp.ne.s32.totalorder %s201, %s204
    %p213 = scmp.eq.s32.totalorder %s21, 1
    %p214 = por %p212, %p213
    %p215 = scmp.ne.s32.totalorder %s204, %s205
    %p216 = scmp.eq.s32.totalorder %s21, 0
    %p217 = por %p215, %p216
    %p218 = scmp.ne.s32.totalorder %s204, %s205
    %p219 = scmp.eq.s32.totalorder %s22, 1
    %p220 = por %p218, %p219
    %p222 = scmp.ne.s32.totalorder %s205, %s221
    %p223 = scmp.eq.s32.totalorder %s22, 0
    %p224 = por %p222, %p223
    %s225 = ssub.s32 %s23, %s35
    %s226 = ssub.s32 %s24, %s31
    %s227 = sor.u32 %s225, %s226
    %p228 = scmp.eq.s32.totalorder %s227, 0
    %s230 = sadd.s32 %s229, 1
    %s231 = scalar_select %p228, %s229, %s230
    %p234 = pneg %p228
    %p235 = scmp.eq.s32.totalorder %s16, 1
    %p236 = por %p234, %p235
    %p237 = scmp.ne.s32.totalorder %s229, %s232
    %p238 = scmp.eq.s32.totalorder %s16, 0
    %p239 = por %p237, %p238
    %p240 = scmp.ne.s32.totalorder %s229, %s232
    %p241 = scmp.eq.s32.totalorder %s21, 1
    %p242 = por %p240, %p241
    %p243 = scmp.ne.s32.totalorder %s232, %s233
    %p244 = scmp.eq.s32.totalorder %s21, 0
    %p245 = por %p243, %p244
    %p246 = scmp.ne.s32.totalorder %s232, %s233
    %p247 = scmp.eq.s32.totalorder %s22, 1
    %p248 = por %p246, %p247
    %p250 = scmp.ne.s32.totalorder %s233, %s249
    %p251 = scmp.eq.s32.totalorder %s22, 0
    %p252 = por %p250, %p251
    %s253 = ssub.s32 %s23, %s35
    %s254 = ssub.s32 %s24, %s31
    %s255 = sor.u32 %s253, %s254
    %p256 = scmp.eq.s32.totalorder %s255, 0
    %s258 = sadd.s32 %s257, 1
    %s259 = scalar_select %p256, %s257, %s258
    %p262 = pneg %p256
    %p263 = scmp.eq.s32.totalorder %s16, 1
    %p264 = por %p262, %p263
    %p265 = scmp.ne.s32.totalorder %s257, %s260
    %p266 = scmp.eq.s32.totalorder %s16, 0
    %p267 = por %p265, %p266
    %p268 = scmp.ne.s32.totalorder %s257, %s260
    %p269 = scmp.eq.s32.totalorder %s21, 1
    %p270 = por %p268, %p269
    %p271 = scmp.ne.s32.totalorder %s260, %s261
    %p272 = scmp.eq.s32.totalorder %s21, 0
    %p273 = por %p271, %p272
    %p274 = scmp.ne.s32.totalorder %s260, %s261
    %p275 = scmp.eq.s32.totalorder %s22, 1
    %p276 = por %p274, %p275
    %p278 = scmp.ne.s32.totalorder %s261, %s277
    %p279 = scmp.eq.s32.totalorder %s22, 0
    %p280 = por %p278, %p279
    %p281 = scmp.le.s32.totalorder 1, %s16
    %p282 = scmp.lt.s32.totalorder %s16, 3
    %p283 = pnand %p281, %p282
    %p284 = pneg %p283
    // Predicated region
    $region9: #{run.7} parent=5 // pred_check
      _
    $region10: #{run.7} parent=5 // pred_check_branch
      %286 = sbr.rel (%p283) target = $region12
    $region11: #{run.7} parent=5 // pred_region
      %s287 = ssub.s32 %s16, 1
      // Predicated region
      $region13: #{run.7} parent=11 // pred_check
        %p288 = pneg %p49
      $region14: #{run.7} parent=11 // pred_check_branch
        %290 = sbr.rel (%p288) target = $region16
      $region15: #{run.7} parent=11 // pred_region
        _
      $region16: #{run.7} parent=11 // pred_fallthru
        _
    $region12: #{run.7} parent=5 // pred_fallthru
      _
    %p291 = scmp.lt.s32.totalorder %s16, 2
    // Predicated region
    $region17: #{run.7} parent=5 // pred_check
      %p292 = pneg %p291
    $region18: #{run.7} parent=5 // pred_check_branch
      %294 = sbr.rel (%p292) target = $region20
    $region19: #{run.7} parent=5 // pred_region
      // Predicated region
      $region21: #{run.7} parent=19 // pred_check
        %p295 = pneg %p71
      $region22: #{run.7} parent=19 // pred_check_branch
        %297 = sbr.rel (%p295) target = $region24
      $region23: #{run.7} parent=19 // pred_region
        %s298 = smul.u32 2, %s24
        %p299 = scmp.lt.s32.totalorder %s23, 1
        %s300 = scalar_select %p299, %s23, 1
        %p301 = scmp.lt.s32.totalorder %s298, 1
        %s302 = scalar_select %p301, %s298, 1
        %s303 = smul.addr %s300, 2
        %s304 = sadd.s32 %s302, %s303
        %s305 = smul.addr %s304, 8
        %s306 = scalar_lea.vmem %s1, %s305
        %s307 = smul.u32 2, %s24
      $region24: #{run.7} parent=19 // pred_fallthru
        _
      // Predicated region
      $region25: #{run.7} parent=19 // pred_check
        %p308 = pneg %p99
      $region26: #{run.7} parent=19 // pred_check_branch
        %310 = sbr.rel (%p308) target = $region28
      $region27: #{run.7} parent=19 // pred_region
        %s311 = smul.u32 2, %s24
        %p312 = scmp.lt.s32.totalorder %s23, 1
        %s313 = scalar_select %p312, %s23, 1
        %p314 = scmp.lt.s32.totalorder %s311, 1
        %s315 = scalar_select %p314, %s311, 1
        %s316 = smul.addr %s313, 2
        %s317 = sadd.s32 %s315, %s316
        %s318 = smul.addr %s317, 8
        %s319 = scalar_lea.vmem %s2, %s318
        %s320 = smul.u32 2, %s24
      $region28: #{run.7} parent=19 // pred_fallthru
        _
      // Predicated region
      $region29: #{run.7} parent=19 // pred_check
        %p321 = pneg %p127
      $region30: #{run.7} parent=19 // pred_check_branch
        %323 = sbr.rel (%p321) target = $region32
      $region31: #{run.7} parent=19 // pred_region
        %s324 = smul.u32 2, %s24
        %p325 = scmp.lt.s32.totalorder %s23, 1
        %s326 = scalar_select %p325, %s23, 1
        %p327 = scmp.lt.s32.totalorder %s324, 1
        %s328 = scalar_select %p327, %s324, 1
        %s329 = smul.addr %s326, 2
        %s330 = sadd.s32 %s328, %s329
        %s331 = smul.addr %s330, 8
        %s332 = scalar_lea.vmem %s3, %s331
        %s333 = smul.u32 2, %s24
      $region32: #{run.7} parent=19 // pred_fallthru
        _
      // Predicated region
      $region33: #{run.7} parent=19 // pred_check
        %p334 = pneg %p155
      $region34: #{run.7} parent=19 // pred_check_branch
        %336 = sbr.rel (%p334) target = $region36
      $region35: #{run.7} parent=19 // pred_region
        %s337 = smul.u32 2, %s24
        %p338 = scmp.lt.s32.totalorder %s23, 1
        %s339 = scalar_select %p338, %s23, 1
        %p340 = scmp.lt.s32.totalorder %s337, 1
        %s341 = scalar_select %p340, %s337, 1
        %s342 = smul.addr %s339, 2
        %s343 = sadd.s32 %s341, %s342
        %s344 = smul.addr %s343, 8
        %s345 = scalar_lea.vmem %s4, %s344
        %s346 = smul.u32 2, %s24
      $region36: #{run.7} parent=19 // pred_fallthru
        _
    $region20: #{run.7} parent=5 // pred_fallthru
      _
    %p347 = scmp.le.s32.totalorder 1, %s16
    %p348 = scmp.lt.s32.totalorder %s16, 3
    %p349 = pnand %p347, %p348
    %p350 = pneg %p349
    // Predicated region
    $region37: #{run.7} parent=5 // pred_check
      _
    $region38: #{run.7} parent=5 // pred_check_branch
      %352 = sbr.rel (%p349) target = $region40
    $region39: #{run.7} parent=5 // pred_region
      %s353 = ssub.s32 %s16, 1
      %p354 = pneg %p49
      %p355 = pneg %p46
      %s356 = smul.u32 2, %s26
      %p357 = scmp.lt.s32.totalorder %s25, 1
      %s358 = scalar_select %p357, %s25, 1
      %p359 = scmp.lt.s32.totalorder %s356, 1
      %s360 = scalar_select %p359, %s356, 1
      %s361 = smul.addr %s358, 2
      %s362 = sadd.s32 %s360, %s361
      %s363 = smul.addr %s362, 8
      %s364 = scalar_lea.vmem %s1, %s363
      %p365 = pneg %p77
      %p366 = pneg %p74
      %s367 = smul.u32 2, %s26
      %p368 = scmp.lt.s32.totalorder %s25, 1
      %s369 = scalar_select %p368, %s25, 1
      %p370 = scmp.lt.s32.totalorder %s367, 1
      %s371 = scalar_select %p370, %s367, 1
      %s372 = smul.addr %s369, 2
      %s373 = sadd.s32 %s371, %s372
      %s374 = smul.addr %s373, 8
      %s375 = scalar_lea.vmem %s2, %s374
      %p376 = pneg %p105
      %p377 = pneg %p102
      %s378 = smul.u32 2, %s26
      %p379 = scmp.lt.s32.totalorder %s25, 1
      %s380 = scalar_select %p379, %s25, 1
      %p381 = scmp.lt.s32.totalorder %s378, 1
      %s382 = scalar_select %p381, %s378, 1
      %s383 = smul.addr %s380, 2
      %s384 = sadd.s32 %s382, %s383
      %s385 = smul.addr %s384, 8
      %s386 = scalar_lea.vmem %s3, %s385
      %p387 = pneg %p133
      %p388 = pneg %p130
      %s389 = smul.u32 2, %s26
      %p390 = scmp.lt.s32.totalorder %s25, 1
      %s391 = scalar_select %p390, %s25, 1
      %p392 = scmp.lt.s32.totalorder %s389, 1
      %s393 = scalar_select %p392, %s389, 1
      %s394 = smul.addr %s391, 2
      %s395 = sadd.s32 %s393, %s394
      %s396 = smul.addr %s395, 8
      %s397 = scalar_lea.vmem %s4, %s396
      %p398 = pneg %p161
      %p399 = pneg %p158
      %p400 = pneg %p189
      %p401 = pneg %p186
      %p402 = scmp.lt.s32.totalorder %s25, 1
      %s403 = scalar_select %p402, %s25, 1
      %p404 = scmp.lt.s32.totalorder %s26, 0
      %s405 = scalar_select %p404, %s26, 0
      %s406 = sadd.s32 %s405, %s403
      %s407 = scalar_lea.vmem %s5, %s406
      %p408 = pneg %p217
      %p409 = pneg %p214
      %p410 = scmp.lt.s32.totalorder %s25, 1
      %s411 = scalar_select %p410, %s25, 1
      %p412 = scmp.lt.s32.totalorder %s26, 0
      %s413 = scalar_select %p412, %s26, 0
      %s414 = sadd.s32 %s413, %s411
      %s415 = scalar_lea.vmem %s6, %s414
      %p416 = pneg %p245
      %p417 = pneg %p242
      %p418 = scmp.lt.s32.totalorder %s25, 1
      %s419 = scalar_select %p418, %s25, 1
      %p420 = scmp.lt.s32.totalorder %s26, 0
      %s421 = scalar_select %p420, %s26, 0
      %s422 = sadd.s32 %s421, %s419
      %s423 = scalar_lea.vmem %s7, %s422
      %p424 = pneg %p273
      %p425 = pneg %p270
      %p426 = scmp.lt.s32.totalorder %s25, 1
      %s427 = scalar_select %p426, %s25, 1
      %p428 = scmp.lt.s32.totalorder %s26, 0
      %s429 = scalar_select %p428, %s26, 0
      %s430 = sadd.s32 %s429, %s427
      %s431 = scalar_lea.vmem %s8, %s430
      %s432 = smul.u32 2, %s26
      %p433 = scmp.lt.s32.totalorder %s25, 1
      %s434 = scalar_select %p433, %s25, 1
      %p435 = scmp.lt.s32.totalorder %s432, 1
      %s436 = scalar_select %p435, %s432, 1
      %s437 = smul.addr %s434, 2
      %s438 = sadd.s32 %s436, %s437
      %s439 = smul.addr %s438, 8
      %s440 = scalar_lea.vmem %s1, %s439
      %s441 = smul.u32 2, %s26
      %s442 = smul.u32 2, %s26
      %p443 = scmp.lt.s32.totalorder %s25, 1
      %s444 = scalar_select %p443, %s25, 1
      %p445 = scmp.lt.s32.totalorder %s442, 1
      %s446 = scalar_select %p445, %s442, 1
      %s447 = smul.addr %s444, 2
      %s448 = sadd.s32 %s446, %s447
      %s449 = smul.addr %s448, 8
      %s450 = scalar_lea.vmem %s2, %s449
      %s451 = smul.u32 2, %s26
      %s452 = smul.u32 2, %s26
      %p453 = scmp.lt.s32.totalorder %s25, 1
      %s454 = scalar_select %p453, %s25, 1
      %p455 = scmp.lt.s32.totalorder %s452, 1
      %s456 = scalar_select %p455, %s452, 1
      %s457 = smul.addr %s454, 2
      %s458 = sadd.s32 %s456, %s457
      %s459 = smul.addr %s458, 8
      %s460 = scalar_lea.vmem %s3, %s459
      %s461 = smul.u32 2, %s26
      %s462 = smul.u32 2, %s26
      %p463 = scmp.lt.s32.totalorder %s25, 1
      %s464 = scalar_select %p463, %s25, 1
      %p465 = scmp.lt.s32.totalorder %s462, 1
      %s466 = scalar_select %p465, %s462, 1
      %s467 = smul.addr %s464, 2
      %s468 = sadd.s32 %s466, %s467
      %s469 = smul.addr %s468, 8
      %s470 = scalar_lea.vmem %s4, %s469
      %s471 = smul.u32 2, %s26
      %p472 = scmp.lt.s32.totalorder %s25, 1
      %s473 = scalar_select %p472, %s25, 1
      %p474 = scmp.lt.s32.totalorder %s26, 0
      %s475 = scalar_select %p474, %s26, 0
      %s476 = sadd.s32 %s475, %s473
      %s477 = scalar_lea.vmem %s5, %s476
      %p478 = scmp.lt.s32.totalorder %s25, 1
      %s479 = scalar_select %p478, %s25, 1
      %p480 = scmp.lt.s32.totalorder %s26, 0
      %s481 = scalar_select %p480, %s26, 0
      %s482 = sadd.s32 %s481, %s479
      %s483 = scalar_lea.vmem %s6, %s482
      %p484 = scmp.lt.s32.totalorder %s25, 1
      %s485 = scalar_select %p484, %s25, 1
      %p486 = scmp.lt.s32.totalorder %s26, 0
      %s487 = scalar_select %p486, %s26, 0
      %s488 = sadd.s32 %s487, %s485
      %s489 = scalar_lea.vmem %s7, %s488
      %p490 = scmp.lt.s32.totalorder %s25, 1
      %s491 = scalar_select %p490, %s25, 1
      %p492 = scmp.lt.s32.totalorder %s26, 0
      %s493 = scalar_select %p492, %s26, 0
      %s494 = sadd.s32 %s493, %s491
      %s495 = scalar_lea.vmem %s8, %s494
      %v496 = vld [vmem:[%s440] sm:$0xff]
      %v497 = vld [vmem:[%s440 + $0x8] sm:$0xff]
      %s498 = sld [smem:[#allocation2]]
      %s499 = smax.f32 %s498, 1e-12
      %v500 = vstv %s499
      %v501 = vrcp.pop %v500
      %s502 = vtos %v501
      %s503 = smul.f32 0.5, %s502
      %s504 = smul.f32 %s498, %s498
      %v505 = vld [vmem:[%s450] sm:$0xff]
      %v506 = vld [vmem:[%s450 + $0x8] sm:$0xff]
      %v507 = vsub.f32 %v496, %v505
      %v508 = vsub.f32 %v497, %v506
      %v509 = vand.u32 2147483647, %v507
      %v510 = vand.u32 2147483647, %v508
      %v511 = vstv %s498
      %vm512 = vcmp.le.f32.partialorder %v509, %v511
      %vm513 = vcmp.le.f32.partialorder %v510, %v511
      %v514 = vmul.f32 %v509, %v509
      %v515 = vmul.f32 %v510, %v510
      %v516 = vstv %s504
      %v517 = vadd.f32 %v514, %v516
      %v518 = vadd.f32 %v515, %v516
      %v519 = vstv %s503
      %v520 = vmul.f32 %v517, %v519
      %v521 = vmul.f32 %v518, %v519
      %v522 = vsel %vm512, %v509, %v520
      %v523 = vsel %vm513, %v510, %v521
      %vm524 = vcmask 130048
      %v525 = vsel %vm524, %v522, 0.0
      %v526 = vsel %vm524, %v523, 0.0
      %v527 = vadd.f32 %v525, %v526
      %528 = vadd.xlane.f32.xlu0 %v527
      %v529 = vpop.xlane.xlu0 %528
      %v530 = vrot.slane %v529, 4
      %v531 = vadd.f32 %v529, %v530
      %v532 = vrot.slane %v531, 2
      %v533 = vadd.f32 %v531, %v532
      %v534 = vrot.slane %v533, 1
      %v535 = vadd.f32 %v533, %v534
      %s536 = vtos %v535
      %v537 = vstv %s536
      %vm538 = vcmask 0
      %539 = vst.msk [vmem:[%s477] sm:$0x1] %vm538, %v537
      %v540 = vld [vmem:[%s460] sm:$0xff]
      %v541 = vld [vmem:[%s460 + $0x8] sm:$0xff]
      %v542 = vsub.f32 %v496, %v540
      %v543 = vsub.f32 %v497, %v541
      %v544 = vmul.f32 %v542, %v542
      %v545 = vmul.f32 %v543, %v543
      %v546 = vsel %vm524, %v544, 0.0
      %v547 = vsel %vm524, %v545, 0.0
      %v548 = vadd.f32 %v546, %v547
      %549 = vadd.xlane.f32.xlu0 %v548
      %v550 = vpop.xlane.xlu0 %549
      %v551 = vrot.slane %v550, 4
      %v552 = vadd.f32 %v550, %v551
      %v553 = vrot.slane %v552, 2
      %v554 = vadd.f32 %v552, %v553
      %v555 = vrot.slane %v554, 1
      %v556 = vadd.f32 %v554, %v555
      %s557 = vtos %v556
      %v558 = vstv %s557
      %559 = vst.msk [vmem:[%s483] sm:$0x1] %vm538, %v558
      %v560 = vld [vmem:[%s470] sm:$0xff]
      %v561 = vld [vmem:[%s470 + $0x8] sm:$0xff]
      %564 = vrot.lane.b32.xlu0 %v560, 1
      %v565 = vpop.permute.xlu0 %564
      %566 = vrot.lane.b32.xlu0 %v561, 1
      %v567 = vpop.permute.xlu0 %566
      %v570 = vsub.f32 %v560, %v565
      %v571 = vsub.f32 %v561, %v567
      %v572 = vand.u32 2147483647, %v570
      %v573 = vand.u32 2147483647, %v571
      %v574 = vsub.f32 0.0, %v572
      %v575 = vsub.f32 0.0, %v573
      %v576 = vmul.f32 %v574, 1.442695
      %v577 = vpow.pop %v576
      %v578 = vmul.f32 %v575, 1.442695
      %v579 = vpow.pop %v578
      %582 = vrot.lane.b32.xlu0 %v496, 1
      %v583 = vpop.permute.xlu0 %582
      %584 = vrot.lane.b32.xlu0 %v497, 1
      %v585 = vpop.permute.xlu0 %584
      %v588 = vsub.f32 %v496, %v583
      %v589 = vsub.f32 %v497, %v585
      %v590 = vand.u32 2147483647, %v588
      %v591 = vand.u32 2147483647, %v589
      %v592 = vmul.f32 %v577, %v590
      %v593 = vmul.f32 %v579, %v591
      %596 = vrot.lane.b32.xlu0 %v592, 127
      %v597 = vpop.permute.xlu0 %596
      %598 = vrot.lane.b32.xlu0 %v593, 127
      %v599 = vpop.permute.xlu0 %598
      %vm602 = vcmask 121856
      %v603 = vsel %vm602, %v597, 0.0
      %v604 = vsel %vm602, %v599, 0.0
      %v605 = vadd.f32 %v603, %v604
      %606 = vadd.xlane.f32.xlu0 %v605
      %v607 = vpop.xlane.xlu0 %606
      %v608 = vrot.slane %v607, 4
      %v609 = vadd.f32 %v607, %v608
      %v610 = vrot.slane %v609, 2
      %v611 = vadd.f32 %v609, %v610
      %v612 = vrot.slane %v611, 1
      %v613 = vadd.f32 %v611, %v612
      %s614 = vtos %v613
      %v615 = vstv %s614
      %616 = vst.msk [vmem:[%s489] sm:$0x1] %vm538, %v615
      %vm617 = vcmask 1040384
      %v618 = vrot.slane %v560, 7
      %v619 = vrot.slane %v561, 7
      %v620 = vsel %vm617, %v618, %v619
      %v623 = vsub.f32 %v560, %v618
      %v624 = vsub.f32 %v561, %v620
      %v625 = vand.u32 2147483647, %v623
      %v626 = vand.u32 2147483647, %v624
      %v627 = vsub.f32 0.0, %v625
      %v628 = vsub.f32 0.0, %v626
      %v629 = vmul.f32 %v627, 1.442695
      %v630 = vpow.pop %v629
      %v631 = vmul.f32 %v628, 1.442695
      %v632 = vpow.pop %v631
      %v633 = vrot.slane %v496, 7
      %v634 = vrot.slane %v497, 7
      %v635 = vsel %vm617, %v633, %v634
      %v638 = vsub.f32 %v496, %v633
      %v639 = vsub.f32 %v497, %v635
      %v640 = vand.u32 2147483647, %v638
      %v641 = vand.u32 2147483647, %v639
      %v642 = vmul.f32 %v630, %v640
      %v643 = vmul.f32 %v632, %v641
      %vm646 = vcmask 1046528
      %v647 = vrot.slane %v642, 1
      %v648 = vrot.slane %v643, 1
      %v649 = vsel %vm646, %v647, %v648
      %v652 = vsel %vm524, %v649, 0.0
      %vm653 = vcmask 129024
      %v654 = vsel %vm653, %v648, 0.0
      %v655 = vadd.f32 %v652, %v654
      %656 = vadd.xlane.f32.xlu0 %v655
      %v657 = vpop.xlane.xlu0 %656
      %v658 = vrot.slane %v657, 4
      %v659 = vadd.f32 %v657, %v658
      %v660 = vrot.slane %v659, 2
      %v661 = vadd.f32 %v659, %v660
      %v662 = vrot.slane %v661, 1
      %v663 = vadd.f32 %v661, %v662
      %s664 = vtos %v663
      %v665 = vstv %s664
      %666 = vst.msk [vmem:[%s495] sm:$0x1] %vm538, %v665
      %p667 = scmp.lt.s32.totalorder %s25, 1
      %s668 = scalar_select %p667, %s25, 1
      %p669 = scmp.lt.s32.totalorder %s26, 0
      %s670 = scalar_select %p669, %s26, 0
      %s671 = sadd.s32 %s670, %s668
      %s672 = scalar_lea.vmem %s5, %s671
      %p673 = scmp.lt.s32.totalorder %s25, 1
      %s674 = scalar_select %p673, %s25, 1
      %p675 = scmp.lt.s32.totalorder %s26, 0
      %s676 = scalar_select %p675, %s26, 0
      %s677 = sadd.s32 %s676, %s674
      %s678 = scalar_lea.vmem %s6, %s677
      %p679 = scmp.lt.s32.totalorder %s25, 1
      %s680 = scalar_select %p679, %s25, 1
      %p681 = scmp.lt.s32.totalorder %s26, 0
      %s682 = scalar_select %p681, %s26, 0
      %s683 = sadd.s32 %s682, %s680
      %s684 = scalar_lea.vmem %s7, %s683
      %p685 = scmp.lt.s32.totalorder %s25, 1
      %s686 = scalar_select %p685, %s25, 1
      %p687 = scmp.lt.s32.totalorder %s26, 0
      %s688 = scalar_select %p687, %s26, 0
      %s689 = sadd.s32 %s688, %s686
      %s690 = scalar_lea.vmem %s8, %s689
      // Predicated region
      $region41: #{run.7} parent=39 // pred_check
        %p691 = pneg %p186
      $region42: #{run.7} parent=39 // pred_check_branch
        %693 = sbr.rel (%p691) target = $region44
      $region43: #{run.7} parent=39 // pred_region
        _
      $region44: #{run.7} parent=39 // pred_fallthru
        _
      // Predicated region
      $region45: #{run.7} parent=39 // pred_check
        %p694 = pneg %p214
      $region46: #{run.7} parent=39 // pred_check_branch
        %696 = sbr.rel (%p694) target = $region48
      $region47: #{run.7} parent=39 // pred_region
        _
      $region48: #{run.7} parent=39 // pred_fallthru
        _
      // Predicated region
      $region49: #{run.7} parent=39 // pred_check
        %p697 = pneg %p242
      $region50: #{run.7} parent=39 // pred_check_branch
        %699 = sbr.rel (%p697) target = $region52
      $region51: #{run.7} parent=39 // pred_region
        _
      $region52: #{run.7} parent=39 // pred_fallthru
        _
      // Predicated region
      $region53: #{run.7} parent=39 // pred_check
        %p700 = pneg %p270
      $region54: #{run.7} parent=39 // pred_check_branch
        %702 = sbr.rel (%p700) target = $region56
      $region55: #{run.7} parent=39 // pred_region
        _
      $region56: #{run.7} parent=39 // pred_fallthru
        _
    $region40: #{run.7} parent=5 // pred_fallthru
      _
    %p703 = scmp.le.s32.totalorder 2, %s16
    // Predicated region
    $region57: #{run.7} parent=5 // pred_check
      %p704 = pneg %p703
    $region58: #{run.7} parent=5 // pred_check_branch
      %706 = sbr.rel (%p704) target = $region60
    $region59: #{run.7} parent=5 // pred_region
      %s707 = ssub.s32 %s16, 2
      // Predicated region
      $region61: #{run.7} parent=59 // pred_check
        %p708 = pneg %p192
      $region62: #{run.7} parent=59 // pred_check_branch
        %710 = sbr.rel (%p708) target = $region64
      $region63: #{run.7} parent=59 // pred_region
        %p711 = scmp.lt.s32.totalorder %s27, 1
        %s712 = scalar_select %p711, %s27, 1
        %p713 = scmp.lt.s32.totalorder %s28, 0
        %s714 = scalar_select %p713, %s28, 0
        %s715 = sadd.s32 %s714, %s712
        %s716 = scalar_lea.vmem %s5, %s715
      $region64: #{run.7} parent=59 // pred_fallthru
        _
      // Predicated region
      $region65: #{run.7} parent=59 // pred_check
        %p717 = pneg %p220
      $region66: #{run.7} parent=59 // pred_check_branch
        %719 = sbr.rel (%p717) target = $region68
      $region67: #{run.7} parent=59 // pred_region
        %p720 = scmp.lt.s32.totalorder %s27, 1
        %s721 = scalar_select %p720, %s27, 1
        %p722 = scmp.lt.s32.totalorder %s28, 0
        %s723 = scalar_select %p722, %s28, 0
        %s724 = sadd.s32 %s723, %s721
        %s725 = scalar_lea.vmem %s6, %s724
      $region68: #{run.7} parent=59 // pred_fallthru
        _
      // Predicated region
      $region69: #{run.7} parent=59 // pred_check
        %p726 = pneg %p248
      $region70: #{run.7} parent=59 // pred_check_branch
        %728 = sbr.rel (%p726) target = $region72
      $region71: #{run.7} parent=59 // pred_region
        %p729 = scmp.lt.s32.totalorder %s27, 1
        %s730 = scalar_select %p729, %s27, 1
        %p731 = scmp.lt.s32.totalorder %s28, 0
        %s732 = scalar_select %p731, %s28, 0
        %s733 = sadd.s32 %s732, %s730
        %s734 = scalar_lea.vmem %s7, %s733
      $region72: #{run.7} parent=59 // pred_fallthru
        _
      // Predicated region
      $region73: #{run.7} parent=59 // pred_check
        %p735 = pneg %p276
      $region74: #{run.7} parent=59 // pred_check_branch
        %737 = sbr.rel (%p735) target = $region76
      $region75: #{run.7} parent=59 // pred_region
        %p738 = scmp.lt.s32.totalorder %s27, 1
        %s739 = scalar_select %p738, %s27, 1
        %p740 = scmp.lt.s32.totalorder %s28, 0
        %s741 = scalar_select %p740, %s28, 0
        %s742 = sadd.s32 %s741, %s739
        %s743 = scalar_lea.vmem %s8, %s742
      $region76: #{run.7} parent=59 // pred_fallthru
        _
    $region60: #{run.7} parent=5 // pred_fallthru
      _
  $region6: #{run.7} parent=0 // loop_footer
    %s20 = sadd.s32 1, %s16
  $region7: #{run.7} parent=0 // loop_footer_branch
    %15 = sbr.rel target = $region3
  $region8: #{run.7} parent=0 // loop_exit
    _

// kernel: run.10
$region0: #{run.10}
  #allocation0 [shape = 'u32[]', space=smem, size = 0x4, offset = 0x4, fixed_abs, tag = 'smem constant byte address 0x4 - core index']
  #allocation1 [shape = 'u32[144,128]{1,0:T(1,128)}', space=vmem, size = 0x12000, scoped, tag = 'internal scratch']
  %s0 = inlined_call_operand.vmem [shape: f32[2,4,4], index: 0, kind: input, shape index: {}]
  %s1 = inlined_call_operand.vmem [shape: f32[2,4,4], index: 1, kind: input, shape index: {}]
  %s2 = inlined_call_operand.vmem [shape: f32[2,1,1,1], index: 2, kind: output, shape index: {}]
  %s3 = sld [smem:[#allocation0]]
  $region41: #{run.10} parent=0
    _
  %s5 = ssub.s32 1, %s3
  %s6 = scalar_select 0, %s5, %s3
  loop: start=0, step=1, limit=4
  $region2: #{run.10} parent=0 // loop_pre_header
    _
  $region3: #{run.10} parent=0 // loop_header
    %s8 = sphi 0, %s12
    %p9 = scmp.ge.s32.totalorder %s8, 4
    %s15 = sphi 0, %s27
    %s16 = sphi 0, %s23
    %s17 = sphi 0, %s15
    %s18 = sphi 0, %s16
    %s19 = sphi 0, %s17
    %s20 = sphi 0, %s18
    %s32 = sphi 0, %s34
    %s35 = sphi 0, %s32
    %s36 = sphi 0, %s35
    %s52 = sphi 0, %s36
    %s60 = sphi 0, %s62
    %s63 = sphi 0, %s60
    %s64 = sphi 0, %s63
    %s80 = sphi 0, %s64
    %s88 = sphi 0, %s90
    %s91 = sphi 0, %s88
    %s92 = sphi 0, %s91
    %s108 = sphi 0, %s92
  $region4: #{run.10} parent=0 // loop_header_branch
    %11 = sbr.rel (%p9) target = $region8
  $region5: #{run.10} parent=0 // loop_body
    %s13 = ssub.s32 %s8, 1
    %s14 = ssub.s32 %s8, 2
    %s21 = sadd.s32 1, %s16
    %p22 = scmp.ge.s32.totalorder %s21, 1
    %s23 = scalar_select %p22, 0, %s21
    %s24 = sadd.s32 1, %s15
    %s25 = scalar_select %p22, %s24, %s15
    %p26 = scmp.ge.s32.totalorder %s25, 2
    %s27 = scalar_select %p26, 0, %s25
    %s28 = ssub.s32 %s15, %s27
    %s29 = ssub.s32 %s16, %s23
    %s30 = sor.u32 %s28, %s29
    %p31 = scmp.eq.s32.totalorder %s30, 0
    %s33 = sadd.s32 %s32, 1
    %s34 = scalar_select %p31, %s32, %s33
    %p37 = pneg %p31
    %p38 = scmp.eq.s32.totalorder %s8, 1
    %p39 = por %p37, %p38
    %p40 = scmp.ne.s32.totalorder %s32, %s35
    %p41 = scmp.eq.s32.totalorder %s8, 0
    %p42 = por %p40, %p41
    %p43 = scmp.ne.s32.totalorder %s32, %s35
    %p44 = scmp.eq.s32.totalorder %s13, 1
    %p45 = por %p43, %p44
    %p46 = scmp.ne.s32.totalorder %s35, %s36
    %p47 = scmp.eq.s32.totalorder %s13, 0
    %p48 = por %p46, %p47
    %p49 = scmp.ne.s32.totalorder %s35, %s36
    %p50 = scmp.eq.s32.totalorder %s14, 1
    %p51 = por %p49, %p50
    %p53 = scmp.ne.s32.totalorder %s36, %s52
    %p54 = scmp.eq.s32.totalorder %s14, 0
    %p55 = por %p53, %p54
    %s56 = ssub.s32 %s15, %s27
    %s57 = ssub.s32 %s16, %s23
    %s58 = sor.u32 %s56, %s57
    %p59 = scmp.eq.s32.totalorder %s58, 0
    %s61 = sadd.s32 %s60, 1
    %s62 = scalar_select %p59, %s60, %s61
    %p65 = pneg %p59
    %p66 = scmp.eq.s32.totalorder %s8, 1
    %p67 = por %p65, %p66
    %p68 = scmp.ne.s32.totalorder %s60, %s63
    %p69 = scmp.eq.s32.totalorder %s8, 0
    %p70 = por %p68, %p69
    %p71 = scmp.ne.s32.totalorder %s60, %s63
    %p72 = scmp.eq.s32.totalorder %s13, 1
    %p73 = por %p71, %p72
    %p74 = scmp.ne.s32.totalorder %s63, %s64
    %p75 = scmp.eq.s32.totalorder %s13, 0
    %p76 = por %p74, %p75
    %p77 = scmp.ne.s32.totalorder %s63, %s64
    %p78 = scmp.eq.s32.totalorder %s14, 1
    %p79 = por %p77, %p78
    %p81 = scmp.ne.s32.totalorder %s64, %s80
    %p82 = scmp.eq.s32.totalorder %s14, 0
    %p83 = por %p81, %p82
    %s84 = ssub.s32 %s15, %s27
    %s85 = ssub.s32 %s16, %s23
    %s86 = sor.u32 %s84, %s85
    %p87 = scmp.eq.s32.totalorder %s86, 0
    %s89 = sadd.s32 %s88, 1
    %s90 = scalar_select %p87, %s88, %s89
    %p93 = pneg %p87
    %p94 = scmp.eq.s32.totalorder %s8, 1
    %p95 = por %p93, %p94
    %p96 = scmp.ne.s32.totalorder %s88, %s91
    %p97 = scmp.eq.s32.totalorder %s8, 0
    %p98 = por %p96, %p97
    %p99 = scmp.ne.s32.totalorder %s88, %s91
    %p100 = scmp.eq.s32.totalorder %s13, 1
    %p101 = por %p99, %p100
    %p102 = scmp.ne.s32.totalorder %s91, %s92
    %p103 = scmp.eq.s32.totalorder %s13, 0
    %p104 = por %p102, %p103
    %p105 = scmp.ne.s32.totalorder %s91, %s92
    %p106 = scmp.eq.s32.totalorder %s14, 1
    %p107 = por %p105, %p106
    %p109 = scmp.ne.s32.totalorder %s92, %s108
    %p110 = scmp.eq.s32.totalorder %s14, 0
    %p111 = por %p109, %p110
    %p112 = scmp.le.s32.totalorder 1, %s8
    %p113 = scmp.lt.s32.totalorder %s8, 3
    %p114 = pnand %p112, %p113
    %p115 = pneg %p114
    // Predicated region
    $region9: #{run.10} parent=5 // pred_check
      _
    $region10: #{run.10} parent=5 // pred_check_branch
      %117 = sbr.rel (%p114) target = $region12
    $region11: #{run.10} parent=5 // pred_region
      %s118 = ssub.s32 %s8, 1
    $region12: #{run.10} parent=5 // pred_fallthru
      _
    %p119 = scmp.lt.s32.totalorder %s8, 2
    // Predicated region
    $region13: #{run.10} parent=5 // pred_check
      %p120 = pneg %p119
    $region14: #{run.10} parent=5 // pred_check_branch
      %122 = sbr.rel (%p120) target = $region16
    $region15: #{run.10} parent=5 // pred_region
      // Predicated region
      $region17: #{run.10} parent=15 // pred_check
        %p123 = pneg %p42
      $region18: #{run.10} parent=15 // pred_check_branch
        %125 = sbr.rel (%p123) target = $region20
      $region19: #{run.10} parent=15 // pred_region
        %p126 = scmp.lt.s32.totalorder %s15, 1
        %s127 = scalar_select %p126, %s15, 1
        %p128 = scmp.lt.s32.totalorder %s16, 0
        %s129 = scalar_select %p128, %s16, 0
        %s130 = sadd.s32 %s129, %s127
        %s131 = smul.addr %s130, 4
        %s132 = scalar_lea.vmem %s0, %s131
      $region20: #{run.10} parent=15 // pred_fallthru
        _
      // Predicated region
      $region21: #{run.10} parent=15 // pred_check
        %p133 = pneg %p70
      $region22: #{run.10} parent=15 // pred_check_branch
        %135 = sbr.rel (%p133) target = $region24
      $region23: #{run.10} parent=15 // pred_region
        %p136 = scmp.lt.s32.totalorder %s15, 1
        %s137 = scalar_select %p136, %s15, 1
        %p138 = scmp.lt.s32.totalorder %s16, 0
        %s139 = scalar_select %p138, %s16, 0
        %s140 = sadd.s32 %s139, %s137
        %s141 = smul.addr %s140, 4
        %s142 = scalar_lea.vmem %s1, %s141
      $region24: #{run.10} parent=15 // pred_fallthru
        _
    $region16: #{run.10} parent=5 // pred_fallthru
      _
    %p143 = scmp.le.s32.totalorder 1, %s8
    %p144 = scmp.lt.s32.totalorder %s8, 3
    %p145 = pnand %p143, %p144
    %p146 = pneg %p145
    // Predicated region
    $region25: #{run.10} parent=5 // pred_check
      _
    $region26: #{run.10} parent=5 // pred_check_branch
      %148 = sbr.rel (%p145) target = $region28
    $region27: #{run.10} parent=5 // pred_region
      %s149 = ssub.s32 %s8, 1
      %p150 = scmp.lt.s32.totalorder %s17, 1
      %s151 = scalar_select %p150, %s17, 1
      %p152 = scmp.lt.s32.totalorder %s18, 0
      %s153 = scalar_select %p152, %s18, 0
      %s154 = sadd.s32 %s153, %s151
      %s155 = smul.addr %s154, 4
      %s156 = scalar_lea.vmem %s0, %s155
      %p157 = pneg %p48
      %p158 = pneg %p45
      %p159 = scmp.lt.s32.totalorder %s17, 1
      %s160 = scalar_select %p159, %s17, 1
      %p161 = scmp.lt.s32.totalorder %s18, 0
      %s162 = scalar_select %p161, %s18, 0
      %s163 = sadd.s32 %s162, %s160
      %s164 = smul.addr %s163, 4
      %s165 = scalar_lea.vmem %s1, %s164
      %p166 = pneg %p76
      %p167 = pneg %p73
      %p168 = pneg %p104
      %p169 = pneg %p101
      %p170 = scmp.lt.s32.totalorder %s17, 1
      %s171 = scalar_select %p170, %s17, 1
      %p172 = scmp.lt.s32.totalorder %s18, 0
      %s173 = scalar_select %p172, %s18, 0
      %s174 = sadd.s32 %s173, %s171
      %s175 = scalar_lea.vmem %s2, %s174
      %p176 = scmp.lt.s32.totalorder %s17, 1
      %s177 = scalar_select %p176, %s17, 1
      %p178 = scmp.lt.s32.totalorder %s18, 0
      %s179 = scalar_select %p178, %s18, 0
      %s180 = sadd.s32 %s179, %s177
      %s181 = smul.addr %s180, 4
      %s182 = scalar_lea.vmem %s0, %s181
      %p183 = scmp.lt.s32.totalorder %s17, 1
      %s184 = scalar_select %p183, %s17, 1
      %p185 = scmp.lt.s32.totalorder %s18, 0
      %s186 = scalar_select %p185, %s18, 0
      %s187 = sadd.s32 %s186, %s184
      %s188 = smul.addr %s187, 4
      %s189 = scalar_lea.vmem %s1, %s188
      %p190 = scmp.lt.s32.totalorder %s17, 1
      %s191 = scalar_select %p190, %s17, 1
      %p192 = scmp.lt.s32.totalorder %s18, 0
      %s193 = scalar_select %p192, %s18, 0
      %s194 = sadd.s32 %s193, %s191
      %s195 = scalar_lea.vmem %s2, %s194
      %v196 = vld [vmem:[%s182] sm:$0xf]
      %v197 = vld [vmem:[%s189] sm:$0xf]
      %v198 = vsub.f32 %v196, %v197
      %v199 = vand.u32 2147483647, %v198
      %vm200 = vcmask 27648
      %v201 = vsel %vm200, %v199, -inf
      %202 = vmax.xlane.f32.xlu0 %v201
      %v203 = vpop.xlane.xlu0 %202
      %v204 = vrot.slane %v203, 4
      %v205 = vmax.f32 %v203, %v204
      %v206 = vrot.slane %v205, 2
      %v207 = vmax.f32 %v205, %v206
      %v208 = vrot.slane %v207, 1
      %v209 = vmax.f32 %v207, %v208
      %s210 = vtos %v209
      %v211 = vstv %s210
      %vm212 = vcmask 0
      %213 = vst.msk [vmem:[%s195] sm:$0x1] %vm212, %v211
      %p214 = scmp.lt.s32.totalorder %s17, 1
      %s215 = scalar_select %p214, %s17, 1
      %p216 = scmp.lt.s32.totalorder %s18, 0
      %s217 = scalar_select %p216, %s18, 0
      %s218 = sadd.s32 %s217, %s215
      %s219 = scalar_lea.vmem %s2, %s218
      // Predicated region
      $region29: #{run.10} parent=27 // pred_check
        %p220 = pneg %p101
      $region30: #{run.10} parent=27 // pred_check_branch
        %222 = sbr.rel (%p220) target = $region32
      $region31: #{run.10} parent=27 // pred_region
        _
      $region32: #{run.10} parent=27 // pred_fallthru
        _
    $region28: #{run.10} parent=5 // pred_fallthru
      _
    %p223 = scmp.le.s32.totalorder 2, %s8
    // Predicated region
    $region33: #{run.10} parent=5 // pred_check
      %p224 = pneg %p223
    $region34: #{run.10} parent=5 // pred_check_branch
      %226 = sbr.rel (%p224) target = $region36
    $region35: #{run.10} parent=5 // pred_region
      %s227 = ssub.s32 %s8, 2
      // Predicated region
      $region37: #{run.10} parent=35 // pred_check
        %p228 = pneg %p107
      $region38: #{run.10} parent=35 // pred_check_branch
        %230 = sbr.rel (%p228) target = $region40
      $region39: #{run.10} parent=35 // pred_region
        %p231 = scmp.lt.s32.totalorder %s19, 1
        %s232 = scalar_select %p231, %s19, 1
        %p233 = scmp.lt.s32.totalorder %s20, 0
        %s234 = scalar_select %p233, %s20, 0
        %s235 = sadd.s32 %s234, %s232
        %s236 = scalar_lea.vmem %s2, %s235
      $region40: #{run.10} parent=35 // pred_fallthru
        _
    $region36: #{run.10} parent=5 // pred_fallthru
      _
  $region6: #{run.10} parent=0 // loop_footer
    %s12 = sadd.s32 1, %s8
  $region7: #{run.10} parent=0 // loop_footer_branch
    %7 = sbr.rel target = $region3
  $region8: #{run.10} parent=0 // loop_exit
    _

// kernel: run.11
$region0: #{run.11}
  #allocation0 [shape = 'u32[]', space=smem, size = 0x4, offset = 0x4, fixed_abs, tag = 'smem constant byte address 0x4 - core index']
  #allocation1 [shape = 'u32[144,128]{1,0:T(1,128)}', space=vmem, size = 0x12000, scoped, tag = 'internal scratch']
  #allocation2 [shape = 'f32[1,1]{1,0:T(1,128)S(6)}', space=smem, size = 0x200, scoped, tag = 'scoped memory for run.11']
  %s0 = inlined_call_operand.<no memory space> [shape: f32[1,1], index: 0, kind: input, shape index: {}]
  %s1 = inlined_call_operand.vmem [shape: f32[2,4,4], index: 1, kind: input, shape index: {}]
  %s2 = inlined_call_operand.vmem [shape: f32[2,4,4], index: 2, kind: input, shape index: {}]
  %s3 = inlined_call_operand.vmem [shape: f32[2,4,4], index: 3, kind: input, shape index: {}]
  %s4 = inlined_call_operand.vmem [shape: f32[2,1,1,1], index: 4, kind: output, shape index: {0}]
  %s5 = inlined_call_operand.vmem [shape: f32[2,1,1,1], index: 5, kind: output, shape index: {1}]
  %s6 = inlined_call_operand.vmem [shape: f32[2,1,1,1], index: 6, kind: output, shape index: {2}]
  %7 = xla_tuple %s4, %s5, %s6
  %s8 = sld [smem:[#allocation0]]
  $region65: #{run.11} parent=0
    _
  %s10 = ssub.s32 1, %s8
  %s11 = scalar_select 0, %s10, %s8
  %12 = sst [smem:[#allocation2]] %s0
  loop: start=0, step=1, limit=4
  $region2: #{run.11} parent=0 // loop_pre_header
    _
  $region3: #{run.11} parent=0 // loop_header
    %s14 = sphi 0, %s18
    %p15 = scmp.ge.s32.totalorder %s14, 4
    %s21 = sphi 0, %s33
    %s22 = sphi 0, %s29
    %s23 = sphi 0, %s21
    %s24 = sphi 0, %s22
    %s25 = sphi 0, %s23
    %s26 = sphi 0, %s24
    %s34 = sphi 0, %s34
    %s36 = sphi 0, %s34
    %s37 = sphi 0, %s36
    %s51 = sphi 0, %s37
    %s59 = sphi 0, %s61
    %s62 = sphi 0, %s59
    %s63 = sphi 0, %s62
    %s79 = sphi 0, %s63
    %s87 = sphi 0, %s89
    %s90 = sphi 0, %s87
    %s91 = sphi 0, %s90
    %s107 = sphi 0, %s91
    %s115 = sphi 0, %s117
    %s118 = sphi 0, %s115
    %s119 = sphi 0, %s118
    %s135 = sphi 0, %s119
    %s143 = sphi 0, %s145
    %s146 = sphi 0, %s143
    %s147 = sphi 0, %s146
    %s163 = sphi 0, %s147
    %s171 = sphi 0, %s173
    %s174 = sphi 0, %s171
    %s175 = sphi 0, %s174
    %s191 = sphi 0, %s175
    %s199 = sphi 0, %s201
    %s202 = sphi 0, %s199
    %s203 = sphi 0, %s202
    %s219 = sphi 0, %s203
  $region4: #{run.11} parent=0 // loop_header_branch
    %17 = sbr.rel (%p15) target = $region8
  $region5: #{run.11} parent=0 // loop_body
    %s19 = ssub.s32 %s14, 1
    %s20 = ssub.s32 %s14, 2
    %s27 = sadd.s32 1, %s22
    %p28 = scmp.ge.s32.totalorder %s27, 1
    %s29 = scalar_select %p28, 0, %s27
    %s30 = sadd.s32 1, %s21
    %s31 = scalar_select %p28, %s30, %s21
    %p32 = scmp.ge.s32.totalorder %s31, 2
    %s33 = scalar_select %p32, 0, %s31
    %s35 = sadd.s32 %s34, 1
    %p38 = scmp.eq.s32.totalorder %s14, 1
    %p39 = scmp.ne.s32.totalorder %s34, %s36
    %p40 = scmp.eq.s32.totalorder %s14, 0
    %p41 = por %p39, %p40
    %p42 = scmp.ne.s32.totalorder %s34, %s36
    %p43 = scmp.eq.s32.totalorder %s19, 1
    %p44 = por %p42, %p43
    %p45 = scmp.ne.s32.totalorder %s36, %s37
    %p46 = scmp.eq.s32.totalorder %s19, 0
    %p47 = por %p45, %p46
    %p48 = scmp.ne.s32.totalorder %s36, %s37
    %p49 = scmp.eq.s32.totalorder %s20, 1
    %p50 = por %p48, %p49
    %p52 = scmp.ne.s32.totalorder %s37, %s51
    %p53 = scmp.eq.s32.totalorder %s20, 0
    %p54 = por %p52, %p53
    %s55 = ssub.s32 %s21, %s33
    %s56 = ssub.s32 %s22, %s29
    %s57 = sor.u32 %s55, %s56
    %p58 = scmp.eq.s32.totalorder %s57, 0
    %s60 = sadd.s32 %s59, 1
    %s61 = scalar_select %p58, %s59, %s60
    %p64 = pneg %p58
    %p65 = scmp.eq.s32.totalorder %s14, 1
    %p66 = por %p64, %p65
    %p67 = scmp.ne.s32.totalorder %s59, %s62
    %p68 = scmp.eq.s32.totalorder %s14, 0
    %p69 = por %p67, %p68
    %p70 = scmp.ne.s32.totalorder %s59, %s62
    %p71 = scmp.eq.s32.totalorder %s19, 1
    %p72 = por %p70, %p71
    %p73 = scmp.ne.s32.totalorder %s62, %s63
    %p74 = scmp.eq.s32.totalorder %s19, 0
    %p75 = por %p73, %p74
    %p76 = scmp.ne.s32.totalorder %s62, %s63
    %p77 = scmp.eq.s32.totalorder %s20, 1
    %p78 = por %p76, %p77
    %p80 = scmp.ne.s32.totalorder %s63, %s79
    %p81 = scmp.eq.s32.totalorder %s20, 0
    %p82 = por %p80, %p81
    %s83 = ssub.s32 %s21, %s33
    %s84 = ssub.s32 %s22, %s29
    %s85 = sor.u32 %s83, %s84
    %p86 = scmp.eq.s32.totalorder %s85, 0
    %s88 = sadd.s32 %s87, 1
    %s89 = scalar_select %p86, %s87, %s88
    %p92 = pneg %p86
    %p93 = scmp.eq.s32.totalorder %s14, 1
    %p94 = por %p92, %p93
    %p95 = scmp.ne.s32.totalorder %s87, %s90
    %p96 = scmp.eq.s32.totalorder %s14, 0
    %p97 = por %p95, %p96
    %p98 = scmp.ne.s32.totalorder %s87, %s90
    %p99 = scmp.eq.s32.totalorder %s19, 1
    %p100 = por %p98, %p99
    %p101 = scmp.ne.s32.totalorder %s90, %s91
    %p102 = scmp.eq.s32.totalorder %s19, 0
    %p103 = por %p101, %p102
    %p104 = scmp.ne.s32.totalorder %s90, %s91
    %p105 = scmp.eq.s32.totalorder %s20, 1
    %p106 = por %p104, %p105
    %p108 = scmp.ne.s32.totalorder %s91, %s107
    %p109 = scmp.eq.s32.totalorder %s20, 0
    %p110 = por %p108, %p109
    %s111 = ssub.s32 %s21, %s33
    %s112 = ssub.s32 %s22, %s29
    %s113 = sor.u32 %s111, %s112
    %p114 = scmp.eq.s32.totalorder %s113, 0
    %s116 = sadd.s32 %s115, 1
    %s117 = scalar_select %p114, %s115, %s116
    %p120 = pneg %p114
    %p121 = scmp.eq.s32.totalorder %s14, 1
    %p122 = por %p120, %p121
    %p123 = scmp.ne.s32.totalorder %s115, %s118
    %p124 = scmp.eq.s32.totalorder %s14, 0
    %p125 = por %p123, %p124
    %p126 = scmp.ne.s32.totalorder %s115, %s118
    %p127 = scmp.eq.s32.totalorder %s19, 1
    %p128 = por %p126, %p127
    %p129 = scmp.ne.s32.totalorder %s118, %s119
    %p130 = scmp.eq.s32.totalorder %s19, 0
    %p131 = por %p129, %p130
    %p132 = scmp.ne.s32.totalorder %s118, %s119
    %p133 = scmp.eq.s32.totalorder %s20, 1
    %p134 = por %p132, %p133
    %p136 = scmp.ne.s32.totalorder %s119, %s135
    %p137 = scmp.eq.s32.totalorder %s20, 0
    %p138 = por %p136, %p137
    %s139 = ssub.s32 %s21, %s33
    %s140 = ssub.s32 %s22, %s29
    %s141 = sor.u32 %s139, %s140
    %p142 = scmp.eq.s32.totalorder %s141, 0
    %s144 = sadd.s32 %s143, 1
    %s145 = scalar_select %p142, %s143, %s144
    %p148 = pneg %p142
    %p149 = scmp.eq.s32.totalorder %s14, 1
    %p150 = por %p148, %p149
    %p151 = scmp.ne.s32.totalorder %s143, %s146
    %p152 = scmp.eq.s32.totalorder %s14, 0
    %p153 = por %p151, %p152
    %p154 = scmp.ne.s32.totalorder %s143, %s146
    %p155 = scmp.eq.s32.totalorder %s19, 1
    %p156 = por %p154, %p155
    %p157 = scmp.ne.s32.totalorder %s146, %s147
    %p158 = scmp.eq.s32.totalorder %s19, 0
    %p159 = por %p157, %p158
    %p160 = scmp.ne.s32.totalorder %s146, %s147
    %p161 = scmp.eq.s32.totalorder %s20, 1
    %p162 = por %p160, %p161
    %p164 = scmp.ne.s32.totalorder %s147, %s163
    %p165 = scmp.eq.s32.totalorder %s20, 0
    %p166 = por %p164, %p165
    %s167 = ssub.s32 %s21, %s33
    %s168 = ssub.s32 %s22, %s29
    %s169 = sor.u32 %s167, %s168
    %p170 = scmp.eq.s32.totalorder %s169, 0
    %s172 = sadd.s32 %s171, 1
    %s173 = scalar_select %p170, %s171, %s172
    %p176 = pneg %p170
    %p177 = scmp.eq.s32.totalorder %s14, 1
    %p178 = por %p176, %p177
    %p179 = scmp.ne.s32.totalorder %s171, %s174
    %p180 = scmp.eq.s32.totalorder %s14, 0
    %p181 = por %p179, %p180
    %p182 = scmp.ne.s32.totalorder %s171, %s174
    %p183 = scmp.eq.s32.totalorder %s19, 1
    %p184 = por %p182, %p183
    %p185 = scmp.ne.s32.totalorder %s174, %s175
    %p186 = scmp.eq.s32.totalorder %s19, 0
    %p187 = por %p185, %p186
    %p188 = scmp.ne.s32.totalorder %s174, %s175
    %p189 = scmp.eq.s32.totalorder %s20, 1
    %p190 = por %p188, %p189
    %p192 = scmp.ne.s32.totalorder %s175, %s191
    %p193 = scmp.eq.s32.totalorder %s20, 0
    %p194 = por %p192, %p193
    %s195 = ssub.s32 %s21, %s33
    %s196 = ssub.s32 %s22, %s29
    %s197 = sor.u32 %s195, %s196
    %p198 = scmp.eq.s32.totalorder %s197, 0
    %s200 = sadd.s32 %s199, 1
    %s201 = scalar_select %p198, %s199, %s200
    %p204 = pneg %p198
    %p205 = scmp.eq.s32.totalorder %s14, 1
    %p206 = por %p204, %p205
    %p207 = scmp.ne.s32.totalorder %s199, %s202
    %p208 = scmp.eq.s32.totalorder %s14, 0
    %p209 = por %p207, %p208
    %p210 = scmp.ne.s32.totalorder %s199, %s202
    %p211 = scmp.eq.s32.totalorder %s19, 1
    %p212 = por %p210, %p211
    %p213 = scmp.ne.s32.totalorder %s202, %s203
    %p214 = scmp.eq.s32.totalorder %s19, 0
    %p215 = por %p213, %p214
    %p216 = scmp.ne.s32.totalorder %s202, %s203
    %p217 = scmp.eq.s32.totalorder %s20, 1
    %p218 = por %p216, %p217
    %p220 = scmp.ne.s32.totalorder %s203, %s219
    %p221 = scmp.eq.s32.totalorder %s20, 0
    %p222 = por %p220, %p221
    %p223 = scmp.le.s32.totalorder 1, %s14
    %p224 = scmp.lt.s32.totalorder %s14, 3
    %p225 = pnand %p223, %p224
    %p226 = pneg %p225
    // Predicated region
    $region9: #{run.11} parent=5 // pred_check
      _
    $region10: #{run.11} parent=5 // pred_check_branch
      %228 = sbr.rel (%p225) target = $region12
    $region11: #{run.11} parent=5 // pred_region
      %s229 = ssub.s32 %s14, 1
      // Predicated region
      $region13: #{run.11} parent=11 // pred_check
        %p230 = pneg %p47
      $region14: #{run.11} parent=11 // pred_check_branch
        %232 = sbr.rel (%p230) target = $region16
      $region15: #{run.11} parent=11 // pred_region
        _
      $region16: #{run.11} parent=11 // pred_fallthru
        _
    $region12: #{run.11} parent=5 // pred_fallthru
      _
    %p233 = scmp.lt.s32.totalorder %s14, 2
    // Predicated region
    $region17: #{run.11} parent=5 // pred_check
      %p234 = pneg %p233
    $region18: #{run.11} parent=5 // pred_check_branch
      %236 = sbr.rel (%p234) target = $region20
    $region19: #{run.11} parent=5 // pred_region
      // Predicated region
      $region21: #{run.11} parent=19 // pred_check
        %p237 = pneg %p69
      $region22: #{run.11} parent=19 // pred_check_branch
        %239 = sbr.rel (%p237) target = $region24
      $region23: #{run.11} parent=19 // pred_region
        %p240 = scmp.lt.s32.totalorder %s21, 1
        %s241 = scalar_select %p240, %s21, 1
        %p242 = scmp.lt.s32.totalorder %s22, 0
        %s243 = scalar_select %p242, %s22, 0
        %s244 = sadd.s32 %s243, %s241
        %s245 = smul.addr %s244, 4
        %s246 = scalar_lea.vmem %s1, %s245
      $region24: #{run.11} parent=19 // pred_fallthru
        _
      // Predicated region
      $region25: #{run.11} parent=19 // pred_check
        %p247 = pneg %p97
      $region26: #{run.11} parent=19 // pred_check_branch
        %249 = sbr.rel (%p247) target = $region28
      $region27: #{run.11} parent=19 // pred_region
        %p250 = scmp.lt.s32.totalorder %s21, 1
        %s251 = scalar_select %p250, %s21, 1
        %p252 = scmp.lt.s32.totalorder %s22, 0
        %s253 = scalar_select %p252, %s22, 0
        %s254 = sadd.s32 %s253, %s251
        %s255 = smul.addr %s254, 4
        %s256 = scalar_lea.vmem %s2, %s255
      $region28: #{run.11} parent=19 // pred_fallthru
        _
      // Predicated region
      $region29: #{run.11} parent=19 // pred_check
        %p257 = pneg %p125
      $region30: #{run.11} parent=19 // pred_check_branch
        %259 = sbr.rel (%p257) target = $region32
      $region31: #{run.11} parent=19 // pred_region
        %p260 = scmp.lt.s32.totalorder %s21, 1
        %s261 = scalar_select %p260, %s21, 1
        %p262 = scmp.lt.s32.totalorder %s22, 0
        %s263 = scalar_select %p262, %s22, 0
        %s264 = sadd.s32 %s263, %s261
        %s265 = smul.addr %s264, 4
        %s266 = scalar_lea.vmem %s3, %s265
      $region32: #{run.11} parent=19 // pred_fallthru
        _
    $region20: #{run.11} parent=5 // pred_fallthru
      _
    %p267 = scmp.le.s32.totalorder 1, %s14
    %p268 = scmp.lt.s32.totalorder %s14, 3
    %p269 = pnand %p267, %p268
    %p270 = pneg %p269
    // Predicated region
    $region33: #{run.11} parent=5 // pred_check
      _
    $region34: #{run.11} parent=5 // pred_check_branch
      %272 = sbr.rel (%p269) target = $region36
    $region35: #{run.11} parent=5 // pred_region
      %s273 = ssub.s32 %s14, 1
      %p274 = pneg %p47
      %p275 = pneg %p44
      %p276 = scmp.lt.s32.totalorder %s23, 1
      %s277 = scalar_select %p276, %s23, 1
      %p278 = scmp.lt.s32.totalorder %s24, 0
      %s279 = scalar_select %p278, %s24, 0
      %s280 = sadd.s32 %s279, %s277
      %s281 = smul.addr %s280, 4
      %s282 = scalar_lea.vmem %s1, %s281
      %p283 = pneg %p75
      %p284 = pneg %p72
      %p285 = scmp.lt.s32.totalorder %s23, 1
      %s286 = scalar_select %p285, %s23, 1
      %p287 = scmp.lt.s32.totalorder %s24, 0
      %s288 = scalar_select %p287, %s24, 0
      %s289 = sadd.s32 %s288, %s286
      %s290 = smul.addr %s289, 4
      %s291 = scalar_lea.vmem %s2, %s290
      %p292 = pneg %p103
      %p293 = pneg %p100
      %p294 = scmp.lt.s32.totalorder %s23, 1
      %s295 = scalar_select %p294, %s23, 1
      %p296 = scmp.lt.s32.totalorder %s24, 0
      %s297 = scalar_select %p296, %s24, 0
      %s298 = sadd.s32 %s297, %s295
      %s299 = smul.addr %s298, 4
      %s300 = scalar_lea.vmem %s3, %s299
      %p301 = pneg %p131
      %p302 = pneg %p128
      %p303 = pneg %p159
      %p304 = pneg %p156
      %p305 = scmp.lt.s32.totalorder %s23, 1
      %s306 = scalar_select %p305, %s23, 1
      %p307 = scmp.lt.s32.totalorder %s24, 0
      %s308 = scalar_select %p307, %s24, 0
      %s309 = sadd.s32 %s308, %s306
      %s310 = scalar_lea.vmem %s4, %s309
      %p311 = pneg %p187
      %p312 = pneg %p184
      %p313 = scmp.lt.s32.totalorder %s23, 1
      %s314 = scalar_select %p313, %s23, 1
      %p315 = scmp.lt.s32.totalorder %s24, 0
      %s316 = scalar_select %p315, %s24, 0
      %s317 = sadd.s32 %s316, %s314
      %s318 = scalar_lea.vmem %s5, %s317
      %p319 = pneg %p215
      %p320 = pneg %p212
      %p321 = scmp.lt.s32.totalorder %s23, 1
      %s322 = scalar_select %p321, %s23, 1
      %p323 = scmp.lt.s32.totalorder %s24, 0
      %s324 = scalar_select %p323, %s24, 0
      %s325 = sadd.s32 %s324, %s322
      %s326 = scalar_lea.vmem %s6, %s325
      %p327 = scmp.lt.s32.totalorder %s23, 1
      %s328 = scalar_select %p327, %s23, 1
      %p329 = scmp.lt.s32.totalorder %s24, 0
      %s330 = scalar_select %p329, %s24, 0
      %s331 = sadd.s32 %s330, %s328
      %s332 = smul.addr %s331, 4
      %s333 = scalar_lea.vmem %s1, %s332
      %p334 = scmp.lt.s32.totalorder %s23, 1
      %s335 = scalar_select %p334, %s23, 1
      %p336 = scmp.lt.s32.totalorder %s24, 0
      %s337 = scalar_select %p336, %s24, 0
      %s338 = sadd.s32 %s337, %s335
      %s339 = smul.addr %s338, 4
      %s340 = scalar_lea.vmem %s2, %s339
      %p341 = scmp.lt.s32.totalorder %s23, 1
      %s342 = scalar_select %p341, %s23, 1
      %p343 = scmp.lt.s32.totalorder %s24, 0
      %s344 = scalar_select %p343, %s24, 0
      %s345 = sadd.s32 %s344, %s342
      %s346 = smul.addr %s345, 4
      %s347 = scalar_lea.vmem %s3, %s346
      %p348 = scmp.lt.s32.totalorder %s23, 1
      %s349 = scalar_select %p348, %s23, 1
      %p350 = scmp.lt.s32.totalorder %s24, 0
      %s351 = scalar_select %p350, %s24, 0
      %s352 = sadd.s32 %s351, %s349
      %s353 = scalar_lea.vmem %s4, %s352
      %p354 = scmp.lt.s32.totalorder %s23, 1
      %s355 = scalar_select %p354, %s23, 1
      %p356 = scmp.lt.s32.totalorder %s24, 0
      %s357 = scalar_select %p356, %s24, 0
      %s358 = sadd.s32 %s357, %s355
      %s359 = scalar_lea.vmem %s5, %s358
      %p360 = scmp.lt.s32.totalorder %s23, 1
      %s361 = scalar_select %p360, %s23, 1
      %p362 = scmp.lt.s32.totalorder %s24, 0
      %s363 = scalar_select %p362, %s24, 0
      %s364 = sadd.s32 %s363, %s361
      %s365 = scalar_lea.vmem %s6, %s364
      %v366 = vld [vmem:[%s333] sm:$0xf]
      %s367 = sld [smem:[#allocation2]]
      %s368 = smax.f32 %s367, 1e-12
      %v369 = vstv %s368
      %v370 = vrcp.pop %v369
      %s371 = vtos %v370
      %s372 = smul.f32 0.5, %s371
      %s373 = smul.f32 %s367, %s367
      %v374 = vld [vmem:[%s340] sm:$0xf]
      %v375 = vsub.f32 %v366, %v374
      %v376 = vand.u32 2147483647, %v375
      %v377 = vstv %s367
      %vm378 = vcmp.le.f32.partialorder %v376, %v377
      %v379 = vmul.f32 %v376, %v376
      %v380 = vstv %s373
      %v381 = vadd.f32 %v379, %v380
      %v382 = vstv %s372
      %v383 = vmul.f32 %v381, %v382
      %v384 = vsel %vm378, %v376, %v383
      %vm385 = vcmask 27648
      %v386 = vsel %vm385, %v384, 0.0
      %387 = vadd.xlane.f32.xlu0 %v386
      %v388 = vpop.xlane.xlu0 %387
      %v389 = vrot.slane %v388, 4
      %v390 = vadd.f32 %v388, %v389
      %v391 = vrot.slane %v390, 2
      %v392 = vadd.f32 %v390, %v391
      %v393 = vrot.slane %v392, 1
      %v394 = vadd.f32 %v392, %v393
      %s395 = vtos %v394
      %v396 = vstv %s395
      %vm397 = vcmask 0
      %398 = vst.msk [vmem:[%s353] sm:$0x1] %vm397, %v396
      %v399 = vld [vmem:[%s347] sm:$0xf]
      %401 = vrot.lane.b32.xlu0 %v399, 1
      %v402 = vpop.permute.xlu0 %401
      %v404 = vsub.f32 %v399, %v402
      %v405 = vand.u32 2147483647, %v404
      %v406 = vsub.f32 0.0, %v405
      %v407 = vmul.f32 %v406, 1.442695
      %v408 = vpow.pop %v407
      %410 = vrot.lane.b32.xlu0 %v366, 1
      %v411 = vpop.permute.xlu0 %410
      %v413 = vsub.f32 %v366, %v411
      %v414 = vand.u32 2147483647, %v413
      %v415 = vmul.f32 %v408, %v414
      %417 = vrot.lane.b32.xlu0 %v415, 127
      %v418 = vpop.permute.xlu0 %417
      %vm420 = vcmask 19456
      %v421 = vsel %vm420, %v418, 0.0
      %422 = vadd.xlane.f32.xlu0 %v421
      %v423 = vpop.xlane.xlu0 %422
      %v424 = vrot.slane %v423, 4
      %v425 = vadd.f32 %v423, %v424
      %v426 = vrot.slane %v425, 2
      %v427 = vadd.f32 %v425, %v426
      %v428 = vrot.slane %v427, 1
      %v429 = vadd.f32 %v427, %v428
      %s430 = vtos %v429
      %v431 = vstv %s430
      %432 = vst.msk [vmem:[%s359] sm:$0x1] %vm397, %v431
      %v433 = vrot.slane %v399, 7
      %v435 = vsub.f32 %v399, %v433
      %v436 = vand.u32 2147483647, %v435
      %v437 = vsub.f32 0.0, %v436
      %v438 = vmul.f32 %v437, 1.442695
      %v439 = vpow.pop %v438
      %v440 = vrot.slane %v366, 7
      %v442 = vsub.f32 %v366, %v440
      %v443 = vand.u32 2147483647, %v442
      %v444 = vmul.f32 %v439, %v443
      %v446 = vrot.slane %v444, 1
      %vm448 = vcmask 26624
      %v449 = vsel %vm448, %v446, 0.0
      %450 = vadd.xlane.f32.xlu0 %v449
      %v451 = vpop.xlane.xlu0 %450
      %v452 = vrot.slane %v451, 4
      %v453 = vadd.f32 %v451, %v452
      %v454 = vrot.slane %v453, 2
      %v455 = vadd.f32 %v453, %v454
      %v456 = vrot.slane %v455, 1
      %v457 = vadd.f32 %v455, %v456
      %s458 = vtos %v457
      %v459 = vstv %s458
      %460 = vst.msk [vmem:[%s365] sm:$0x1] %vm397, %v459
      %p461 = scmp.lt.s32.totalorder %s23, 1
      %s462 = scalar_select %p461, %s23, 1
      %p463 = scmp.lt.s32.totalorder %s24, 0
      %s464 = scalar_select %p463, %s24, 0
      %s465 = sadd.s32 %s464, %s462
      %s466 = scalar_lea.vmem %s4, %s465
      %p467 = scmp.lt.s32.totalorder %s23, 1
      %s468 = scalar_select %p467, %s23, 1
      %p469 = scmp.lt.s32.totalorder %s24, 0
      %s470 = scalar_select %p469, %s24, 0
      %s471 = sadd.s32 %s470, %s468
      %s472 = scalar_lea.vmem %s5, %s471
      %p473 = scmp.lt.s32.totalorder %s23, 1
      %s474 = scalar_select %p473, %s23, 1
      %p475 = scmp.lt.s32.totalorder %s24, 0
      %s476 = scalar_select %p475, %s24, 0
      %s477 = sadd.s32 %s476, %s474
      %s478 = scalar_lea.vmem %s6, %s477
      // Predicated region
      $region37: #{run.11} parent=35 // pred_check
        %p479 = pneg %p156
      $region38: #{run.11} parent=35 // pred_check_branch
        %481 = sbr.rel (%p479) target = $region40
      $region39: #{run.11} parent=35 // pred_region
        _
      $region40: #{run.11} parent=35 // pred_fallthru
        _
      // Predicated region
      $region41: #{run.11} parent=35 // pred_check
        %p482 = pneg %p184
      $region42: #{run.11} parent=35 // pred_check_branch
        %484 = sbr.rel (%p482) target = $region44
      $region43: #{run.11} parent=35 // pred_region
        _
      $region44: #{run.11} parent=35 // pred_fallthru
        _
      // Predicated region
      $region45: #{run.11} parent=35 // pred_check
        %p485 = pneg %p212
      $region46: #{run.11} parent=35 // pred_check_branch
        %487 = sbr.rel (%p485) target = $region48
      $region47: #{run.11} parent=35 // pred_region
        _
      $region48: #{run.11} parent=35 // pred_fallthru
        _
    $region36: #{run.11} parent=5 // pred_fallthru
      _
    %p488 = scmp.le.s32.totalorder 2, %s14
    // Predicated region
    $region49: #{run.11} parent=5 // pred_check
      %p489 = pneg %p488
    $region50: #{run.11} parent=5 // pred_check_branch
      %491 = sbr.rel (%p489) target = $region52
    $region51: #{run.11} parent=5 // pred_region
      %s492 = ssub.s32 %s14, 2
      // Predicated region
      $region53: #{run.11} parent=51 // pred_check
        %p493 = pneg %p162
      $region54: #{run.11} parent=51 // pred_check_branch
        %495 = sbr.rel (%p493) target = $region56
      $region55: #{run.11} parent=51 // pred_region
        %p496 = scmp.lt.s32.totalorder %s25, 1
        %s497 = scalar_select %p496, %s25, 1
        %p498 = scmp.lt.s32.totalorder %s26, 0
        %s499 = scalar_select %p498, %s26, 0
        %s500 = sadd.s32 %s499, %s497
        %s501 = scalar_lea.vmem %s4, %s500
      $region56: #{run.11} parent=51 // pred_fallthru
        _
      // Predicated region
      $region57: #{run.11} parent=51 // pred_check
        %p502 = pneg %p190
      $region58: #{run.11} parent=51 // pred_check_branch
        %504 = sbr.rel (%p502) target = $region60
      $region59: #{run.11} parent=51 // pred_region
        %p505 = scmp.lt.s32.totalorder %s25, 1
        %s506 = scalar_select %p505, %s25, 1
        %p507 = scmp.lt.s32.totalorder %s26, 0
        %s508 = scalar_select %p507, %s26, 0
        %s509 = sadd.s32 %s508, %s506
        %s510 = scalar_lea.vmem %s5, %s509
      $region60: #{run.11} parent=51 // pred_fallthru
        _
      // Predicated region
      $region61: #{run.11} parent=51 // pred_check
        %p511 = pneg %p218
      $region62: #{run.11} parent=51 // pred_check_branch
        %513 = sbr.rel (%p511) target = $region64
      $region63: #{run.11} parent=51 // pred_region
        %p514 = scmp.lt.s32.totalorder %s25, 1
        %s515 = scalar_select %p514, %s25, 1
        %p516 = scmp.lt.s32.totalorder %s26, 0
        %s517 = scalar_select %p516, %s26, 0
        %s518 = sadd.s32 %s517, %s515
        %s519 = scalar_lea.vmem %s6, %s518
      $region64: #{run.11} parent=51 // pred_fallthru
        _
    $region52: #{run.11} parent=5 // pred_fallthru
      _
  $region6: #{run.11} parent=0 // loop_footer
    %s18 = sadd.s32 1, %s14
  $region7: #{run.11} parent=0 // loop_footer_branch
    %13 = sbr.rel target = $region3
  $region8: #{run.11} parent=0 // loop_exit
    _

</llo_original>
